<compile_context>
chip_gen: v7x
topology: tpu7x:2x2x1
jax: 0.10.0
libtpu: 0.0.40
codegen_flags: <defaults>
</compile_context>

<pallas_src>
import functools

import jax
import jax.numpy as jnp
from jax.experimental import pallas as pl
from jax.experimental.pallas import tpu as pltpu

_NEG_INF = -1e30          # finite mask value: edge-less rows stay NaN-free
_MIB = 1024 * 1024


# ------------------------------ sizing helpers ------------------------------------

def _round_up(x, m):
    return -(-x // m) * m


def _vmem_capacity_bytes():
    try:
        return int(pltpu.get_tpu_info().vmem_capacity_bytes)
    except Exception:
        return 64 * _MIB                      # conservative (v7x per-TC VMEM)


def _vmem_bytes(tq, tk, n_heads, f_out, adj_heads):
    """Rough per-call VMEM footprint: double-buffered blocks + resident scratch,
    with lane(128)/sublane padding per dtype."""
    hf = n_heads * f_out
    lane = lambda c: _round_up(max(c, 1), 128)
    el = _round_up(tq, 8) * lane(n_heads) * 4
    er = _round_up(n_heads, 8) * lane(tk) * 4
    g = _round_up(tk, 16) * lane(hf) * 2                    # bf16
    adj = adj_heads * _round_up(tq, 32) * lane(tk) * 1      # int8
    out = _round_up(tq, 8) * lane(hf) * 4
    scratch = _round_up(tq, 8) * (2 * lane(n_heads) + lane(hf)) * 4
    return 2 * (el + er + g + adj + out) + scratch


def _pick_tiles(n, n_heads, f_out, adj_heads, budget):
    """Largest (tq, tk) divisor pair of n fitting the VMEM budget.
    tq multiple of 32 (int8 sublane tile), tk multiple of 128 (lane tile)."""
    q_cands = sorted({t for t in range(32, min(256, n) + 1, 32) if n % t == 0},
                     reverse=True) or [n]
    k_cands = sorted({t for t in range(128, min(1024, n) + 1, 128) if n % t == 0},
                     reverse=True) or [n]
    for tq in q_cands:
        for tk in k_cands:
            if _vmem_bytes(tq, tk, n_heads, f_out, adj_heads) <= budget:
                return tq, tk
    return q_cands[-1], k_cands[-1]


# --------------------------- flash-style attention kernel --------------------------

def _attention_kernel(el_ref, er_ref, g_ref, adj_ref, out_ref,
                      m_sc, l_sc, acc_sc,
                      *, n_heads, f_out, adj_heads, neg_slope):
    """One (query-tile, key-tile) step of one GAT layer.

    el_ref:  [TQ, H]        <g_i, a_src_h> for the query rows of this tile (f32)
    er_ref:  [H, TK]        <g_j, a_dst_h> for the key nodes of this tile (f32)
    g_ref:   [TK, H*F]      projected features of the key nodes (bf16)
    adj_ref: [Ha, TQ, TK]   int8 adjacency block (Ha == 1 or n_heads)
    out_ref: [TQ, H*F]      per-head outputs, written only on the last key tile
    m_sc / l_sc: [TQ, H]    online-softmax running max / sum (f32 scratch)
    acc_sc:  [TQ, H*F]      running weighted-value accumulator (f32 scratch)
    """
    ki = pl.program_id(1)

    @pl.when(ki == 0)
    def _init():
        m_sc[...] = jnp.full_like(m_sc, _NEG_INF)
        l_sc[...] = jnp.zeros_like(l_sc)
        acc_sc[...] = jnp.zeros_like(acc_sc)

    if adj_heads == 1:
        shared_mask = adj_ref[0] != 0                       # [TQ, TK] (no widening)

    # TODO(synk): batch heads into one dot_general / fori_loop if n_heads >> 4.
    for h in range(n_heads):                                # static unroll (H <= 4)
        mask = shared_mask if adj_heads == 1 else (adj_ref[h] != 0)

        e = el_ref[:, h:h + 1] + er_ref[h:h + 1, :]         # [TQ, TK] f32
        e = jnp.maximum(e, neg_slope * e)                   # LeakyReLU(0.2)
        e = jnp.where(mask, e, _NEG_INF)                    # finite adjacency mask

        m_prev = m_sc[:, h:h + 1]                           # [TQ, 1]
        m_new = jnp.maximum(m_prev, jnp.max(e, axis=1, keepdims=True))
        alpha = jnp.exp(m_prev - m_new)                     # [TQ, 1] rescale
        p = jnp.exp(e - m_new)                              # [TQ, TK] f32

        l_sc[:, h:h + 1] = alpha * l_sc[:, h:h + 1] + jnp.sum(p, axis=1, keepdims=True)
        m_sc[:, h:h + 1] = m_new

        sl = slice(h * f_out, (h + 1) * f_out)
        g_h = g_ref[:, sl]                                  # [TK, F] bf16
        pv = jnp.dot(p.astype(g_h.dtype), g_h,              # bf16 MXU matmul
                     preferred_element_type=jnp.float32)    # [TQ, F] f32
        acc_sc[:, sl] = alpha * acc_sc[:, sl] + pv          # direct lane-slice write

    @pl.when(ki == pl.num_programs(1) - 1)
    def _finalize():
        for h in range(n_heads):
            sl = slice(h * f_out, (h + 1) * f_out)
            inv = pl.reciprocal(l_sc[:, h:h + 1], approx=False)   # exact, tiny tensor
            out_ref[:, sl] = (acc_sc[:, sl] * inv).astype(out_ref.dtype)


# -------------------------------- layer wrapper ------------------------------------

def gat_layer(x, w, a_src, a_dst, adj_i8, *, tq=None, tk=None, neg_slope=0.2):
    """One GATConv layer. Returns per-head concatenated outputs [N, H*F] (f32)."""
    n = x.shape[0]
    n_heads, f_out = a_src.shape
    hf = n_heads * f_out
    adj_heads = adj_i8.shape[0]

    # ---- projection + per-head score dots in plain XLA (per perf review: f_in and
    #      H*F are far below the MXU systolic dims here; a separate pallas_call only
    #      adds an HBM round trip and per-step overhead). ----
    g = jnp.dot(x.astype(jnp.float32), w.astype(jnp.float32))        # [N, H*F] f32
    g3 = g.reshape(n, n_heads, f_out)
    el = jnp.einsum("nhf,hf->nh", g3, a_src.astype(jnp.float32))     # [N, H]
    er_t = jnp.einsum("nhf,hf->hn", g3, a_dst.astype(jnp.float32))   # [H, N]
    g_bf = g.astype(jnp.bfloat16)                                    # bf16 keys/values

    cap = _vmem_capacity_bytes()
    if tq is None or tk is None:
        budget = max(8 * _MIB, cap // 2 - 8 * _MIB)
        auto_tq, auto_tk = _pick_tiles(n, n_heads, f_out, adj_heads, budget)
        tq = auto_tq if tq is None else tq
        tk = auto_tk if tk is None else tk

    assert n % tq == 0 and n % tk == 0, "tile sizes must divide n_nodes"
    assert tq == n or tq % 32 == 0, "query tile must be a multiple of 32 (int8 sublane)"
    assert tk == n or tk % 128 == 0, "key tile must be a multiple of 128 lanes"

    vmem_limit = int(min(max(32 * _MIB,
                             2 * _vmem_bytes(tq, tk, n_heads, f_out, adj_heads)),
                         max(32 * _MIB, cap - 8 * _MIB)))

    kernel = functools.partial(_attention_kernel, n_heads=n_heads, f_out=f_out,
                               adj_heads=adj_heads, neg_slope=neg_slope)

    out_cat = pl.pallas_call(
        kernel,
        grid=(n // tq, n // tk),                                     # (query, key) tiles
        in_specs=[
            pl.BlockSpec((tq, n_heads), lambda qi, ki: (qi, 0)),      # el
            pl.BlockSpec((n_heads, tk), lambda qi, ki: (0, ki)),      # er (transposed)
            pl.BlockSpec((tk, hf), lambda qi, ki: (ki, 0)),           # g (bf16)
            pl.BlockSpec((adj_heads, tq, tk), lambda qi, ki: (0, qi, ki)),  # int8 adj
        ],
        out_specs=pl.BlockSpec((tq, hf), lambda qi, ki: (qi, 0)),     # resident over ki
        out_shape=jax.ShapeDtypeStruct((n, hf), jnp.float32),
        scratch_shapes=[
            pltpu.VMEM((tq, n_heads), jnp.float32),                   # running max m
            pltpu.VMEM((tq, n_heads), jnp.float32),                   # running sum l
            pltpu.VMEM((tq, hf), jnp.float32),                        # accumulator
        ],
        compiler_params=pltpu.CompilerParams(
            dimension_semantics=("parallel", "arbitrary"),
            vmem_limit_bytes=vmem_limit),
    )(el, er_t, g_bf, adj_i8)
    return out_cat


def gat_forward(x, adj_mat, params, *, tq=None, tk=None):
    """x: [N, in_features]; adj_mat: [N, N, 1] or [N, N, n_heads]."""
    n = x.shape[0]
    # Single copy, int8, head-major [Ha, N, N] -- no per-head broadcast.
    adj_i8 = jnp.transpose((adj_mat != 0).astype(jnp.int8), (2, 0, 1))
    adj_heads = adj_i8.shape[0]

    p1 = params["layer1"]
    h1, f1 = p1["a_src"].shape
    if adj_heads not in (1, h1):
        raise ValueError(f"adjacency heads {adj_heads} must be 1 or {h1} for layer 1")
    # dropout(x): identity in eval mode
    h_cat = gat_layer(x, p1["w"], p1["a_src"], p1["a_dst"], adj_i8, tq=tq, tk=tk)
    h = h_cat.reshape(n, h1, f1).mean(axis=1)                        # concat=False head mean
    h = jnp.where(h > 0, h, jnp.expm1(h))                            # ELU(alpha=1)
    # dropout(h): identity in eval mode

    p2 = params["output"]
    h2, f2 = p2["a_src"].shape
    if adj_heads not in (1, h2):
        raise ValueError(f"adjacency heads {adj_heads} must be 1 or {h2} for layer 2")
    out_cat = gat_layer(h, p2["w"], p2["a_src"], p2["a_dst"], adj_i8, tq=tq, tk=tk)
    return out_cat.reshape(n, h2, f2).mean(axis=1)


# ------------------- pure-JAX reference for correctness checking ------------------

def _gat_layer_ref(x, w, a_src, a_dst, mask_nnh, *, neg_slope=0.2):
    n_heads, f_out = a_src.shape
    n = x.shape[0]
    g = (x @ w).reshape(n, n_heads, f_out)
    el = jnp.einsum("nhf,hf->nh", g, a_src)
    er = jnp.einsum("nhf,hf->nh", g, a_dst)
    e = el[:, None, :] + er[None, :, :]                              # [N, N, H]
    e = jnp.where(e >= 0, e, neg_slope * e)
    e = jnp.where(mask_nnh, e, -jnp.inf)
    a = jax.nn.softmax(e, axis=1)
    return jnp.einsum("ijh,jhf->ihf", a, g).mean(axis=1)


def gat_reference(x, adj_mat, params):
    n = x.shape[0]
    mask = adj_mat != 0                                              # [N, N, Ha]
    p1 = params["layer1"]
    h1 = p1["a_src"].shape[0]
    mask1 = jnp.broadcast_to(mask, (n, n, h1)) if mask.shape[-1] == 1 else mask
    h = _gat_layer_ref(x, p1["w"], p1["a_src"], p1["a_dst"], mask1)
    h = jnp.where(h > 0, h, jnp.expm1(h))
    p2 = params["output"]
    return _gat_layer_ref(h, p2["w"], p2["a_src"], p2["a_dst"], mask[:, :, :1])


if __name__ == "__main__":
    n_nodes, in_features, n_hidden, n_classes, n_heads = 256, 8, 16, 4, 4

    key = jax.random.PRNGKey(0)
    k = jax.random.split(key, 8)

    x = jax.random.normal(k[0], (n_nodes, in_features), jnp.float32)
    adj_mat = (jax.random.uniform(k[1], (n_nodes, n_nodes, 1)) > 0.5).astype(jnp.float32)
    adj_mat = jnp.maximum(adj_mat, jnp.eye(n_nodes, dtype=jnp.float32)[:, :, None])  # self loops

    def init(kk, shape, fan_in):
        return jax.random.normal(kk, shape, jnp.float32) / jnp.sqrt(float(fan_in))

    params = {
        "layer1": {
            "w": init(k[2], (in_features, n_heads * n_hidden), in_features),
            "a_src": init(k[3], (n_heads, n_hidden), n_hidden),
            "a_dst": init(k[4], (n_heads, n_hidden), n_hidden),
        },
        "output": {
            "w": init(k[5], (n_hidden, 1 * n_classes), n_hidden),
            "a_src": init(k[6], (1, n_classes), n_classes),
            "a_dst": init(k[7], (1, n_classes), n_classes),
        },
    }

    # tq=tk=128 -> a (2, 2) grid per layer: exercises the parallel query axis AND the
    # online-softmax accumulation over key tiles.
    out = jax.block_until_ready(gat_forward(x, adj_mat, params, tq=128, tk=128))
    ref = jax.block_until_ready(gat_reference(x, adj_mat, params))

    assert out.shape == (n_nodes, n_classes), out.shape
    assert bool(jnp.all(jnp.isfinite(out)))
    # bf16 key/value features in the PV matmul -> modest tolerance
    assert bool(jnp.allclose(out, ref, atol=2e-2, rtol=2e-2)), "mismatch vs. JAX reference"
    print("KERNEL_OK")
</pallas_src>

<mosaic_0001>
module attributes {stable_mosaic.version = 11 : i64} {
  func.func @_attention_kernel(%arg0: i32, %arg1: i32, %arg2: memref<128x4xf32, #tpu.memory_space<vmem>>, %arg3: memref<4x128xf32, #tpu.memory_space<vmem>>, %arg4: memref<128x64xbf16, #tpu.memory_space<vmem>>, %arg5: memref<1x128x128xi8, #tpu.memory_space<vmem>>, %arg6: memref<128x64xf32, #tpu.memory_space<vmem>>, %arg7: memref<128x4xf32, #tpu.memory_space<vmem>>, %arg8: memref<128x4xf32, #tpu.memory_space<vmem>>, %arg9: memref<128x64xf32, #tpu.memory_space<vmem>>) attributes {dimension_semantics = [#tpu.dimension_semantics<parallel>, #tpu.dimension_semantics<arbitrary>], iteration_bounds = array<i64: 2, 2>, scalar_prefetch = 0 : i64, scratch_operands = 3 : i64, tpu.core_type = #tpu.core_type<tc>, window_params = [{transform_indices = @transform_0, window_bounds = array<i64: 128, 4>}, {transform_indices = @transform_1, window_bounds = array<i64: 4, 128>}, {transform_indices = @transform_2, window_bounds = array<i64: 128, 64>}, {transform_indices = @transform_3, window_bounds = array<i64: 1, 128, 128>}, {transform_indices = @transform_4, window_bounds = array<i64: 128, 64>}]} {
    %c0_i32 = arith.constant 0 : i32
    %0 = arith.cmpi eq, %arg1, %c0_i32 : i32
    %1 = arith.extui %0 : i1 to i32
    %c0_i32_0 = arith.constant 0 : i32
    %2 = arith.cmpi ne, %1, %c0_i32_0 : i32
    scf.if %2 {
      %cst_89 = arith.constant -1.000000e+30 : f32
      %146 = vector.broadcast %cst_89 : f32 to vector<128x4xf32>
      %c0_90 = arith.constant 0 : index
      %c0_91 = arith.constant 0 : index
      %147 = vector.load %arg7[%c0_90, %c0_91] : memref<128x4xf32, #tpu.memory_space<vmem>>, vector<128x4xf32>
      tpu.vector_store %arg7[%c0_90, %c0_91], %146 {strides = array<i32>} : memref<128x4xf32, #tpu.memory_space<vmem>>, vector<128x4xf32>,
      %cst_92 = arith.constant 0.000000e+00 : f32
      %148 = vector.broadcast %cst_92 : f32 to vector<128x4xf32>
      %c0_93 = arith.constant 0 : index
      %c0_94 = arith.constant 0 : index
      %149 = vector.load %arg8[%c0_93, %c0_94] : memref<128x4xf32, #tpu.memory_space<vmem>>, vector<128x4xf32>
      tpu.vector_store %arg8[%c0_93, %c0_94], %148 {strides = array<i32>} : memref<128x4xf32, #tpu.memory_space<vmem>>, vector<128x4xf32>,
      %cst_95 = arith.constant 0.000000e+00 : f32
      %150 = vector.broadcast %cst_95 : f32 to vector<128x64xf32>
      %c0_96 = arith.constant 0 : index
      %c0_97 = arith.constant 0 : index
      %151 = vector.load %arg9[%c0_96, %c0_97] : memref<128x64xf32, #tpu.memory_space<vmem>>, vector<128x64xf32>
      tpu.vector_store %arg9[%c0_96, %c0_97], %150 {strides = array<i32>} : memref<128x64xf32, #tpu.memory_space<vmem>>, vector<128x64xf32>,
    } else {
    }
    %c0 = arith.constant 0 : index
    %c0_1 = arith.constant 0 : index
    %c0_2 = arith.constant 0 : index
    %3 = vector.load %arg5[%c0, %c0_1, %c0_2] : memref<1x128x128xi8, #tpu.memory_space<vmem>>, vector<1x128x128xi8>
    %4 = vector.shape_cast %3 : vector<1x128x128xi8> to vector<128x128xi8>
    %c0_i8 = arith.constant 0 : i8
    %5 = vector.broadcast %c0_i8 : i8 to vector<128x128xi8>
    %6 = arith.cmpi ne, %4, %5 : vector<128x128xi8>
    %c0_3 = arith.constant 0 : index
    %c0_4 = arith.constant 0 : index
    %7 = vector.load %arg2[%c0_3, %c0_4] : memref<128x4xf32, #tpu.memory_space<vmem>>, vector<128x1xf32>
    %c0_5 = arith.constant 0 : index
    %c0_6 = arith.constant 0 : index
    %8 = vector.load %arg3[%c0_5, %c0_6] : memref<4x128xf32, #tpu.memory_space<vmem>>, vector<1x128xf32>
    %9 = vector.broadcast %7 : vector<128x1xf32> to vector<128x128xf32>
    %10 = vector.broadcast %8 : vector<1x128xf32> to vector<128x128xf32>
    %11 = arith.addf %9, %10 : vector<128x128xf32>
    %cst = arith.constant 2.000000e-01 : f32
    %12 = vector.broadcast %cst : f32 to vector<128x128xf32>
    %13 = arith.mulf %12, %11 : vector<128x128xf32>
    %14 = arith.maximumf %11, %13 : vector<128x128xf32>
    %cst_7 = arith.constant -1.000000e+30 : f32
    %15 = vector.broadcast %cst_7 : f32 to vector<128x128xf32>
    %16 = arith.select %6, %14, %15 : vector<128x128xi1>, vector<128x128xf32>
    %c0_8 = arith.constant 0 : index
    %c0_9 = arith.constant 0 : index
    %17 = vector.load %arg7[%c0_8, %c0_9] : memref<128x4xf32, #tpu.memory_space<vmem>>, vector<128x1xf32>
    %cst_10 = arith.constant dense<0xFF800000> : vector<128xf32>
    %18 = vector.multi_reduction <maximumf>, %16, %cst_10 [1] : vector<128x128xf32> to vector<128xf32>
    %19 = vector.shape_cast %18 : vector<128xf32> to vector<128x1xf32>
    %20 = arith.maximumf %17, %19 : vector<128x1xf32>
    %21 = arith.subf %17, %20 : vector<128x1xf32>
    %22 = math.exp %21 : vector<128x1xf32>
    %23 = vector.broadcast %20 : vector<128x1xf32> to vector<128x128xf32>
    %24 = arith.subf %16, %23 : vector<128x128xf32>
    %25 = math.exp %24 : vector<128x128xf32>
    %c0_11 = arith.constant 0 : index
    %c0_12 = arith.constant 0 : index
    %26 = vector.load %arg8[%c0_11, %c0_12] : memref<128x4xf32, #tpu.memory_space<vmem>>, vector<128x1xf32>
    %27 = arith.mulf %22, %26 : vector<128x1xf32>
    %cst_13 = arith.constant dense<0.000000e+00> : vector<128xf32>
    %28 = vector.multi_reduction <add>, %25, %cst_13 [1] : vector<128x128xf32> to vector<128xf32>
    %29 = vector.shape_cast %28 : vector<128xf32> to vector<128x1xf32>
    %30 = arith.addf %27, %29 : vector<128x1xf32>
    %c0_14 = arith.constant 0 : index
    %c0_15 = arith.constant 0 : index
    %31 = vector.load %arg8[%c0_14, %c0_15] : memref<128x4xf32, #tpu.memory_space<vmem>>, vector<128x1xf32>
    tpu.vector_store %arg8[%c0_14, %c0_15], %30 {strides = array<i32>} : memref<128x4xf32, #tpu.memory_space<vmem>>, vector<128x1xf32>,
    %c0_16 = arith.constant 0 : index
    %c0_17 = arith.constant 0 : index
    %32 = vector.load %arg7[%c0_16, %c0_17] : memref<128x4xf32, #tpu.memory_space<vmem>>, vector<128x1xf32>
    tpu.vector_store %arg7[%c0_16, %c0_17], %20 {strides = array<i32>} : memref<128x4xf32, #tpu.memory_space<vmem>>, vector<128x1xf32>,
    %c0_18 = arith.constant 0 : index
    %c0_19 = arith.constant 0 : index
    %33 = vector.load %arg4[%c0_18, %c0_19] : memref<128x64xbf16, #tpu.memory_space<vmem>>, vector<128x16xbf16>
    %34 = arith.truncf %25 : vector<128x128xf32> to vector<128x128xbf16>
    %cst_20 = arith.constant dense<0.000000e+00> : vector<128x16xf32>
    %35 = tpu.matmul %34, %33, %cst_20 {dimension_numbers = #tpu.dot_dimension_numbers<[1], [0], [0], [1], [0, 0, 1, 1], [], []>} : vector<128x128xbf16>, vector<128x16xbf16>, vector<128x16xf32> -> vector<128x16xf32>
    %c0_21 = arith.constant 0 : index
    %c0_22 = arith.constant 0 : index
    %36 = vector.load %arg9[%c0_21, %c0_22] : memref<128x64xf32, #tpu.memory_space<vmem>>, vector<128x16xf32>
    %37 = vector.broadcast %22 : vector<128x1xf32> to vector<128x16xf32>
    %38 = arith.mulf %37, %36 : vector<128x16xf32>
    %39 = arith.addf %38, %35 : vector<128x16xf32>
    %c0_23 = arith.constant 0 : index
    %c0_24 = arith.constant 0 : index
    %40 = vector.load %arg9[%c0_23, %c0_24] : memref<128x64xf32, #tpu.memory_space<vmem>>, vector<128x16xf32>
    tpu.vector_store %arg9[%c0_23, %c0_24], %39 {strides = array<i32>} : memref<128x64xf32, #tpu.memory_space<vmem>>, vector<128x16xf32>,
    %c0_25 = arith.constant 0 : index
    %c1 = arith.constant 1 : index
    %41 = vector.load %arg2[%c0_25, %c1] : memref<128x4xf32, #tpu.memory_space<vmem>>, vector<128x1xf32>
    %c1_26 = arith.constant 1 : index
    %c0_27 = arith.constant 0 : index
    %42 = vector.load %arg3[%c1_26, %c0_27] : memref<4x128xf32, #tpu.memory_space<vmem>>, vector<1x128xf32>
    %43 = vector.broadcast %41 : vector<128x1xf32> to vector<128x128xf32>
    %44 = vector.broadcast %42 : vector<1x128xf32> to vector<128x128xf32>
    %45 = arith.addf %43, %44 : vector<128x128xf32>
    %cst_28 = arith.constant 2.000000e-01 : f32
    %46 = vector.broadcast %cst_28 : f32 to vector<128x128xf32>
    %47 = arith.mulf %46, %45 : vector<128x128xf32>
    %48 = arith.maximumf %45, %47 : vector<128x128xf32>
    %cst_29 = arith.constant -1.000000e+30 : f32
    %49 = vector.broadcast %cst_29 : f32 to vector<128x128xf32>
    %50 = arith.select %6, %48, %49 : vector<128x128xi1>, vector<128x128xf32>
    %c0_30 = arith.constant 0 : index
    %c1_31 = arith.constant 1 : index
    %51 = vector.load %arg7[%c0_30, %c1_31] : memref<128x4xf32, #tpu.memory_space<vmem>>, vector<128x1xf32>
    %cst_32 = arith.constant dense<0xFF800000> : vector<128xf32>
    %52 = vector.multi_reduction <maximumf>, %50, %cst_32 [1] : vector<128x128xf32> to vector<128xf32>
    %53 = vector.shape_cast %52 : vector<128xf32> to vector<128x1xf32>
    %54 = arith.maximumf %51, %53 : vector<128x1xf32>
    %55 = arith.subf %51, %54 : vector<128x1xf32>
    %56 = math.exp %55 : vector<128x1xf32>
    %57 = vector.broadcast %54 : vector<128x1xf32> to vector<128x128xf32>
    %58 = arith.subf %50, %57 : vector<128x128xf32>
    %59 = math.exp %58 : vector<128x128xf32>
    %c0_33 = arith.constant 0 : index
    %c1_34 = arith.constant 1 : index
    %60 = vector.load %arg8[%c0_33, %c1_34] : memref<128x4xf32, #tpu.memory_space<vmem>>, vector<128x1xf32>
    %61 = arith.mulf %56, %60 : vector<128x1xf32>
    %cst_35 = arith.constant dense<0.000000e+00> : vector<128xf32>
    %62 = vector.multi_reduction <add>, %59, %cst_35 [1] : vector<128x128xf32> to vector<128xf32>
    %63 = vector.shape_cast %62 : vector<128xf32> to vector<128x1xf32>
    %64 = arith.addf %61, %63 : vector<128x1xf32>
    %c0_36 = arith.constant 0 : index
    %c1_37 = arith.constant 1 : index
    %65 = vector.load %arg8[%c0_36, %c1_37] : memref<128x4xf32, #tpu.memory_space<vmem>>, vector<128x1xf32>
    tpu.vector_store %arg8[%c0_36, %c1_37], %64 {strides = array<i32>} : memref<128x4xf32, #tpu.memory_space<vmem>>, vector<128x1xf32>,
    %c0_38 = arith.constant 0 : index
    %c1_39 = arith.constant 1 : index
    %66 = vector.load %arg7[%c0_38, %c1_39] : memref<128x4xf32, #tpu.memory_space<vmem>>, vector<128x1xf32>
    tpu.vector_store %arg7[%c0_38, %c1_39], %54 {strides = array<i32>} : memref<128x4xf32, #tpu.memory_space<vmem>>, vector<128x1xf32>,
    %c0_40 = arith.constant 0 : index
    %c16 = arith.constant 16 : index
    %67 = vector.load %arg4[%c0_40, %c16] : memref<128x64xbf16, #tpu.memory_space<vmem>>, vector<128x16xbf16>
    %68 = arith.truncf %59 : vector<128x128xf32> to vector<128x128xbf16>
    %cst_41 = arith.constant dense<0.000000e+00> : vector<128x16xf32>
    %69 = tpu.matmul %68, %67, %cst_41 {dimension_numbers = #tpu.dot_dimension_numbers<[1], [0], [0], [1], [0, 0, 1, 1], [], []>} : vector<128x128xbf16>, vector<128x16xbf16>, vector<128x16xf32> -> vector<128x16xf32>
    %c0_42 = arith.constant 0 : index
    %c16_43 = arith.constant 16 : index
    %70 = vector.load %arg9[%c0_42, %c16_43] : memref<128x64xf32, #tpu.memory_space<vmem>>, vector<128x16xf32>
    %71 = vector.broadcast %56 : vector<128x1xf32> to vector<128x16xf32>
    %72 = arith.mulf %71, %70 : vector<128x16xf32>
    %73 = arith.addf %72, %69 : vector<128x16xf32>
    %c0_44 = arith.constant 0 : index
    %c16_45 = arith.constant 16 : index
    %74 = vector.load %arg9[%c0_44, %c16_45] : memref<128x64xf32, #tpu.memory_space<vmem>>, vector<128x16xf32>
    tpu.vector_store %arg9[%c0_44, %c16_45], %73 {strides = array<i32>} : memref<128x64xf32, #tpu.memory_space<vmem>>, vector<128x16xf32>,
    %c0_46 = arith.constant 0 : index
    %c2 = arith.constant 2 : index
    %75 = vector.load %arg2[%c0_46, %c2] : memref<128x4xf32, #tpu.memory_space<vmem>>, vector<128x1xf32>
    %c2_47 = arith.constant 2 : index
    %c0_48 = arith.constant 0 : index
    %76 = vector.load %arg3[%c2_47, %c0_48] : memref<4x128xf32, #tpu.memory_space<vmem>>, vector<1x128xf32>
    %77 = vector.broadcast %75 : vector<128x1xf32> to vector<128x128xf32>
    %78 = vector.broadcast %76 : vector<1x128xf32> to vector<128x128xf32>
    %79 = arith.addf %77, %78 : vector<128x128xf32>
    %cst_49 = arith.constant 2.000000e-01 : f32
    %80 = vector.broadcast %cst_49 : f32 to vector<128x128xf32>
    %81 = arith.mulf %80, %79 : vector<128x128xf32>
    %82 = arith.maximumf %79, %81 : vector<128x128xf32>
    %cst_50 = arith.constant -1.000000e+30 : f32
    %83 = vector.broadcast %cst_50 : f32 to vector<128x128xf32>
    %84 = arith.select %6, %82, %83 : vector<128x128xi1>, vector<128x128xf32>
    %c0_51 = arith.constant 0 : index
    %c2_52 = arith.constant 2 : index
    %85 = vector.load %arg7[%c0_51, %c2_52] : memref<128x4xf32, #tpu.memory_space<vmem>>, vector<128x1xf32>
    %cst_53 = arith.constant dense<0xFF800000> : vector<128xf32>
    %86 = vector.multi_reduction <maximumf>, %84, %cst_53 [1] : vector<128x128xf32> to vector<128xf32>
    %87 = vector.shape_cast %86 : vector<128xf32> to vector<128x1xf32>
    %88 = arith.maximumf %85, %87 : vector<128x1xf32>
    %89 = arith.subf %85, %88 : vector<128x1xf32>
    %90 = math.exp %89 : vector<128x1xf32>
    %91 = vector.broadcast %88 : vector<128x1xf32> to vector<128x128xf32>
    %92 = arith.subf %84, %91 : vector<128x128xf32>
    %93 = math.exp %92 : vector<128x128xf32>
    %c0_54 = arith.constant 0 : index
    %c2_55 = arith.constant 2 : index
    %94 = vector.load %arg8[%c0_54, %c2_55] : memref<128x4xf32, #tpu.memory_space<vmem>>, vector<128x1xf32>
    %95 = arith.mulf %90, %94 : vector<128x1xf32>
    %cst_56 = arith.constant dense<0.000000e+00> : vector<128xf32>
    %96 = vector.multi_reduction <add>, %93, %cst_56 [1] : vector<128x128xf32> to vector<128xf32>
    %97 = vector.shape_cast %96 : vector<128xf32> to vector<128x1xf32>
    %98 = arith.addf %95, %97 : vector<128x1xf32>
    %c0_57 = arith.constant 0 : index
    %c2_58 = arith.constant 2 : index
    %99 = vector.load %arg8[%c0_57, %c2_58] : memref<128x4xf32, #tpu.memory_space<vmem>>, vector<128x1xf32>
    tpu.vector_store %arg8[%c0_57, %c2_58], %98 {strides = array<i32>} : memref<128x4xf32, #tpu.memory_space<vmem>>, vector<128x1xf32>,
    %c0_59 = arith.constant 0 : index
    %c2_60 = arith.constant 2 : index
    %100 = vector.load %arg7[%c0_59, %c2_60] : memref<128x4xf32, #tpu.memory_space<vmem>>, vector<128x1xf32>
    tpu.vector_store %arg7[%c0_59, %c2_60], %88 {strides = array<i32>} : memref<128x4xf32, #tpu.memory_space<vmem>>, vector<128x1xf32>,
    %c0_61 = arith.constant 0 : index
    %c32 = arith.constant 32 : index
    %101 = vector.load %arg4[%c0_61, %c32] : memref<128x64xbf16, #tpu.memory_space<vmem>>, vector<128x16xbf16>
    %102 = arith.truncf %93 : vector<128x128xf32> to vector<128x128xbf16>
    %cst_62 = arith.constant dense<0.000000e+00> : vector<128x16xf32>
    %103 = tpu.matmul %102, %101, %cst_62 {dimension_numbers = #tpu.dot_dimension_numbers<[1], [0], [0], [1], [0, 0, 1, 1], [], []>} : vector<128x128xbf16>, vector<128x16xbf16>, vector<128x16xf32> -> vector<128x16xf32>
    %c0_63 = arith.constant 0 : index
    %c32_64 = arith.constant 32 : index
    %104 = vector.load %arg9[%c0_63, %c32_64] : memref<128x64xf32, #tpu.memory_space<vmem>>, vector<128x16xf32>
    %105 = vector.broadcast %90 : vector<128x1xf32> to vector<128x16xf32>
    %106 = arith.mulf %105, %104 : vector<128x16xf32>
    %107 = arith.addf %106, %103 : vector<128x16xf32>
    %c0_65 = arith.constant 0 : index
    %c32_66 = arith.constant 32 : index
    %108 = vector.load %arg9[%c0_65, %c32_66] : memref<128x64xf32, #tpu.memory_space<vmem>>, vector<128x16xf32>
    tpu.vector_store %arg9[%c0_65, %c32_66], %107 {strides = array<i32>} : memref<128x64xf32, #tpu.memory_space<vmem>>, vector<128x16xf32>,
    %c0_67 = arith.constant 0 : index
    %c3 = arith.constant 3 : index
    %109 = vector.load %arg2[%c0_67, %c3] : memref<128x4xf32, #tpu.memory_space<vmem>>, vector<128x1xf32>
    %c3_68 = arith.constant 3 : index
    %c0_69 = arith.constant 0 : index
    %110 = vector.load %arg3[%c3_68, %c0_69] : memref<4x128xf32, #tpu.memory_space<vmem>>, vector<1x128xf32>
    %111 = vector.broadcast %109 : vector<128x1xf32> to vector<128x128xf32>
    %112 = vector.broadcast %110 : vector<1x128xf32> to vector<128x128xf32>
    %113 = arith.addf %111, %112 : vector<128x128xf32>
    %cst_70 = arith.constant 2.000000e-01 : f32
    %114 = vector.broadcast %cst_70 : f32 to vector<128x128xf32>
    %115 = arith.mulf %114, %113 : vector<128x128xf32>
    %116 = arith.maximumf %113, %115 : vector<128x128xf32>
    %cst_71 = arith.constant -1.000000e+30 : f32
    %117 = vector.broadcast %cst_71 : f32 to vector<128x128xf32>
    %118 = arith.select %6, %116, %117 : vector<128x128xi1>, vector<128x128xf32>
    %c0_72 = arith.constant 0 : index
    %c3_73 = arith.constant 3 : index
    %119 = vector.load %arg7[%c0_72, %c3_73] : memref<128x4xf32, #tpu.memory_space<vmem>>, vector<128x1xf32>
    %cst_74 = arith.constant dense<0xFF800000> : vector<128xf32>
    %120 = vector.multi_reduction <maximumf>, %118, %cst_74 [1] : vector<128x128xf32> to vector<128xf32>
    %121 = vector.shape_cast %120 : vector<128xf32> to vector<128x1xf32>
    %122 = arith.maximumf %119, %121 : vector<128x1xf32>
    %123 = arith.subf %119, %122 : vector<128x1xf32>
    %124 = math.exp %123 : vector<128x1xf32>
    %125 = vector.broadcast %122 : vector<128x1xf32> to vector<128x128xf32>
    %126 = arith.subf %118, %125 : vector<128x128xf32>
    %127 = math.exp %126 : vector<128x128xf32>
    %c0_75 = arith.constant 0 : index
    %c3_76 = arith.constant 3 : index
    %128 = vector.load %arg8[%c0_75, %c3_76] : memref<128x4xf32, #tpu.memory_space<vmem>>, vector<128x1xf32>
    %129 = arith.mulf %124, %128 : vector<128x1xf32>
    %cst_77 = arith.constant dense<0.000000e+00> : vector<128xf32>
    %130 = vector.multi_reduction <add>, %127, %cst_77 [1] : vector<128x128xf32> to vector<128xf32>
    %131 = vector.shape_cast %130 : vector<128xf32> to vector<128x1xf32>
    %132 = arith.addf %129, %131 : vector<128x1xf32>
    %c0_78 = arith.constant 0 : index
    %c3_79 = arith.constant 3 : index
    %133 = vector.load %arg8[%c0_78, %c3_79] : memref<128x4xf32, #tpu.memory_space<vmem>>, vector<128x1xf32>
    tpu.vector_store %arg8[%c0_78, %c3_79], %132 {strides = array<i32>} : memref<128x4xf32, #tpu.memory_space<vmem>>, vector<128x1xf32>,
    %c0_80 = arith.constant 0 : index
    %c3_81 = arith.constant 3 : index
    %134 = vector.load %arg7[%c0_80, %c3_81] : memref<128x4xf32, #tpu.memory_space<vmem>>, vector<128x1xf32>
    tpu.vector_store %arg7[%c0_80, %c3_81], %122 {strides = array<i32>} : memref<128x4xf32, #tpu.memory_space<vmem>>, vector<128x1xf32>,
    %c0_82 = arith.constant 0 : index
    %c48 = arith.constant 48 : index
    %135 = vector.load %arg4[%c0_82, %c48] : memref<128x64xbf16, #tpu.memory_space<vmem>>, vector<128x16xbf16>
    %136 = arith.truncf %127 : vector<128x128xf32> to vector<128x128xbf16>
    %cst_83 = arith.constant dense<0.000000e+00> : vector<128x16xf32>
    %137 = tpu.matmul %136, %135, %cst_83 {dimension_numbers = #tpu.dot_dimension_numbers<[1], [0], [0], [1], [0, 0, 1, 1], [], []>} : vector<128x128xbf16>, vector<128x16xbf16>, vector<128x16xf32> -> vector<128x16xf32>
    %c0_84 = arith.constant 0 : index
    %c48_85 = arith.constant 48 : index
    %138 = vector.load %arg9[%c0_84, %c48_85] : memref<128x64xf32, #tpu.memory_space<vmem>>, vector<128x16xf32>
    %139 = vector.broadcast %124 : vector<128x1xf32> to vector<128x16xf32>
    %140 = arith.mulf %139, %138 : vector<128x16xf32>
    %141 = arith.addf %140, %137 : vector<128x16xf32>
    %c0_86 = arith.constant 0 : index
    %c48_87 = arith.constant 48 : index
    %142 = vector.load %arg9[%c0_86, %c48_87] : memref<128x64xf32, #tpu.memory_space<vmem>>, vector<128x16xf32>
    tpu.vector_store %arg9[%c0_86, %c48_87], %141 {strides = array<i32>} : memref<128x64xf32, #tpu.memory_space<vmem>>, vector<128x16xf32>,
    %c1_i32 = arith.constant 1 : i32
    %143 = arith.cmpi eq, %arg1, %c1_i32 : i32
    %144 = arith.extui %143 : i1 to i32
    %c0_i32_88 = arith.constant 0 : i32
    %145 = arith.cmpi ne, %144, %c0_i32_88 : i32
    scf.if %145 {
      %c0_89 = arith.constant 0 : index
      %c0_90 = arith.constant 0 : index
      %146 = vector.load %arg8[%c0_89, %c0_90] : memref<128x4xf32, #tpu.memory_space<vmem>>, vector<128x1xf32>
      %147 = tpu.reciprocal %146 : vector<128x1xf32> -> vector<128x1xf32>
      %c0_91 = arith.constant 0 : index
      %c0_92 = arith.constant 0 : index
      %148 = vector.load %arg9[%c0_91, %c0_92] : memref<128x64xf32, #tpu.memory_space<vmem>>, vector<128x16xf32>
      %149 = vector.broadcast %147 : vector<128x1xf32> to vector<128x16xf32>
      %150 = arith.mulf %148, %149 : vector<128x16xf32>
      %c0_93 = arith.constant 0 : index
      %c0_94 = arith.constant 0 : index
      %151 = vector.load %arg6[%c0_93, %c0_94] : memref<128x64xf32, #tpu.memory_space<vmem>>, vector<128x16xf32>
      tpu.vector_store %arg6[%c0_93, %c0_94], %150 {strides = array<i32>} : memref<128x64xf32, #tpu.memory_space<vmem>>, vector<128x16xf32>,
      %c0_95 = arith.constant 0 : index
      %c1_96 = arith.constant 1 : index
      %152 = vector.load %arg8[%c0_95, %c1_96] : memref<128x4xf32, #tpu.memory_space<vmem>>, vector<128x1xf32>
      %153 = tpu.reciprocal %152 : vector<128x1xf32> -> vector<128x1xf32>
      %c0_97 = arith.constant 0 : index
      %c16_98 = arith.constant 16 : index
      %154 = vector.load %arg9[%c0_97, %c16_98] : memref<128x64xf32, #tpu.memory_space<vmem>>, vector<128x16xf32>
      %155 = vector.broadcast %153 : vector<128x1xf32> to vector<128x16xf32>
      %156 = arith.mulf %154, %155 : vector<128x16xf32>
      %c0_99 = arith.constant 0 : index
      %c16_100 = arith.constant 16 : index
      %157 = vector.load %arg6[%c0_99, %c16_100] : memref<128x64xf32, #tpu.memory_space<vmem>>, vector<128x16xf32>
      tpu.vector_store %arg6[%c0_99, %c16_100], %156 {strides = array<i32>} : memref<128x64xf32, #tpu.memory_space<vmem>>, vector<128x16xf32>,
      %c0_101 = arith.constant 0 : index
      %c2_102 = arith.constant 2 : index
      %158 = vector.load %arg8[%c0_101, %c2_102] : memref<128x4xf32, #tpu.memory_space<vmem>>, vector<128x1xf32>
      %159 = tpu.reciprocal %158 : vector<128x1xf32> -> vector<128x1xf32>
      %c0_103 = arith.constant 0 : index
      %c32_104 = arith.constant 32 : index
      %160 = vector.load %arg9[%c0_103, %c32_104] : memref<128x64xf32, #tpu.memory_space<vmem>>, vector<128x16xf32>
      %161 = vector.broadcast %159 : vector<128x1xf32> to vector<128x16xf32>
      %162 = arith.mulf %160, %161 : vector<128x16xf32>
      %c0_105 = arith.constant 0 : index
      %c32_106 = arith.constant 32 : index
      %163 = vector.load %arg6[%c0_105, %c32_106] : memref<128x64xf32, #tpu.memory_space<vmem>>, vector<128x16xf32>
      tpu.vector_store %arg6[%c0_105, %c32_106], %162 {strides = array<i32>} : memref<128x64xf32, #tpu.memory_space<vmem>>, vector<128x16xf32>,
      %c0_107 = arith.constant 0 : index
      %c3_108 = arith.constant 3 : index
      %164 = vector.load %arg8[%c0_107, %c3_108] : memref<128x4xf32, #tpu.memory_space<vmem>>, vector<128x1xf32>
      %165 = tpu.reciprocal %164 : vector<128x1xf32> -> vector<128x1xf32>
      %c0_109 = arith.constant 0 : index
      %c48_110 = arith.constant 48 : index
      %166 = vector.load %arg9[%c0_109, %c48_110] : memref<128x64xf32, #tpu.memory_space<vmem>>, vector<128x16xf32>
      %167 = vector.broadcast %165 : vector<128x1xf32> to vector<128x16xf32>
      %168 = arith.mulf %166, %167 : vector<128x16xf32>
      %c0_111 = arith.constant 0 : index
      %c48_112 = arith.constant 48 : index
      %169 = vector.load %arg6[%c0_111, %c48_112] : memref<128x64xf32, #tpu.memory_space<vmem>>, vector<128x16xf32>
      tpu.vector_store %arg6[%c0_111, %c48_112], %168 {strides = array<i32>} : memref<128x64xf32, #tpu.memory_space<vmem>>, vector<128x16xf32>,
    } else {
    }
    return
  }
  func.func @transform_0(%arg0: i32, %arg1: i32) -> (i32, i32) {
    %c0_i32 = arith.constant 0 : i32
    %c0_i32_0 = arith.constant 0 : i32
    return %arg0, %c0_i32 : i32, i32
  }
  func.func @transform_1(%arg0: i32, %arg1: i32) -> (i32, i32) {
    %c0_i32 = arith.constant 0 : i32
    %c0_i32_0 = arith.constant 0 : i32
    return %c0_i32, %arg1 : i32, i32
  }
  func.func @transform_2(%arg0: i32, %arg1: i32) -> (i32, i32) {
    %c0_i32 = arith.constant 0 : i32
    %c0_i32_0 = arith.constant 0 : i32
    return %arg1, %c0_i32 : i32, i32
  }
  func.func @transform_3(%arg0: i32, %arg1: i32) -> (i32, i32, i32) {
    %c0_i32 = arith.constant 0 : i32
    %c0_i32_0 = arith.constant 0 : i32
    return %c0_i32, %arg0, %arg1 : i32, i32, i32
  }
  func.func @transform_4(%arg0: i32, %arg1: i32) -> (i32, i32) {
    %c0_i32 = arith.constant 0 : i32
    %c0_i32_0 = arith.constant 0 : i32
    return %arg0, %c0_i32 : i32, i32
  }
}

</mosaic_0001>

<llo_original>
// kernel: tpu_custom_call.1
$region0: #{tpu_custom_call.1}
  #allocation0 [shape = 'u32[]', space=smem, size = 0x4, offset = 0x4, fixed_abs, tag = 'smem constant byte address 0x4 - core index']
  #allocation1 [shape = 'u32[144,128]{1,0:T(1,128)}', space=vmem, size = 0x12000, scoped, tag = 'internal scratch']
  #allocation2 [shape = 'f32[128,4]{1,0:T(8,128)}', space=vmem, size = 0x10000, scoped, tag = 'scratch operand']
  #allocation3 [shape = 'f32[128,4]{1,0:T(8,128)}', space=vmem, size = 0x10000, scoped, tag = 'scratch operand']
  #allocation4 [shape = 'f32[128,64]{1,0:T(8,128)}', space=vmem, size = 0x10000, scoped, tag = 'scratch operand']
  %s0 = inlined_call_operand.vmem [shape: f32[256,4], index: 0, kind: input, shape index: {}]
  %s1 = inlined_call_operand.vmem [shape: f32[4,256], index: 1, kind: input, shape index: {}]
  %s2 = inlined_call_operand.vmem [shape: bf16[256,64], index: 2, kind: input, shape index: {}]
  %s3 = inlined_call_operand.vmem [shape: s8[1,256,256], index: 3, kind: input, shape index: {}]
  %s4 = inlined_call_operand.vmem [shape: f32[256,64], index: 4, kind: output, shape index: {}]
  %s5 = sld [smem:[#allocation0]]
  $region95: #{tpu_custom_call.1} parent=0
    _
  %s7 = ssub.s32 1, %s5
  %s8 = scalar_select 0, %s7, %s5
  $region1: #{tpu_custom_call.1} parent=0
    #allocation5 [shape = 'u8[32768]{0}', space=vmem, size = 0x8000, scoped, tag = 'input window, operand 3']
    loop: start=0, step=1, limit=6
    $region2: #{tpu_custom_call.1} parent=1 // loop_pre_header
      _
    $region3: #{tpu_custom_call.1} parent=1 // loop_header
      %s10 = sphi 0, %s14
      %p11 = scmp.ge.s32.totalorder %s10, 6
      %s17 = sphi 0, %s29
      %s18 = sphi 0, %s25
      %s19 = sphi 0, %s17
      %s20 = sphi 0, %s18
      %s21 = sphi 0, %s19
      %s22 = sphi 0, %s20
      %s32 = sphi 0, %s34
      %s35 = sphi 0, %s32
      %s36 = sphi 0, %s35
      %s52 = sphi 0, %s36
      %s58 = sphi 0, %s60
      %s61 = sphi 0, %s58
      %s62 = sphi 0, %s61
      %s78 = sphi 0, %s62
      %s84 = sphi 0, %s86
      %s87 = sphi 0, %s84
      %s88 = sphi 0, %s87
      %s104 = sphi 0, %s88
      %s112 = sphi 0, %s114
      %s115 = sphi 0, %s112
      %s116 = sphi 0, %s115
      %s132 = sphi 0, %s116
      %s138 = sphi 0, %s140
      %s141 = sphi 0, %s138
      %s142 = sphi 0, %s141
      %s158 = sphi 0, %s142
    $region4: #{tpu_custom_call.1} parent=1 // loop_header_branch
      %13 = sbr.rel (%p11) target = $region8
    $region5: #{tpu_custom_call.1} parent=1 // loop_body
      %s15 = ssub.s32 %s10, 1
      %s16 = ssub.s32 %s10, 2
      %s23 = sadd.s32 1, %s18
      %p24 = scmp.ge.s32.totalorder %s23, 2
      %s25 = scalar_select %p24, 0, %s23
      %s26 = sadd.s32 1, %s17
      %s27 = scalar_select %p24, %s26, %s17
      %p28 = scmp.ge.s32.totalorder %s27, 2
      %s29 = scalar_select %p28, 0, %s27
      %s30 = ssub.s32 %s17, %s29
      %p31 = scmp.eq.s32.totalorder %s30, 0
      %s33 = sadd.s32 %s32, 1
      %s34 = scalar_select %p31, %s32, %s33
      %p37 = pneg %p31
      %p38 = scmp.eq.s32.totalorder %s10, 3
      %p39 = por %p37, %p38
      %p40 = scmp.ne.s32.totalorder %s32, %s35
      %p41 = scmp.eq.s32.totalorder %s10, 0
      %p42 = por %p40, %p41
      %p43 = scmp.ne.s32.totalorder %s32, %s35
      %p44 = scmp.eq.s32.totalorder %s15, 3
      %p45 = por %p43, %p44
      %p46 = scmp.ne.s32.totalorder %s35, %s36
      %p47 = scmp.eq.s32.totalorder %s15, 0
      %p48 = por %p46, %p47
      %p49 = scmp.ne.s32.totalorder %s35, %s36
      %p50 = scmp.eq.s32.totalorder %s16, 3
      %p51 = por %p49, %p50
      %p53 = scmp.ne.s32.totalorder %s36, %s52
      %p54 = scmp.eq.s32.totalorder %s16, 0
      %p55 = por %p53, %p54
      %s56 = ssub.s32 %s18, %s25
      %p57 = scmp.eq.s32.totalorder %s56, 0
      %s59 = sadd.s32 %s58, 1
      %s60 = scalar_select %p57, %s58, %s59
      %p63 = pneg %p57
      %p64 = scmp.eq.s32.totalorder %s10, 3
      %p65 = por %p63, %p64
      %p66 = scmp.ne.s32.totalorder %s58, %s61
      %p67 = scmp.eq.s32.totalorder %s10, 0
      %p68 = por %p66, %p67
      %p69 = scmp.ne.s32.totalorder %s58, %s61
      %p70 = scmp.eq.s32.totalorder %s15, 3
      %p71 = por %p69, %p70
      %p72 = scmp.ne.s32.totalorder %s61, %s62
      %p73 = scmp.eq.s32.totalorder %s15, 0
      %p74 = por %p72, %p73
      %p75 = scmp.ne.s32.totalorder %s61, %s62
      %p76 = scmp.eq.s32.totalorder %s16, 3
      %p77 = por %p75, %p76
      %p79 = scmp.ne.s32.totalorder %s62, %s78
      %p80 = scmp.eq.s32.totalorder %s16, 0
      %p81 = por %p79, %p80
      %s82 = ssub.s32 %s18, %s25
      %p83 = scmp.eq.s32.totalorder %s82, 0
      %s85 = sadd.s32 %s84, 1
      %s86 = scalar_select %p83, %s84, %s85
      %p89 = pneg %p83
      %p90 = scmp.eq.s32.totalorder %s10, 3
      %p91 = por %p89, %p90
      %p92 = scmp.ne.s32.totalorder %s84, %s87
      %p93 = scmp.eq.s32.totalorder %s10, 0
      %p94 = por %p92, %p93
      %p95 = scmp.ne.s32.totalorder %s84, %s87
      %p96 = scmp.eq.s32.totalorder %s15, 3
      %p97 = por %p95, %p96
      %p98 = scmp.ne.s32.totalorder %s87, %s88
      %p99 = scmp.eq.s32.totalorder %s15, 0
      %p100 = por %p98, %p99
      %p101 = scmp.ne.s32.totalorder %s87, %s88
      %p102 = scmp.eq.s32.totalorder %s16, 3
      %p103 = por %p101, %p102
      %p105 = scmp.ne.s32.totalorder %s88, %s104
      %p106 = scmp.eq.s32.totalorder %s16, 0
      %p107 = por %p105, %p106
      %s108 = ssub.s32 %s17, %s29
      %s109 = ssub.s32 %s18, %s25
      %s110 = sor.u32 %s108, %s109
      %p111 = scmp.eq.s32.totalorder %s110, 0
      %s113 = sadd.s32 %s112, 1
      %s114 = scalar_select %p111, %s112, %s113
      %p117 = pneg %p111
      %p118 = scmp.eq.s32.totalorder %s10, 3
      %p119 = por %p117, %p118
      %p120 = scmp.ne.s32.totalorder %s112, %s115
      %p121 = scmp.eq.s32.totalorder %s10, 0
      %p122 = por %p120, %p121
      %p123 = scmp.ne.s32.totalorder %s112, %s115
      %p124 = scmp.eq.s32.totalorder %s15, 3
      %p125 = por %p123, %p124
      %p126 = scmp.ne.s32.totalorder %s115, %s116
      %p127 = scmp.eq.s32.totalorder %s15, 0
      %p128 = por %p126, %p127
      %p129 = scmp.ne.s32.totalorder %s115, %s116
      %p130 = scmp.eq.s32.totalorder %s16, 3
      %p131 = por %p129, %p130
      %p133 = scmp.ne.s32.totalorder %s116, %s132
      %p134 = scmp.eq.s32.totalorder %s16, 0
      %p135 = por %p133, %p134
      %s136 = ssub.s32 %s17, %s29
      %p137 = scmp.eq.s32.totalorder %s136, 0
      %s139 = sadd.s32 %s138, 1
      %s140 = scalar_select %p137, %s138, %s139
      %p143 = pneg %p137
      %p144 = scmp.eq.s32.totalorder %s10, 3
      %p145 = por %p143, %p144
      %p146 = scmp.ne.s32.totalorder %s138, %s141
      %p147 = scmp.eq.s32.totalorder %s10, 0
      %p148 = por %p146, %p147
      %p149 = scmp.ne.s32.totalorder %s138, %s141
      %p150 = scmp.eq.s32.totalorder %s15, 3
      %p151 = por %p149, %p150
      %p152 = scmp.ne.s32.totalorder %s141, %s142
      %p153 = scmp.eq.s32.totalorder %s15, 0
      %p154 = por %p152, %p153
      %p155 = scmp.ne.s32.totalorder %s141, %s142
      %p156 = scmp.eq.s32.totalorder %s16, 3
      %p157 = por %p155, %p156
      %p159 = scmp.ne.s32.totalorder %s142, %s158
      %p160 = scmp.eq.s32.totalorder %s16, 0
      %p161 = por %p159, %p160
      %p162 = scmp.le.s32.totalorder 1, %s10
      %p163 = scmp.lt.s32.totalorder %s10, 5
      %p164 = pnand %p162, %p163
      %p165 = pneg %p164
      // Predicated region
      $region9: #{tpu_custom_call.1} parent=5 // pred_check
        _
      $region10: #{tpu_custom_call.1} parent=5 // pred_check_branch
        %167 = sbr.rel (%p164) target = $region12
      $region11: #{tpu_custom_call.1} parent=5 // pred_region
        %s168 = ssub.s32 %s10, 1
      $region12: #{tpu_custom_call.1} parent=5 // pred_fallthru
        _
      %p169 = scmp.lt.s32.totalorder %s10, 4
      // Predicated region
      $region13: #{tpu_custom_call.1} parent=5 // pred_check
        %p170 = pneg %p169
      $region14: #{tpu_custom_call.1} parent=5 // pred_check_branch
        %172 = sbr.rel (%p170) target = $region16
      $region15: #{tpu_custom_call.1} parent=5 // pred_region
        // Predicated region
        $region17: #{tpu_custom_call.1} parent=15 // pred_check
          %p173 = pneg %p42
        $region18: #{tpu_custom_call.1} parent=15 // pred_check_branch
          %175 = sbr.rel (%p173) target = $region20
        $region19: #{tpu_custom_call.1} parent=15 // pred_region
          %s176 = smul.u32 16, %s17
          %p177 = scmp.lt.s32.totalorder %s176, 31
          %s178 = scalar_select %p177, %s176, 31
          %s179 = smul.addr %s178, 8
          %s180 = scalar_lea.vmem %s0, %s179
          %s181 = smul.u32 16, %s17
        $region20: #{tpu_custom_call.1} parent=15 // pred_fallthru
          _
        // Predicated region
        $region21: #{tpu_custom_call.1} parent=15 // pred_check
          %p182 = pneg %p68
        $region22: #{tpu_custom_call.1} parent=15 // pred_check_branch
          %184 = sbr.rel (%p182) target = $region24
        $region23: #{tpu_custom_call.1} parent=15 // pred_region
          %p185 = scmp.lt.s32.totalorder %s18, 1
          %s186 = scalar_select %p185, %s18, 1
          %s187 = smul.addr %s186, 4
          %s188 = scalar_lea.vmem %s1, %s187
        $region24: #{tpu_custom_call.1} parent=15 // pred_fallthru
          _
        // Predicated region
        $region25: #{tpu_custom_call.1} parent=15 // pred_check
          %p189 = pneg %p94
        $region26: #{tpu_custom_call.1} parent=15 // pred_check_branch
          %191 = sbr.rel (%p189) target = $region28
        $region27: #{tpu_custom_call.1} parent=15 // pred_region
          %s192 = smul.u32 16, %s18
          %p193 = scmp.lt.s32.totalorder %s192, 31
          %s194 = scalar_select %p193, %s192, 31
          %s195 = smul.addr %s194, 4
          %s196 = scalar_lea.vmem %s2, %s195
          %s197 = smul.u32 16, %s18
        $region28: #{tpu_custom_call.1} parent=15 // pred_fallthru
          _
        // Predicated region
        $region29: #{tpu_custom_call.1} parent=15 // pred_check
          %p198 = pneg %p122
        $region30: #{tpu_custom_call.1} parent=15 // pred_check_branch
          %200 = sbr.rel (%p198) target = $region32
        $region31: #{tpu_custom_call.1} parent=15 // pred_region
          %s201 = sand.u32 %s112, 1
          %s202 = sand.u32 %s112, 1
          %s203 = smul.addr %s202, 32
          %s204 = scalar_lea.vmem [#allocation5], %s203
          %s205 = smul.u32 4, %s17
          %s206 = smul.addr %s205, 2
          %s207 = sadd.s32 %s18, %s206
          %s208 = smul.addr %s207, 8
          %s209 = scalar_lea.vmem %s3, %s208
          // Predicated region
          $region33: #{tpu_custom_call.1} parent=31 // pred_check
            _
          $region34: #{tpu_custom_call.1} parent=31 // pred_check_branch
            %211 = sbr.rel (0) target = $region36
          $region35: #{tpu_custom_call.1} parent=31 // pred_region
            // Predicated region
            $region37: #{tpu_custom_call.1} parent=35 // pred_check
              _
            $region38: #{tpu_custom_call.1} parent=35 // pred_check_branch
              %213 = sbr.rel (0) target = $region40
            $region39: #{tpu_custom_call.1} parent=35 // pred_region
              // Predicated region
              $region52: #{tpu_custom_call.1} parent=39 // pred_check
                _
              $region53: #{tpu_custom_call.1} parent=39 // pred_check_branch
                %234 = sbr.rel (0) target = $region55
              $region54: #{tpu_custom_call.1} parent=39 // pred_region
                loop: start=0, step=1, limit=1
                $region56: #{tpu_custom_call.1} parent=54 // loop_pre_header
                  _
                $region57: #{tpu_custom_call.1} parent=54 // loop_header
                  %s236 = sphi 0, %s240
                  %p237 = scmp.ge.s32.totalorder %s236, 1
                  %s241 = sphi %s209, %s209
                  %s242 = sphi %s204, %s204
                $region58: #{tpu_custom_call.1} parent=54 // loop_header_branch
                  %239 = sbr.rel (%p237) target = $region62
                $region59: #{tpu_custom_call.1} parent=54 // loop_body
                  %v243 = vld [vmem:[%s241] sm:$0xff]
                  %244 = vst [vmem:[%s242] sm:$0xff] %v243
                  %v245 = vld [vmem:[%s241 + $0x10] sm:$0xff]
                  %246 = vst [vmem:[%s242 + $0x8] sm:$0xff] %v245
                  %v247 = vld [vmem:[%s241 + $0x20] sm:$0xff]
                  %248 = vst [vmem:[%s242 + $0x10] sm:$0xff] %v247
                  %v249 = vld [vmem:[%s241 + $0x30] sm:$0xff]
                  %250 = vst [vmem:[%s242 + $0x18] sm:$0xff] %v249
                $region60: #{tpu_custom_call.1} parent=54 // loop_footer
                  %s240 = sadd.s32 1, %s236
                $region61: #{tpu_custom_call.1} parent=54 // loop_footer_branch
                  %235 = sbr.rel target = $region57
                $region62: #{tpu_custom_call.1} parent=54 // loop_exit
                  _
              $region55: #{tpu_custom_call.1} parent=39 // pred_fallthru
                _
              // Predicated region
              $region63: #{tpu_custom_call.1} parent=39 // pred_check
                _
              $region64: #{tpu_custom_call.1} parent=39 // pred_check_branch
                %252 = sbr.rel target = $region66
              $region65: #{tpu_custom_call.1} parent=39 // pred_region
                _
              $region66: #{tpu_custom_call.1} parent=39 // pred_fallthru
                _
            $region40: #{tpu_custom_call.1} parent=35 // pred_fallthru
              _
            // Predicated region
            $region41: #{tpu_custom_call.1} parent=35 // pred_check
              _
            $region42: #{tpu_custom_call.1} parent=35 // pred_check_branch
              %215 = sbr.rel target = $region44
            $region43: #{tpu_custom_call.1} parent=35 // pred_region
              loop: start=0, step=1, limit=1
              $region45: #{tpu_custom_call.1} parent=43 // loop_pre_header
                _
              $region46: #{tpu_custom_call.1} parent=43 // loop_header
                %s218 = sphi 0, %s222
                %p219 = scmp.ge.s32.totalorder %s218, 1
                %s223 = sphi %s209, %s209
                %s224 = sphi %s204, %s204
              $region47: #{tpu_custom_call.1} parent=43 // loop_header_branch
                %221 = sbr.rel (%p219) target = $region51
              $region48: #{tpu_custom_call.1} parent=43 // loop_body
                %v225 = vld [vmem:[%s223] sm:$0xff]
                %226 = vst [vmem:[%s224] sm:$0xff] %v225
                %v227 = vld [vmem:[%s223 + $0x10] sm:$0xff]
                %228 = vst [vmem:[%s224 + $0x8] sm:$0xff] %v227
                %v229 = vld [vmem:[%s223 + $0x20] sm:$0xff]
                %230 = vst [vmem:[%s224 + $0x10] sm:$0xff] %v229
                %v231 = vld [vmem:[%s223 + $0x30] sm:$0xff]
                %232 = vst [vmem:[%s224 + $0x18] sm:$0xff] %v231
              $region49: #{tpu_custom_call.1} parent=43 // loop_footer
                %s222 = sadd.s32 1, %s218
              $region50: #{tpu_custom_call.1} parent=43 // loop_footer_branch
                %217 = sbr.rel target = $region46
              $region51: #{tpu_custom_call.1} parent=43 // loop_exit
                _
            $region44: #{tpu_custom_call.1} parent=35 // pred_fallthru
              _
          $region36: #{tpu_custom_call.1} parent=31 // pred_fallthru
            _
          %253 = vnop
        $region32: #{tpu_custom_call.1} parent=15 // pred_fallthru
          _
      $region16: #{tpu_custom_call.1} parent=5 // pred_fallthru
        _
      %p254 = scmp.le.s32.totalorder 1, %s10
      %p255 = scmp.lt.s32.totalorder %s10, 5
      %p256 = pnand %p254, %p255
      %p257 = pneg %p256
      // Predicated region
      $region67: #{tpu_custom_call.1} parent=5 // pred_check
        _
      $region68: #{tpu_custom_call.1} parent=5 // pred_check_branch
        %259 = sbr.rel (%p256) target = $region70
      $region69: #{tpu_custom_call.1} parent=5 // pred_region
        %s260 = ssub.s32 %s10, 1
        %s261 = sand.u32 %s115, 1
        %s262 = sand.u32 %s115, 1
        %s263 = smul.addr %s262, 32
        %s264 = scalar_lea.vmem [#allocation5], %s263
        // Predicated region
        $region71: #{tpu_custom_call.1} parent=69 // pred_check
          %p265 = pneg %p128
        $region72: #{tpu_custom_call.1} parent=69 // pred_check_branch
          %267 = sbr.rel (%p265) target = $region74
        $region73: #{tpu_custom_call.1} parent=69 // pred_region
          _
        $region74: #{tpu_custom_call.1} parent=69 // pred_fallthru
          _
        %s268 = smul.u32 16, %s19
        %p269 = scmp.lt.s32.totalorder %s268, 31
        %s270 = scalar_select %p269, %s268, 31
        %s271 = smul.addr %s270, 8
        %s272 = scalar_lea.vmem %s0, %s271
        %p273 = pneg %p48
        %p274 = pneg %p45
        %p275 = scmp.lt.s32.totalorder %s20, 1
        %s276 = scalar_select %p275, %s20, 1
        %s277 = smul.addr %s276, 4
        %s278 = scalar_lea.vmem %s1, %s277
        %p279 = pneg %p74
        %p280 = pneg %p71
        %s281 = smul.u32 16, %s20
        %p282 = scmp.lt.s32.totalorder %s281, 31
        %s283 = scalar_select %p282, %s281, 31
        %s284 = smul.addr %s283, 4
        %s285 = scalar_lea.vmem %s2, %s284
        %p286 = pneg %p100
        %p287 = pneg %p97
        %s288 = sand.u32 %s115, 1
        %s289 = sand.u32 %s115, 1
        %s290 = smul.addr %s289, 32
        %s291 = scalar_lea.vmem [#allocation5], %s290
        %p292 = pneg %p128
        %p293 = pneg %p125
        %p294 = pneg %p154
        %p295 = pneg %p151
        %s296 = smul.u32 16, %s19
        %p297 = scmp.lt.s32.totalorder %s296, 31
        %s298 = scalar_select %p297, %s296, 31
        %s299 = smul.addr %s298, 8
        %s300 = scalar_lea.vmem %s4, %s299
        %s301 = smul.u32 16, %s19
        %p302 = scmp.lt.s32.totalorder %s301, 31
        %s303 = scalar_select %p302, %s301, 31
        %s304 = smul.addr %s303, 8
        %s305 = scalar_lea.vmem %s0, %s304
        %s306 = smul.u32 16, %s19
        %p307 = scmp.lt.s32.totalorder %s20, 1
        %s308 = scalar_select %p307, %s20, 1
        %s309 = smul.addr %s308, 4
        %s310 = scalar_lea.vmem %s1, %s309
        %s311 = smul.u32 16, %s20
        %p312 = scmp.lt.s32.totalorder %s311, 31
        %s313 = scalar_select %p312, %s311, 31
        %s314 = smul.addr %s313, 4
        %s315 = scalar_lea.vmem %s2, %s314
        %s316 = smul.u32 16, %s20
        %s317 = smul.u32 4, %s19
        %s318 = smul.u32 16, %s19
        %p319 = scmp.lt.s32.totalorder %s318, 31
        %s320 = scalar_select %p319, %s318, 31
        %s321 = smul.addr %s320, 8
        %s322 = scalar_lea.vmem %s4, %s321
        %s323 = smul.u32 16, %s19
        %p327 = scmp.eq.s32.totalorder %s20, 0
        // Predicated region
        $region75: #{tpu_custom_call.1} parent=69 // pred_check
          %p328 = pneg %p327
        $region76: #{tpu_custom_call.1} parent=69 // pred_check_branch
          %330 = sbr.rel (%p328) target = $region78
        $region77: #{tpu_custom_call.1} parent=69 // pred_region
          %vm331 = vcmask 31744
          %332 = vst.msk [vmem:[#allocation2] sm:$0xff] %vm331, -1e+30
          %333 = vst.msk [vmem:[#allocation2 + $0x8] sm:$0xff] %vm331, -1e+30
          %334 = vst.msk [vmem:[#allocation2 + $0x10] sm:$0xff] %vm331, -1e+30
          %335 = vst.msk [vmem:[#allocation2 + $0x18] sm:$0xff] %vm331, -1e+30
          %336 = vst.msk [vmem:[#allocation2 + $0x20] sm:$0xff] %vm331, -1e+30
          %337 = vst.msk [vmem:[#allocation2 + $0x28] sm:$0xff] %vm331, -1e+30
          %338 = vst.msk [vmem:[#allocation2 + $0x30] sm:$0xff] %vm331, -1e+30
          %339 = vst.msk [vmem:[#allocation2 + $0x38] sm:$0xff] %vm331, -1e+30
          %340 = vst.msk [vmem:[#allocation2 + $0x40] sm:$0xff] %vm331, -1e+30
          %341 = vst.msk [vmem:[#allocation2 + $0x48] sm:$0xff] %vm331, -1e+30
          %342 = vst.msk [vmem:[#allocation2 + $0x50] sm:$0xff] %vm331, -1e+30
          %343 = vst.msk [vmem:[#allocation2 + $0x58] sm:$0xff] %vm331, -1e+30
          %344 = vst.msk [vmem:[#allocation2 + $0x60] sm:$0xff] %vm331, -1e+30
          %345 = vst.msk [vmem:[#allocation2 + $0x68] sm:$0xff] %vm331, -1e+30
          %346 = vst.msk [vmem:[#allocation2 + $0x70] sm:$0xff] %vm331, -1e+30
          %347 = vst.msk [vmem:[#allocation2 + $0x78] sm:$0xff] %vm331, -1e+30
          %348 = vst.msk [vmem:[#allocation3] sm:$0xff] %vm331, 0.0
          %349 = vst.msk [vmem:[#allocation3 + $0x8] sm:$0xff] %vm331, 0.0
          %350 = vst.msk [vmem:[#allocation3 + $0x10] sm:$0xff] %vm331, 0.0
          %351 = vst.msk [vmem:[#allocation3 + $0x18] sm:$0xff] %vm331, 0.0
          %352 = vst.msk [vmem:[#allocation3 + $0x20] sm:$0xff] %vm331, 0.0
          %353 = vst.msk [vmem:[#allocation3 + $0x28] sm:$0xff] %vm331, 0.0
          %354 = vst.msk [vmem:[#allocation3 + $0x30] sm:$0xff] %vm331, 0.0
          %355 = vst.msk [vmem:[#allocation3 + $0x38] sm:$0xff] %vm331, 0.0
          %356 = vst.msk [vmem:[#allocation3 + $0x40] sm:$0xff] %vm331, 0.0
          %357 = vst.msk [vmem:[#allocation3 + $0x48] sm:$0xff] %vm331, 0.0
          %358 = vst.msk [vmem:[#allocation3 + $0x50] sm:$0xff] %vm331, 0.0
          %359 = vst.msk [vmem:[#allocation3 + $0x58] sm:$0xff] %vm331, 0.0
          %360 = vst.msk [vmem:[#allocation3 + $0x60] sm:$0xff] %vm331, 0.0
          %361 = vst.msk [vmem:[#allocation3 + $0x68] sm:$0xff] %vm331, 0.0
          %362 = vst.msk [vmem:[#allocation3 + $0x70] sm:$0xff] %vm331, 0.0
          %363 = vst.msk [vmem:[#allocation3 + $0x78] sm:$0xff] %vm331, 0.0
          %vm364 = vcmask 523264
          %365 = vst.msk [vmem:[#allocation4] sm:$0xff] %vm364, 0.0
          %366 = vst.msk [vmem:[#allocation4 + $0x8] sm:$0xff] %vm364, 0.0
          %367 = vst.msk [vmem:[#allocation4 + $0x10] sm:$0xff] %vm364, 0.0
          %368 = vst.msk [vmem:[#allocation4 + $0x18] sm:$0xff] %vm364, 0.0
          %369 = vst.msk [vmem:[#allocation4 + $0x20] sm:$0xff] %vm364, 0.0
          %370 = vst.msk [vmem:[#allocation4 + $0x28] sm:$0xff] %vm364, 0.0
          %371 = vst.msk [vmem:[#allocation4 + $0x30] sm:$0xff] %vm364, 0.0
          %372 = vst.msk [vmem:[#allocation4 + $0x38] sm:$0xff] %vm364, 0.0
          %373 = vst.msk [vmem:[#allocation4 + $0x40] sm:$0xff] %vm364, 0.0
          %374 = vst.msk [vmem:[#allocation4 + $0x48] sm:$0xff] %vm364, 0.0
          %375 = vst.msk [vmem:[#allocation4 + $0x50] sm:$0xff] %vm364, 0.0
          %376 = vst.msk [vmem:[#allocation4 + $0x58] sm:$0xff] %vm364, 0.0
          %377 = vst.msk [vmem:[#allocation4 + $0x60] sm:$0xff] %vm364, 0.0
          %378 = vst.msk [vmem:[#allocation4 + $0x68] sm:$0xff] %vm364, 0.0
          %379 = vst.msk [vmem:[#allocation4 + $0x70] sm:$0xff] %vm364, 0.0
          %380 = vst.msk [vmem:[#allocation4 + $0x78] sm:$0xff] %vm364, 0.0
        $region78: #{tpu_custom_call.1} parent=69 // pred_fallthru
          _
        %v381 = vld [vmem:[%s264] sm:$0xff]
        %v382 = vld [vmem:[%s264 + $0x8] sm:$0xff]
        %v383 = vld [vmem:[%s264 + $0x10] sm:$0xff]
        %v384 = vld [vmem:[%s264 + $0x18] sm:$0xff]
        %vm385 = vnez %v381
        %vm386 = vnez %v382
        %vm387 = vnez %v383
        %vm388 = vnez %v384
        %v389 = vld [vmem:[%s305] sm:$0xff]
        %v390 = vld [vmem:[%s305 + $0x8] sm:$0xff]
        %v391 = vld [vmem:[%s305 + $0x10] sm:$0xff]
        %v392 = vld [vmem:[%s305 + $0x18] sm:$0xff]
        %v393 = vld [vmem:[%s305 + $0x20] sm:$0xff]
        %v394 = vld [vmem:[%s305 + $0x28] sm:$0xff]
        %v395 = vld [vmem:[%s305 + $0x30] sm:$0xff]
        %v396 = vld [vmem:[%s305 + $0x38] sm:$0xff]
        %v397 = vld [vmem:[%s305 + $0x40] sm:$0xff]
        %v398 = vld [vmem:[%s305 + $0x48] sm:$0xff]
        %v399 = vld [vmem:[%s305 + $0x50] sm:$0xff]
        %v400 = vld [vmem:[%s305 + $0x58] sm:$0xff]
        %v401 = vld [vmem:[%s305 + $0x60] sm:$0xff]
        %v402 = vld [vmem:[%s305 + $0x68] sm:$0xff]
        %v403 = vld [vmem:[%s305 + $0x70] sm:$0xff]
        %v404 = vld [vmem:[%s305 + $0x78] sm:$0xff]
        %v405 = vld [vmem:[%s310] sm:$0x1]
        %407 = vset.pattern.permute.xlu0 0
        %408 = vperm.xlu0 %407, %v389
        %v409 = vpop.permute.xlu0 %408
        %412 = vset.pattern.permute.xlu0 0
        %413 = vperm.xlu0 %412, %v390
        %v414 = vpop.permute.xlu0 %413
        %417 = vset.pattern.permute.xlu0 0
        %418 = vperm.xlu0 %417, %v391
        %v419 = vpop.permute.xlu0 %418
        %422 = vset.pattern.permute.xlu0 0
        %423 = vperm.xlu0 %422, %v392
        %v424 = vpop.permute.xlu0 %423
        %427 = vset.pattern.permute.xlu0 0
        %428 = vperm.xlu0 %427, %v393
        %v429 = vpop.permute.xlu0 %428
        %432 = vset.pattern.permute.xlu0 0
        %433 = vperm.xlu0 %432, %v394
        %v434 = vpop.permute.xlu0 %433
        %437 = vset.pattern.permute.xlu0 0
        %438 = vperm.xlu0 %437, %v395
        %v439 = vpop.permute.xlu0 %438
        %442 = vset.pattern.permute.xlu0 0
        %443 = vperm.xlu0 %442, %v396
        %v444 = vpop.permute.xlu0 %443
        %447 = vset.pattern.permute.xlu0 0
        %448 = vperm.xlu0 %447, %v397
        %v449 = vpop.permute.xlu0 %448
        %452 = vset.pattern.permute.xlu0 0
        %453 = vperm.xlu0 %452, %v398
        %v454 = vpop.permute.xlu0 %453
        %457 = vset.pattern.permute.xlu0 0
        %458 = vperm.xlu0 %457, %v399
        %v459 = vpop.permute.xlu0 %458
        %462 = vset.pattern.permute.xlu0 0
        %463 = vperm.xlu0 %462, %v400
        %v464 = vpop.permute.xlu0 %463
        %467 = vset.pattern.permute.xlu0 0
        %468 = vperm.xlu0 %467, %v401
        %v469 = vpop.permute.xlu0 %468
        %472 = vset.pattern.permute.xlu0 0
        %473 = vperm.xlu0 %472, %v402
        %v474 = vpop.permute.xlu0 %473
        %477 = vset.pattern.permute.xlu0 0
        %478 = vperm.xlu0 %477, %v403
        %v479 = vpop.permute.xlu0 %478
        %482 = vset.pattern.permute.xlu0 0
        %483 = vperm.xlu0 %482, %v404
        %v484 = vpop.permute.xlu0 %483
        %v486 = vlaneseq
        %v487 = vshrl.u32 %v486, 7
        %v488 = vsub.s32 0, %v487
        %v489 = vrot.slane %v405, %v488
        %v490 = vadd.f32 %v409, %v489
        %v491 = vadd.f32 %v414, %v489
        %v492 = vadd.f32 %v419, %v489
        %v493 = vadd.f32 %v424, %v489
        %v494 = vadd.f32 %v429, %v489
        %v495 = vadd.f32 %v434, %v489
        %v496 = vadd.f32 %v439, %v489
        %v497 = vadd.f32 %v444, %v489
        %v498 = vadd.f32 %v449, %v489
        %v499 = vadd.f32 %v454, %v489
        %v500 = vadd.f32 %v459, %v489
        %v501 = vadd.f32 %v464, %v489
        %v502 = vadd.f32 %v469, %v489
        %v503 = vadd.f32 %v474, %v489
        %v504 = vadd.f32 %v479, %v489
        %v505 = vadd.f32 %v484, %v489
        %v506 = vmul.f32 %v490, 0.2
        %v507 = vmul.f32 %v491, 0.2
        %v508 = vmul.f32 %v492, 0.2
        %v509 = vmul.f32 %v493, 0.2
        %v510 = vmul.f32 %v494, 0.2
        %v511 = vmul.f32 %v495, 0.2
        %v512 = vmul.f32 %v496, 0.2
        %v513 = vmul.f32 %v497, 0.2
        %v514 = vmul.f32 %v498, 0.2
        %v515 = vmul.f32 %v499, 0.2
        %v516 = vmul.f32 %v500, 0.2
        %v517 = vmul.f32 %v501, 0.2
        %v518 = vmul.f32 %v502, 0.2
        %v519 = vmul.f32 %v503, 0.2
        %v520 = vmul.f32 %v504, 0.2
        %v521 = vmul.f32 %v505, 0.2
        %v522 = vmax.f32 %v490, %v506
        %v523 = vmax.f32 %v491, %v507
        %v524 = vmax.f32 %v492, %v508
        %v525 = vmax.f32 %v493, %v509
        %v526 = vmax.f32 %v494, %v510
        %v527 = vmax.f32 %v495, %v511
        %v528 = vmax.f32 %v496, %v512
        %v529 = vmax.f32 %v497, %v513
        %v530 = vmax.f32 %v498, %v514
        %v531 = vmax.f32 %v499, %v515
        %v532 = vmax.f32 %v500, %v516
        %v533 = vmax.f32 %v501, %v517
        %v534 = vmax.f32 %v502, %v518
        %v535 = vmax.f32 %v503, %v519
        %v536 = vmax.f32 %v504, %v520
        %v537 = vmax.f32 %v505, %v521
        %v538 = vsel %vm385, 16843009, 0
        %v539 = vsel %vm386, 16843009, 0
        %v540 = vsel %vm387, 16843009, 0
        %v541 = vsel %vm388, 16843009, 0
        %v542 = vunpack.c.0.s8 %v538
        %v543 = vunpack.c.1.s8 %v538
        %v544 = vunpack.c.2.s8 %v538
        %v545 = vunpack.c.3.s8 %v538
        %v546 = vunpack.c.0.s8 %v539
        %v547 = vunpack.c.1.s8 %v539
        %v548 = vunpack.c.2.s8 %v539
        %v549 = vunpack.c.3.s8 %v539
        %v550 = vunpack.c.0.s8 %v540
        %v551 = vunpack.c.1.s8 %v540
        %v552 = vunpack.c.2.s8 %v540
        %v553 = vunpack.c.3.s8 %v540
        %v554 = vunpack.c.0.s8 %v541
        %v555 = vunpack.c.1.s8 %v541
        %v556 = vunpack.c.2.s8 %v541
        %v557 = vunpack.c.3.s8 %v541
        %v558 = vpack.c.b16 %v542, %v542
        %v559 = vpack.c.b8 %v558, %v558
        %v560 = vpack.c.b16 %v543, %v543
        %v561 = vpack.c.b8 %v560, %v560
        %v562 = vpack.c.b16 %v544, %v544
        %v563 = vpack.c.b8 %v562, %v562
        %v564 = vpack.c.b16 %v545, %v545
        %v565 = vpack.c.b8 %v564, %v564
        %v566 = vpack.c.b16 %v546, %v546
        %v567 = vpack.c.b8 %v566, %v566
        %v568 = vpack.c.b16 %v547, %v547
        %v569 = vpack.c.b8 %v568, %v568
        %v570 = vpack.c.b16 %v548, %v548
        %v571 = vpack.c.b8 %v570, %v570
        %v572 = vpack.c.b16 %v549, %v549
        %v573 = vpack.c.b8 %v572, %v572
        %v574 = vpack.c.b16 %v550, %v550
        %v575 = vpack.c.b8 %v574, %v574
        %v576 = vpack.c.b16 %v551, %v551
        %v577 = vpack.c.b8 %v576, %v576
        %v578 = vpack.c.b16 %v552, %v552
        %v579 = vpack.c.b8 %v578, %v578
        %v580 = vpack.c.b16 %v553, %v553
        %v581 = vpack.c.b8 %v580, %v580
        %v582 = vpack.c.b16 %v554, %v554
        %v583 = vpack.c.b8 %v582, %v582
        %v584 = vpack.c.b16 %v555, %v555
        %v585 = vpack.c.b8 %v584, %v584
        %v586 = vpack.c.b16 %v556, %v556
        %v587 = vpack.c.b8 %v586, %v586
        %v588 = vpack.c.b16 %v557, %v557
        %v589 = vpack.c.b8 %v588, %v588
        %vm590 = vnez %v559
        %vm591 = vnez %v561
        %vm592 = vnez %v563
        %vm593 = vnez %v565
        %vm594 = vnez %v567
        %vm595 = vnez %v569
        %vm596 = vnez %v571
        %vm597 = vnez %v573
        %vm598 = vnez %v575
        %vm599 = vnez %v577
        %vm600 = vnez %v579
        %vm601 = vnez %v581
        %vm602 = vnez %v583
        %vm603 = vnez %v585
        %vm604 = vnez %v587
        %vm605 = vnez %v589
        %v606 = vsel %vm590, 16843009, 0
        %v607 = vsel %vm591, 16843009, 0
        %v608 = vsel %vm592, 16843009, 0
        %v609 = vsel %vm593, 16843009, 0
        %v610 = vsel %vm594, 16843009, 0
        %v611 = vsel %vm595, 16843009, 0
        %v612 = vsel %vm596, 16843009, 0
        %v613 = vsel %vm597, 16843009, 0
        %v614 = vsel %vm598, 16843009, 0
        %v615 = vsel %vm599, 16843009, 0
        %v616 = vsel %vm600, 16843009, 0
        %v617 = vsel %vm601, 16843009, 0
        %v618 = vsel %vm602, 16843009, 0
        %v619 = vsel %vm603, 16843009, 0
        %v620 = vsel %vm604, 16843009, 0
        %v621 = vsel %vm605, 16843009, 0
        %v622 = vunpack.c.0.s8 %v606
        %v623 = vunpack.c.0.s8 %v607
        %v624 = vunpack.c.0.s8 %v608
        %v625 = vunpack.c.0.s8 %v609
        %v626 = vunpack.c.0.s8 %v610
        %v627 = vunpack.c.0.s8 %v611
        %v628 = vunpack.c.0.s8 %v612
        %v629 = vunpack.c.0.s8 %v613
        %v630 = vunpack.c.0.s8 %v614
        %v631 = vunpack.c.0.s8 %v615
        %v632 = vunpack.c.0.s8 %v616
        %v633 = vunpack.c.0.s8 %v617
        %v634 = vunpack.c.0.s8 %v618
        %v635 = vunpack.c.0.s8 %v619
        %v636 = vunpack.c.0.s8 %v620
        %v637 = vunpack.c.0.s8 %v621
        %vm638 = vcmp.ne.s32.totalorder %v622, 0
        %vm639 = vcmp.ne.s32.totalorder %v623, 0
        %vm640 = vcmp.ne.s32.totalorder %v624, 0
        %vm641 = vcmp.ne.s32.totalorder %v625, 0
        %vm642 = vcmp.ne.s32.totalorder %v626, 0
        %vm643 = vcmp.ne.s32.totalorder %v627, 0
        %vm644 = vcmp.ne.s32.totalorder %v628, 0
        %vm645 = vcmp.ne.s32.totalorder %v629, 0
        %vm646 = vcmp.ne.s32.totalorder %v630, 0
        %vm647 = vcmp.ne.s32.totalorder %v631, 0
        %vm648 = vcmp.ne.s32.totalorder %v632, 0
        %vm649 = vcmp.ne.s32.totalorder %v633, 0
        %vm650 = vcmp.ne.s32.totalorder %v634, 0
        %vm651 = vcmp.ne.s32.totalorder %v635, 0
        %vm652 = vcmp.ne.s32.totalorder %v636, 0
        %vm653 = vcmp.ne.s32.totalorder %v637, 0
        %v654 = vsel %vm638, %v522, -1e+30
        %v655 = vsel %vm639, %v523, -1e+30
        %v656 = vsel %vm640, %v524, -1e+30
        %v657 = vsel %vm641, %v525, -1e+30
        %v658 = vsel %vm642, %v526, -1e+30
        %v659 = vsel %vm643, %v527, -1e+30
        %v660 = vsel %vm644, %v528, -1e+30
        %v661 = vsel %vm645, %v529, -1e+30
        %v662 = vsel %vm646, %v530, -1e+30
        %v663 = vsel %vm647, %v531, -1e+30
        %v664 = vsel %vm648, %v532, -1e+30
        %v665 = vsel %vm649, %v533, -1e+30
        %v666 = vsel %vm650, %v534, -1e+30
        %v667 = vsel %vm651, %v535, -1e+30
        %v668 = vsel %vm652, %v536, -1e+30
        %v669 = vsel %vm653, %v537, -1e+30
        %v670 = vld [vmem:[#allocation2] sm:$0xff]
        %v671 = vld [vmem:[#allocation2 + $0x8] sm:$0xff]
        %v672 = vld [vmem:[#allocation2 + $0x10] sm:$0xff]
        %v673 = vld [vmem:[#allocation2 + $0x18] sm:$0xff]
        %v674 = vld [vmem:[#allocation2 + $0x20] sm:$0xff]
        %v675 = vld [vmem:[#allocation2 + $0x28] sm:$0xff]
        %v676 = vld [vmem:[#allocation2 + $0x30] sm:$0xff]
        %v677 = vld [vmem:[#allocation2 + $0x38] sm:$0xff]
        %v678 = vld [vmem:[#allocation2 + $0x40] sm:$0xff]
        %v679 = vld [vmem:[#allocation2 + $0x48] sm:$0xff]
        %v680 = vld [vmem:[#allocation2 + $0x50] sm:$0xff]
        %v681 = vld [vmem:[#allocation2 + $0x58] sm:$0xff]
        %v682 = vld [vmem:[#allocation2 + $0x60] sm:$0xff]
        %v683 = vld [vmem:[#allocation2 + $0x68] sm:$0xff]
        %v684 = vld [vmem:[#allocation2 + $0x70] sm:$0xff]
        %v685 = vld [vmem:[#allocation2 + $0x78] sm:$0xff]
        %686 = vmax.xlane.f32.xlu0 %v654
        %v687 = vpop.xlane.xlu0 %686
        %688 = vmax.xlane.f32.xlu0 %v655
        %v689 = vpop.xlane.xlu0 %688
        %690 = vmax.xlane.f32.xlu0 %v656
        %v691 = vpop.xlane.xlu0 %690
        %692 = vmax.xlane.f32.xlu0 %v657
        %v693 = vpop.xlane.xlu0 %692
        %694 = vmax.xlane.f32.xlu0 %v658
        %v695 = vpop.xlane.xlu0 %694
        %696 = vmax.xlane.f32.xlu0 %v659
        %v697 = vpop.xlane.xlu0 %696
        %698 = vmax.xlane.f32.xlu0 %v660
        %v699 = vpop.xlane.xlu0 %698
        %700 = vmax.xlane.f32.xlu0 %v661
        %v701 = vpop.xlane.xlu0 %700
        %702 = vmax.xlane.f32.xlu0 %v662
        %v703 = vpop.xlane.xlu0 %702
        %704 = vmax.xlane.f32.xlu0 %v663
        %v705 = vpop.xlane.xlu0 %704
        %706 = vmax.xlane.f32.xlu0 %v664
        %v707 = vpop.xlane.xlu0 %706
        %708 = vmax.xlane.f32.xlu0 %v665
        %v709 = vpop.xlane.xlu0 %708
        %710 = vmax.xlane.f32.xlu0 %v666
        %v711 = vpop.xlane.xlu0 %710
        %712 = vmax.xlane.f32.xlu0 %v667
        %v713 = vpop.xlane.xlu0 %712
        %714 = vmax.xlane.f32.xlu0 %v668
        %v715 = vpop.xlane.xlu0 %714
        %716 = vmax.xlane.f32.xlu0 %v669
        %v717 = vpop.xlane.xlu0 %716
        %v718 = vmax.f32 %v670, %v687
        %v719 = vmax.f32 %v671, %v689
        %v720 = vmax.f32 %v672, %v691
        %v721 = vmax.f32 %v673, %v693
        %v722 = vmax.f32 %v674, %v695
        %v723 = vmax.f32 %v675, %v697
        %v724 = vmax.f32 %v676, %v699
        %v725 = vmax.f32 %v677, %v701
        %v726 = vmax.f32 %v678, %v703
        %v727 = vmax.f32 %v679, %v705
        %v728 = vmax.f32 %v680, %v707
        %v729 = vmax.f32 %v681, %v709
        %v730 = vmax.f32 %v682, %v711
        %v731 = vmax.f32 %v683, %v713
        %v732 = vmax.f32 %v684, %v715
        %v733 = vmax.f32 %v685, %v717
        %v734 = vsub.f32 %v670, %v718
        %v735 = vsub.f32 %v671, %v719
        %v736 = vsub.f32 %v672, %v720
        %v737 = vsub.f32 %v673, %v721
        %v738 = vsub.f32 %v674, %v722
        %v739 = vsub.f32 %v675, %v723
        %v740 = vsub.f32 %v676, %v724
        %v741 = vsub.f32 %v677, %v725
        %v742 = vsub.f32 %v678, %v726
        %v743 = vsub.f32 %v679, %v727
        %v744 = vsub.f32 %v680, %v728
        %v745 = vsub.f32 %v681, %v729
        %v746 = vsub.f32 %v682, %v730
        %v747 = vsub.f32 %v683, %v731
        %v748 = vsub.f32 %v684, %v732
        %v749 = vsub.f32 %v685, %v733
        %v750 = vmul.f32 %v734, 1.442695
        %v751 = vpow.pop %v750
        %v752 = vmul.f32 %v735, 1.442695
        %v753 = vpow.pop %v752
        %v754 = vmul.f32 %v736, 1.442695
        %v755 = vpow.pop %v754
        %v756 = vmul.f32 %v737, 1.442695
        %v757 = vpow.pop %v756
        %v758 = vmul.f32 %v738, 1.442695
        %v759 = vpow.pop %v758
        %v760 = vmul.f32 %v739, 1.442695
        %v761 = vpow.pop %v760
        %v762 = vmul.f32 %v740, 1.442695
        %v763 = vpow.pop %v762
        %v764 = vmul.f32 %v741, 1.442695
        %v765 = vpow.pop %v764
        %v766 = vmul.f32 %v742, 1.442695
        %v767 = vpow.pop %v766
        %v768 = vmul.f32 %v743, 1.442695
        %v769 = vpow.pop %v768
        %v770 = vmul.f32 %v744, 1.442695
        %v771 = vpow.pop %v770
        %v772 = vmul.f32 %v745, 1.442695
        %v773 = vpow.pop %v772
        %v774 = vmul.f32 %v746, 1.442695
        %v775 = vpow.pop %v774
        %v776 = vmul.f32 %v747, 1.442695
        %v777 = vpow.pop %v776
        %v778 = vmul.f32 %v748, 1.442695
        %v779 = vpow.pop %v778
        %v780 = vmul.f32 %v749, 1.442695
        %v781 = vpow.pop %v780
        %783 = vset.pattern.permute.xlu0 0
        %784 = vperm.xlu0 %783, %v718
        %v785 = vpop.permute.xlu0 %784
        %788 = vset.pattern.permute.xlu0 0
        %789 = vperm.xlu0 %788, %v719
        %v790 = vpop.permute.xlu0 %789
        %793 = vset.pattern.permute.xlu0 0
        %794 = vperm.xlu0 %793, %v720
        %v795 = vpop.permute.xlu0 %794
        %798 = vset.pattern.permute.xlu0 0
        %799 = vperm.xlu0 %798, %v721
        %v800 = vpop.permute.xlu0 %799
        %803 = vset.pattern.permute.xlu0 0
        %804 = vperm.xlu0 %803, %v722
        %v805 = vpop.permute.xlu0 %804
        %808 = vset.pattern.permute.xlu0 0
        %809 = vperm.xlu0 %808, %v723
        %v810 = vpop.permute.xlu0 %809
        %813 = vset.pattern.permute.xlu0 0
        %814 = vperm.xlu0 %813, %v724
        %v815 = vpop.permute.xlu0 %814
        %818 = vset.pattern.permute.xlu0 0
        %819 = vperm.xlu0 %818, %v725
        %v820 = vpop.permute.xlu0 %819
        %823 = vset.pattern.permute.xlu0 0
        %824 = vperm.xlu0 %823, %v726
        %v825 = vpop.permute.xlu0 %824
        %828 = vset.pattern.permute.xlu0 0
        %829 = vperm.xlu0 %828, %v727
        %v830 = vpop.permute.xlu0 %829
        %833 = vset.pattern.permute.xlu0 0
        %834 = vperm.xlu0 %833, %v728
        %v835 = vpop.permute.xlu0 %834
        %838 = vset.pattern.permute.xlu0 0
        %839 = vperm.xlu0 %838, %v729
        %v840 = vpop.permute.xlu0 %839
        %843 = vset.pattern.permute.xlu0 0
        %844 = vperm.xlu0 %843, %v730
        %v845 = vpop.permute.xlu0 %844
        %848 = vset.pattern.permute.xlu0 0
        %849 = vperm.xlu0 %848, %v731
        %v850 = vpop.permute.xlu0 %849
        %853 = vset.pattern.permute.xlu0 0
        %854 = vperm.xlu0 %853, %v732
        %v855 = vpop.permute.xlu0 %854
        %858 = vset.pattern.permute.xlu0 0
        %859 = vperm.xlu0 %858, %v733
        %v860 = vpop.permute.xlu0 %859
        %v862 = vsub.f32 %v654, %v785
        %v863 = vsub.f32 %v655, %v790
        %v864 = vsub.f32 %v656, %v795
        %v865 = vsub.f32 %v657, %v800
        %v866 = vsub.f32 %v658, %v805
        %v867 = vsub.f32 %v659, %v810
        %v868 = vsub.f32 %v660, %v815
        %v869 = vsub.f32 %v661, %v820
        %v870 = vsub.f32 %v662, %v825
        %v871 = vsub.f32 %v663, %v830
        %v872 = vsub.f32 %v664, %v835
        %v873 = vsub.f32 %v665, %v840
        %v874 = vsub.f32 %v666, %v845
        %v875 = vsub.f32 %v667, %v850
        %v876 = vsub.f32 %v668, %v855
        %v877 = vsub.f32 %v669, %v860
        %v878 = vmul.f32 %v862, 1.442695
        %v879 = vpow.pop %v878
        %v880 = vmul.f32 %v863, 1.442695
        %v881 = vpow.pop %v880
        %v882 = vmul.f32 %v864, 1.442695
        %v883 = vpow.pop %v882
        %v884 = vmul.f32 %v865, 1.442695
        %v885 = vpow.pop %v884
        %v886 = vmul.f32 %v866, 1.442695
        %v887 = vpow.pop %v886
        %v888 = vmul.f32 %v867, 1.442695
        %v889 = vpow.pop %v888
        %v890 = vmul.f32 %v868, 1.442695
        %v891 = vpow.pop %v890
        %v892 = vmul.f32 %v869, 1.442695
        %v893 = vpow.pop %v892
        %v894 = vmul.f32 %v870, 1.442695
        %v895 = vpow.pop %v894
        %v896 = vmul.f32 %v871, 1.442695
        %v897 = vpow.pop %v896
        %v898 = vmul.f32 %v872, 1.442695
        %v899 = vpow.pop %v898
        %v900 = vmul.f32 %v873, 1.442695
        %v901 = vpow.pop %v900
        %v902 = vmul.f32 %v874, 1.442695
        %v903 = vpow.pop %v902
        %v904 = vmul.f32 %v875, 1.442695
        %v905 = vpow.pop %v904
        %v906 = vmul.f32 %v876, 1.442695
        %v907 = vpow.pop %v906
        %v908 = vmul.f32 %v877, 1.442695
        %v909 = vpow.pop %v908
        %v910 = vld [vmem:[#allocation3] sm:$0xff]
        %v911 = vld [vmem:[#allocation3 + $0x8] sm:$0xff]
        %v912 = vld [vmem:[#allocation3 + $0x10] sm:$0xff]
        %v913 = vld [vmem:[#allocation3 + $0x18] sm:$0xff]
        %v914 = vld [vmem:[#allocation3 + $0x20] sm:$0xff]
        %v915 = vld [vmem:[#allocation3 + $0x28] sm:$0xff]
        %v916 = vld [vmem:[#allocation3 + $0x30] sm:$0xff]
        %v917 = vld [vmem:[#allocation3 + $0x38] sm:$0xff]
        %v918 = vld [vmem:[#allocation3 + $0x40] sm:$0xff]
        %v919 = vld [vmem:[#allocation3 + $0x48] sm:$0xff]
        %v920 = vld [vmem:[#allocation3 + $0x50] sm:$0xff]
        %v921 = vld [vmem:[#allocation3 + $0x58] sm:$0xff]
        %v922 = vld [vmem:[#allocation3 + $0x60] sm:$0xff]
        %v923 = vld [vmem:[#allocation3 + $0x68] sm:$0xff]
        %v924 = vld [vmem:[#allocation3 + $0x70] sm:$0xff]
        %v925 = vld [vmem:[#allocation3 + $0x78] sm:$0xff]
        %v926 = vmul.f32 %v751, %v910
        %v927 = vmul.f32 %v753, %v911
        %v928 = vmul.f32 %v755, %v912
        %v929 = vmul.f32 %v757, %v913
        %v930 = vmul.f32 %v759, %v914
        %v931 = vmul.f32 %v761, %v915
        %v932 = vmul.f32 %v763, %v916
        %v933 = vmul.f32 %v765, %v917
        %v934 = vmul.f32 %v767, %v918
        %v935 = vmul.f32 %v769, %v919
        %v936 = vmul.f32 %v771, %v920
        %v937 = vmul.f32 %v773, %v921
        %v938 = vmul.f32 %v775, %v922
        %v939 = vmul.f32 %v777, %v923
        %v940 = vmul.f32 %v779, %v924
        %v941 = vmul.f32 %v781, %v925
        %942 = vadd.xlane.f32.xlu0 %v879
        %v943 = vpop.xlane.xlu0 %942
        %944 = vadd.xlane.f32.xlu0 %v881
        %v945 = vpop.xlane.xlu0 %944
        %946 = vadd.xlane.f32.xlu0 %v883
        %v947 = vpop.xlane.xlu0 %946
        %948 = vadd.xlane.f32.xlu0 %v885
        %v949 = vpop.xlane.xlu0 %948
        %950 = vadd.xlane.f32.xlu0 %v887
        %v951 = vpop.xlane.xlu0 %950
        %952 = vadd.xlane.f32.xlu0 %v889
        %v953 = vpop.xlane.xlu0 %952
        %954 = vadd.xlane.f32.xlu0 %v891
        %v955 = vpop.xlane.xlu0 %954
        %956 = vadd.xlane.f32.xlu0 %v893
        %v957 = vpop.xlane.xlu0 %956
        %958 = vadd.xlane.f32.xlu0 %v895
        %v959 = vpop.xlane.xlu0 %958
        %960 = vadd.xlane.f32.xlu0 %v897
        %v961 = vpop.xlane.xlu0 %960
        %962 = vadd.xlane.f32.xlu0 %v899
        %v963 = vpop.xlane.xlu0 %962
        %964 = vadd.xlane.f32.xlu0 %v901
        %v965 = vpop.xlane.xlu0 %964
        %966 = vadd.xlane.f32.xlu0 %v903
        %v967 = vpop.xlane.xlu0 %966
        %968 = vadd.xlane.f32.xlu0 %v905
        %v969 = vpop.xlane.xlu0 %968
        %970 = vadd.xlane.f32.xlu0 %v907
        %v971 = vpop.xlane.xlu0 %970
        %972 = vadd.xlane.f32.xlu0 %v909
        %v973 = vpop.xlane.xlu0 %972
        %v974 = vadd.f32 %v926, %v943
        %v975 = vadd.f32 %v927, %v945
        %v976 = vadd.f32 %v928, %v947
        %v977 = vadd.f32 %v929, %v949
        %v978 = vadd.f32 %v930, %v951
        %v979 = vadd.f32 %v931, %v953
        %v980 = vadd.f32 %v932, %v955
        %v981 = vadd.f32 %v933, %v957
        %v982 = vadd.f32 %v934, %v959
        %v983 = vadd.f32 %v935, %v961
        %v984 = vadd.f32 %v936, %v963
        %v985 = vadd.f32 %v937, %v965
        %v986 = vadd.f32 %v938, %v967
        %v987 = vadd.f32 %v939, %v969
        %v988 = vadd.f32 %v940, %v971
        %v989 = vadd.f32 %v941, %v973
        %vm990 = vcmask 7168
        %991 = vst.msk [vmem:[#allocation3] sm:$0xff] %vm990, %v974
        %992 = vst.msk [vmem:[#allocation3 + $0x8] sm:$0xff] %vm990, %v975
        %993 = vst.msk [vmem:[#allocation3 + $0x10] sm:$0xff] %vm990, %v976
        %994 = vst.msk [vmem:[#allocation3 + $0x18] sm:$0xff] %vm990, %v977
        %995 = vst.msk [vmem:[#allocation3 + $0x20] sm:$0xff] %vm990, %v978
        %996 = vst.msk [vmem:[#allocation3 + $0x28] sm:$0xff] %vm990, %v979
        %997 = vst.msk [vmem:[#allocation3 + $0x30] sm:$0xff] %vm990, %v980
        %998 = vst.msk [vmem:[#allocation3 + $0x38] sm:$0xff] %vm990, %v981
        %999 = vst.msk [vmem:[#allocation3 + $0x40] sm:$0xff] %vm990, %v982
        %1000 = vst.msk [vmem:[#allocation3 + $0x48] sm:$0xff] %vm990, %v983
        %1001 = vst.msk [vmem:[#allocation3 + $0x50] sm:$0xff] %vm990, %v984
        %1002 = vst.msk [vmem:[#allocation3 + $0x58] sm:$0xff] %vm990, %v985
        %1003 = vst.msk [vmem:[#allocation3 + $0x60] sm:$0xff] %vm990, %v986
        %1004 = vst.msk [vmem:[#allocation3 + $0x68] sm:$0xff] %vm990, %v987
        %1005 = vst.msk [vmem:[#allocation3 + $0x70] sm:$0xff] %vm990, %v988
        %1006 = vst.msk [vmem:[#allocation3 + $0x78] sm:$0xff] %vm990, %v989
        %1007 = vst.msk [vmem:[#allocation2] sm:$0xff] %vm990, %v718
        %1008 = vst.msk [vmem:[#allocation2 + $0x8] sm:$0xff] %vm990, %v719
        %1009 = vst.msk [vmem:[#allocation2 + $0x10] sm:$0xff] %vm990, %v720
        %1010 = vst.msk [vmem:[#allocation2 + $0x18] sm:$0xff] %vm990, %v721
        %1011 = vst.msk [vmem:[#allocation2 + $0x20] sm:$0xff] %vm990, %v722
        %1012 = vst.msk [vmem:[#allocation2 + $0x28] sm:$0xff] %vm990, %v723
        %1013 = vst.msk [vmem:[#allocation2 + $0x30] sm:$0xff] %vm990, %v724
        %1014 = vst.msk [vmem:[#allocation2 + $0x38] sm:$0xff] %vm990, %v725
        %1015 = vst.msk [vmem:[#allocation2 + $0x40] sm:$0xff] %vm990, %v726
        %1016 = vst.msk [vmem:[#allocation2 + $0x48] sm:$0xff] %vm990, %v727
        %1017 = vst.msk [vmem:[#allocation2 + $0x50] sm:$0xff] %vm990, %v728
        %1018 = vst.msk [vmem:[#allocation2 + $0x58] sm:$0xff] %vm990, %v729
        %1019 = vst.msk [vmem:[#allocation2 + $0x60] sm:$0xff] %vm990, %v730
        %1020 = vst.msk [vmem:[#allocation2 + $0x68] sm:$0xff] %vm990, %v731
        %1021 = vst.msk [vmem:[#allocation2 + $0x70] sm:$0xff] %vm990, %v732
        %1022 = vst.msk [vmem:[#allocation2 + $0x78] sm:$0xff] %vm990, %v733
        %v1023 = vld [vmem:[%s315] sm:$0xf]
        %v1024 = vld [vmem:[%s315 + $0x4] sm:$0xf]
        %v1025 = vld [vmem:[%s315 + $0x8] sm:$0xf]
        %v1026 = vld [vmem:[%s315 + $0xc] sm:$0xf]
        %v1027 = vld [vmem:[%s315 + $0x10] sm:$0xf]
        %v1028 = vld [vmem:[%s315 + $0x14] sm:$0xf]
        %v1029 = vld [vmem:[%s315 + $0x18] sm:$0xf]
        %v1030 = vld [vmem:[%s315 + $0x1c] sm:$0xf]
        %v1031 = vld [vmem:[%s315 + $0x20] sm:$0xf]
        %v1032 = vld [vmem:[%s315 + $0x24] sm:$0xf]
        %v1033 = vld [vmem:[%s315 + $0x28] sm:$0xf]
        %v1034 = vld [vmem:[%s315 + $0x2c] sm:$0xf]
        %v1035 = vld [vmem:[%s315 + $0x30] sm:$0xf]
        %v1036 = vld [vmem:[%s315 + $0x34] sm:$0xf]
        %v1037 = vld [vmem:[%s315 + $0x38] sm:$0xf]
        %v1038 = vld [vmem:[%s315 + $0x3c] sm:$0xf]
        %v1039 = vpack.c.bf16 %v881, %v879
        %v1040 = vpack.c.bf16 %v885, %v883
        %v1041 = vpack.c.bf16 %v889, %v887
        %v1042 = vpack.c.bf16 %v893, %v891
        %v1043 = vpack.c.bf16 %v897, %v895
        %v1044 = vpack.c.bf16 %v901, %v899
        %v1045 = vpack.c.bf16 %v905, %v903
        %v1046 = vpack.c.bf16 %v909, %v907
        %v1063 = vunpack.c.l.b16 %v1023
        %v1064 = vunpack.c.l.b16 %v1024
        %v1065 = vunpack.c.l.b16 %v1025
        %v1066 = vunpack.c.l.b16 %v1026
        %v1067 = vunpack.c.l.b16 %v1027
        %v1068 = vunpack.c.l.b16 %v1028
        %v1069 = vunpack.c.l.b16 %v1029
        %v1070 = vunpack.c.l.b16 %v1030
        %v1071 = vunpack.c.l.b16 %v1031
        %v1072 = vunpack.c.l.b16 %v1032
        %v1073 = vunpack.c.l.b16 %v1033
        %v1074 = vunpack.c.l.b16 %v1034
        %v1075 = vunpack.c.l.b16 %v1035
        %v1076 = vunpack.c.l.b16 %v1036
        %v1077 = vunpack.c.l.b16 %v1037
        %v1078 = vunpack.c.l.b16 %v1038
        %v1079 = vpack.c.b16 %v1064, %v1063
        %v1080 = vpack.c.b16 %v1066, %v1065
        %v1081 = vpack.c.b16 %v1068, %v1067
        %v1082 = vpack.c.b16 %v1070, %v1069
        %v1083 = vpack.c.b16 %v1072, %v1071
        %v1084 = vpack.c.b16 %v1074, %v1073
        %v1085 = vpack.c.b16 %v1076, %v1075
        %v1086 = vpack.c.b16 %v1078, %v1077
        %1095 = vmatprep.subr.bf16.mxu0 0
        %1096 = vmatpush1.bf16.msra.mxu0 %v1079
        %1097 = vmatprep.subr.bf16.mxu0 0
        %1098 = vmatpush1.bf16.msra.mxu0 %v1080
        %1099 = vmatprep.subr.bf16.mxu0 0
        %1100 = vmatpush1.bf16.msra.mxu0 %v1081
        %1101 = vmatprep.subr.bf16.mxu0 0
        %1102 = vmatpush1.bf16.msra.mxu0 %v1082
        %1103 = vmatprep.subr.bf16.mxu0 0
        %1104 = vmatpush1.bf16.msra.mxu0 %v1083
        %1105 = vmatprep.subr.bf16.mxu0 0
        %1106 = vmatpush1.bf16.msra.mxu0 %v1084
        %1107 = vmatprep.subr.bf16.mxu0 0
        %1108 = vmatpush1.bf16.msra.mxu0 %v1085
        %1109 = vmatprep.subr.bf16.mxu0 0
        %1110 = vmatpush1.bf16.msra.mxu0 %v1086
        %1111 = vmatprep.subr.bf16.mxu0 0
        %1112 = vmatpush1.bf16.msra.mxu0 0
        %1113 = vmatprep.subr.bf16.mxu0 0
        %1114 = vmatpush1.bf16.msra.mxu0 0
        %1115 = vmatprep.subr.bf16.mxu0 0
        %1116 = vmatpush1.bf16.msra.mxu0 0
        %1117 = vmatprep.subr.bf16.mxu0 0
        %1118 = vmatpush1.bf16.msra.mxu0 0
        %1119 = vmatprep.subr.bf16.mxu0 0
        %1120 = vmatpush1.bf16.msra.mxu0 0
        %1121 = vmatprep.subr.bf16.mxu0 0
        %1122 = vmatpush1.bf16.msra.mxu0 0
        %1123 = vmatprep.subr.bf16.mxu0 0
        %1124 = vmatpush1.bf16.msra.mxu0 0
        %1125 = vmatprep.subr.bf16.mxu0 0
        %1126 = vmatpush1.bf16.msra.mxu0 0
        %1127 = vmatprep.mubr.bf16.mxu0 0
        %1128 = vmatmul.mubr.bf16.gmra.mrb[0].mxu0 %v1039
        %v1129 = vpop.f32.mrb[0].mxu0
        %v1130 = vadd.f32 0.0, %v1129
        %v1131 = vpop.f32.mrb[0].mxu0
        %v1132 = vpop.f32.mrb[0].mxu0
        %v1133 = vadd.f32 0.0, %v1132
        %v1134 = vpop.f32.mrb[0].mxu0
        %1135 = vmatprep.mubr.bf16.mxu0 0
        %1136 = vmatmul.mubr.bf16.gmra.mrb[0].mxu0 %v1040
        %v1137 = vpop.f32.mrb[0].mxu0
        %v1138 = vadd.f32 0.0, %v1137
        %v1139 = vpop.f32.mrb[0].mxu0
        %v1140 = vpop.f32.mrb[0].mxu0
        %v1141 = vadd.f32 0.0, %v1140
        %v1142 = vpop.f32.mrb[0].mxu0
        %1143 = vmatprep.mubr.bf16.mxu0 0
        %1144 = vmatmul.mubr.bf16.gmra.mrb[0].mxu0 %v1041
        %v1145 = vpop.f32.mrb[0].mxu0
        %v1146 = vadd.f32 0.0, %v1145
        %v1147 = vpop.f32.mrb[0].mxu0
        %v1148 = vpop.f32.mrb[0].mxu0
        %v1149 = vadd.f32 0.0, %v1148
        %v1150 = vpop.f32.mrb[0].mxu0
        %1151 = vmatprep.mubr.bf16.mxu0 0
        %1152 = vmatmul.mubr.bf16.gmra.mrb[0].mxu0 %v1042
        %v1153 = vpop.f32.mrb[0].mxu0
        %v1154 = vadd.f32 0.0, %v1153
        %v1155 = vpop.f32.mrb[0].mxu0
        %v1156 = vpop.f32.mrb[0].mxu0
        %v1157 = vadd.f32 0.0, %v1156
        %v1158 = vpop.f32.mrb[0].mxu0
        %1159 = vmatprep.mubr.bf16.mxu0 0
        %1160 = vmatmul.mubr.bf16.gmra.mrb[0].mxu0 %v1043
        %v1161 = vpop.f32.mrb[0].mxu0
        %v1162 = vadd.f32 0.0, %v1161
        %v1163 = vpop.f32.mrb[0].mxu0
        %v1164 = vpop.f32.mrb[0].mxu0
        %v1165 = vadd.f32 0.0, %v1164
        %v1166 = vpop.f32.mrb[0].mxu0
        %1167 = vmatprep.mubr.bf16.mxu0 0
        %1168 = vmatmul.mubr.bf16.gmra.mrb[0].mxu0 %v1044
        %v1169 = vpop.f32.mrb[0].mxu0
        %v1170 = vadd.f32 0.0, %v1169
        %v1171 = vpop.f32.mrb[0].mxu0
        %v1172 = vpop.f32.mrb[0].mxu0
        %v1173 = vadd.f32 0.0, %v1172
        %v1174 = vpop.f32.mrb[0].mxu0
        %1175 = vmatprep.mubr.bf16.mxu0 0
        %1176 = vmatmul.mubr.bf16.gmra.mrb[0].mxu0 %v1045
        %v1177 = vpop.f32.mrb[0].mxu0
        %v1178 = vadd.f32 0.0, %v1177
        %v1179 = vpop.f32.mrb[0].mxu0
        %v1180 = vpop.f32.mrb[0].mxu0
        %v1181 = vadd.f32 0.0, %v1180
        %v1182 = vpop.f32.mrb[0].mxu0
        %1183 = vmatprep.mubr.bf16.mxu0 0
        %1184 = vmatmul.mubr.bf16.gmra.mrb[0].mxu0 %v1046
        %v1185 = vpop.f32.mrb[0].mxu0
        %v1186 = vadd.f32 0.0, %v1185
        %v1187 = vpop.f32.mrb[0].mxu0
        %v1188 = vpop.f32.mrb[0].mxu0
        %v1189 = vadd.f32 0.0, %v1188
        %v1190 = vpop.f32.mrb[0].mxu0
        %1191 = vdwg.mxu0
        %v1192 = vld [vmem:[#allocation4] sm:$0xff]
        %v1193 = vld [vmem:[#allocation4 + $0x8] sm:$0xff]
        %v1194 = vld [vmem:[#allocation4 + $0x10] sm:$0xff]
        %v1195 = vld [vmem:[#allocation4 + $0x18] sm:$0xff]
        %v1196 = vld [vmem:[#allocation4 + $0x20] sm:$0xff]
        %v1197 = vld [vmem:[#allocation4 + $0x28] sm:$0xff]
        %v1198 = vld [vmem:[#allocation4 + $0x30] sm:$0xff]
        %v1199 = vld [vmem:[#allocation4 + $0x38] sm:$0xff]
        %v1200 = vld [vmem:[#allocation4 + $0x40] sm:$0xff]
        %v1201 = vld [vmem:[#allocation4 + $0x48] sm:$0xff]
        %v1202 = vld [vmem:[#allocation4 + $0x50] sm:$0xff]
        %v1203 = vld [vmem:[#allocation4 + $0x58] sm:$0xff]
        %v1204 = vld [vmem:[#allocation4 + $0x60] sm:$0xff]
        %v1205 = vld [vmem:[#allocation4 + $0x68] sm:$0xff]
        %v1206 = vld [vmem:[#allocation4 + $0x70] sm:$0xff]
        %v1207 = vld [vmem:[#allocation4 + $0x78] sm:$0xff]
        %1209 = vset.pattern.permute.xlu0 0
        %1210 = vperm.xlu0 %1209, %v751
        %v1211 = vpop.permute.xlu0 %1210
        %1214 = vset.pattern.permute.xlu0 0
        %1215 = vperm.xlu0 %1214, %v753
        %v1216 = vpop.permute.xlu0 %1215
        %1219 = vset.pattern.permute.xlu0 0
        %1220 = vperm.xlu0 %1219, %v755
        %v1221 = vpop.permute.xlu0 %1220
        %1224 = vset.pattern.permute.xlu0 0
        %1225 = vperm.xlu0 %1224, %v757
        %v1226 = vpop.permute.xlu0 %1225
        %1229 = vset.pattern.permute.xlu0 0
        %1230 = vperm.xlu0 %1229, %v759
        %v1231 = vpop.permute.xlu0 %1230
        %1234 = vset.pattern.permute.xlu0 0
        %1235 = vperm.xlu0 %1234, %v761
        %v1236 = vpop.permute.xlu0 %1235
        %1239 = vset.pattern.permute.xlu0 0
        %1240 = vperm.xlu0 %1239, %v763
        %v1241 = vpop.permute.xlu0 %1240
        %1244 = vset.pattern.permute.xlu0 0
        %1245 = vperm.xlu0 %1244, %v765
        %v1246 = vpop.permute.xlu0 %1245
        %1249 = vset.pattern.permute.xlu0 0
        %1250 = vperm.xlu0 %1249, %v767
        %v1251 = vpop.permute.xlu0 %1250
        %1254 = vset.pattern.permute.xlu0 0
        %1255 = vperm.xlu0 %1254, %v769
        %v1256 = vpop.permute.xlu0 %1255
        %1259 = vset.pattern.permute.xlu0 0
        %1260 = vperm.xlu0 %1259, %v771
        %v1261 = vpop.permute.xlu0 %1260
        %1264 = vset.pattern.permute.xlu0 0
        %1265 = vperm.xlu0 %1264, %v773
        %v1266 = vpop.permute.xlu0 %1265
        %1269 = vset.pattern.permute.xlu0 0
        %1270 = vperm.xlu0 %1269, %v775
        %v1271 = vpop.permute.xlu0 %1270
        %1274 = vset.pattern.permute.xlu0 0
        %1275 = vperm.xlu0 %1274, %v777
        %v1276 = vpop.permute.xlu0 %1275
        %1279 = vset.pattern.permute.xlu0 0
        %1280 = vperm.xlu0 %1279, %v779
        %v1281 = vpop.permute.xlu0 %1280
        %1284 = vset.pattern.permute.xlu0 0
        %1285 = vperm.xlu0 %1284, %v781
        %v1286 = vpop.permute.xlu0 %1285
        %v1288 = vmul.f32 %v1211, %v1192
        %v1289 = vmul.f32 %v1216, %v1193
        %v1290 = vmul.f32 %v1221, %v1194
        %v1291 = vmul.f32 %v1226, %v1195
        %v1292 = vmul.f32 %v1231, %v1196
        %v1293 = vmul.f32 %v1236, %v1197
        %v1294 = vmul.f32 %v1241, %v1198
        %v1295 = vmul.f32 %v1246, %v1199
        %v1296 = vmul.f32 %v1251, %v1200
        %v1297 = vmul.f32 %v1256, %v1201
        %v1298 = vmul.f32 %v1261, %v1202
        %v1299 = vmul.f32 %v1266, %v1203
        %v1300 = vmul.f32 %v1271, %v1204
        %v1301 = vmul.f32 %v1276, %v1205
        %v1302 = vmul.f32 %v1281, %v1206
        %v1303 = vmul.f32 %v1286, %v1207
        %v1304 = vadd.f32 %v1288, %v1130
        %v1305 = vadd.f32 %v1289, %v1133
        %v1306 = vadd.f32 %v1290, %v1138
        %v1307 = vadd.f32 %v1291, %v1141
        %v1308 = vadd.f32 %v1292, %v1146
        %v1309 = vadd.f32 %v1293, %v1149
        %v1310 = vadd.f32 %v1294, %v1154
        %v1311 = vadd.f32 %v1295, %v1157
        %v1312 = vadd.f32 %v1296, %v1162
        %v1313 = vadd.f32 %v1297, %v1165
        %v1314 = vadd.f32 %v1298, %v1170
        %v1315 = vadd.f32 %v1299, %v1173
        %v1316 = vadd.f32 %v1300, %v1178
        %v1317 = vadd.f32 %v1301, %v1181
        %v1318 = vadd.f32 %v1302, %v1186
        %v1319 = vadd.f32 %v1303, %v1189
        %vm1320 = vcmask 130048
        %1321 = vst.msk [vmem:[#allocation4] sm:$0xff] %vm1320, %v1304
        %1322 = vst.msk [vmem:[#allocation4 + $0x8] sm:$0xff] %vm1320, %v1305
        %1323 = vst.msk [vmem:[#allocation4 + $0x10] sm:$0xff] %vm1320, %v1306
        %1324 = vst.msk [vmem:[#allocation4 + $0x18] sm:$0xff] %vm1320, %v1307
        %1325 = vst.msk [vmem:[#allocation4 + $0x20] sm:$0xff] %vm1320, %v1308
        %1326 = vst.msk [vmem:[#allocation4 + $0x28] sm:$0xff] %vm1320, %v1309
        %1327 = vst.msk [vmem:[#allocation4 + $0x30] sm:$0xff] %vm1320, %v1310
        %1328 = vst.msk [vmem:[#allocation4 + $0x38] sm:$0xff] %vm1320, %v1311
        %1329 = vst.msk [vmem:[#allocation4 + $0x40] sm:$0xff] %vm1320, %v1312
        %1330 = vst.msk [vmem:[#allocation4 + $0x48] sm:$0xff] %vm1320, %v1313
        %1331 = vst.msk [vmem:[#allocation4 + $0x50] sm:$0xff] %vm1320, %v1314
        %1332 = vst.msk [vmem:[#allocation4 + $0x58] sm:$0xff] %vm1320, %v1315
        %1333 = vst.msk [vmem:[#allocation4 + $0x60] sm:$0xff] %vm1320, %v1316
        %1334 = vst.msk [vmem:[#allocation4 + $0x68] sm:$0xff] %vm1320, %v1317
        %1335 = vst.msk [vmem:[#allocation4 + $0x70] sm:$0xff] %vm1320, %v1318
        %1336 = vst.msk [vmem:[#allocation4 + $0x78] sm:$0xff] %vm1320, %v1319
        %v1337 = vld [vmem:[%s305] sm:$0xff]
        %v1338 = vld [vmem:[%s305 + $0x8] sm:$0xff]
        %v1339 = vld [vmem:[%s305 + $0x10] sm:$0xff]
        %v1340 = vld [vmem:[%s305 + $0x18] sm:$0xff]
        %v1341 = vld [vmem:[%s305 + $0x20] sm:$0xff]
        %v1342 = vld [vmem:[%s305 + $0x28] sm:$0xff]
        %v1343 = vld [vmem:[%s305 + $0x30] sm:$0xff]
        %v1344 = vld [vmem:[%s305 + $0x38] sm:$0xff]
        %v1345 = vld [vmem:[%s305 + $0x40] sm:$0xff]
        %v1346 = vld [vmem:[%s305 + $0x48] sm:$0xff]
        %v1347 = vld [vmem:[%s305 + $0x50] sm:$0xff]
        %v1348 = vld [vmem:[%s305 + $0x58] sm:$0xff]
        %v1349 = vld [vmem:[%s305 + $0x60] sm:$0xff]
        %v1350 = vld [vmem:[%s305 + $0x68] sm:$0xff]
        %v1351 = vld [vmem:[%s305 + $0x70] sm:$0xff]
        %v1352 = vld [vmem:[%s305 + $0x78] sm:$0xff]
        %v1353 = vld [vmem:[%s310 + $0x1] sm:$0x1]
        %1355 = vset.pattern.permute.xlu0 1
        %1356 = vperm.xlu0 %1355, %v1337
        %v1357 = vpop.permute.xlu0 %1356
        %1360 = vset.pattern.permute.xlu0 1
        %1361 = vperm.xlu0 %1360, %v1338
        %v1362 = vpop.permute.xlu0 %1361
        %1365 = vset.pattern.permute.xlu0 1
        %1366 = vperm.xlu0 %1365, %v1339
        %v1367 = vpop.permute.xlu0 %1366
        %1370 = vset.pattern.permute.xlu0 1
        %1371 = vperm.xlu0 %1370, %v1340
        %v1372 = vpop.permute.xlu0 %1371
        %1375 = vset.pattern.permute.xlu0 1
        %1376 = vperm.xlu0 %1375, %v1341
        %v1377 = vpop.permute.xlu0 %1376
        %1380 = vset.pattern.permute.xlu0 1
        %1381 = vperm.xlu0 %1380, %v1342
        %v1382 = vpop.permute.xlu0 %1381
        %1385 = vset.pattern.permute.xlu0 1
        %1386 = vperm.xlu0 %1385, %v1343
        %v1387 = vpop.permute.xlu0 %1386
        %1390 = vset.pattern.permute.xlu0 1
        %1391 = vperm.xlu0 %1390, %v1344
        %v1392 = vpop.permute.xlu0 %1391
        %1395 = vset.pattern.permute.xlu0 1
        %1396 = vperm.xlu0 %1395, %v1345
        %v1397 = vpop.permute.xlu0 %1396
        %1400 = vset.pattern.permute.xlu0 1
        %1401 = vperm.xlu0 %1400, %v1346
        %v1402 = vpop.permute.xlu0 %1401
        %1405 = vset.pattern.permute.xlu0 1
        %1406 = vperm.xlu0 %1405, %v1347
        %v1407 = vpop.permute.xlu0 %1406
        %1410 = vset.pattern.permute.xlu0 1
        %1411 = vperm.xlu0 %1410, %v1348
        %v1412 = vpop.permute.xlu0 %1411
        %1415 = vset.pattern.permute.xlu0 1
        %1416 = vperm.xlu0 %1415, %v1349
        %v1417 = vpop.permute.xlu0 %1416
        %1420 = vset.pattern.permute.xlu0 1
        %1421 = vperm.xlu0 %1420, %v1350
        %v1422 = vpop.permute.xlu0 %1421
        %1425 = vset.pattern.permute.xlu0 1
        %1426 = vperm.xlu0 %1425, %v1351
        %v1427 = vpop.permute.xlu0 %1426
        %1430 = vset.pattern.permute.xlu0 1
        %1431 = vperm.xlu0 %1430, %v1352
        %v1432 = vpop.permute.xlu0 %1431
        %v1434 = vlaneseq
        %v1435 = vshrl.u32 %v1434, 7
        %v1436 = vsub.s32 0, %v1435
        %v1437 = vrot.slane %v1353, %v1436
        %v1438 = vadd.f32 %v1357, %v1437
        %v1439 = vadd.f32 %v1362, %v1437
        %v1440 = vadd.f32 %v1367, %v1437
        %v1441 = vadd.f32 %v1372, %v1437
        %v1442 = vadd.f32 %v1377, %v1437
        %v1443 = vadd.f32 %v1382, %v1437
        %v1444 = vadd.f32 %v1387, %v1437
        %v1445 = vadd.f32 %v1392, %v1437
        %v1446 = vadd.f32 %v1397, %v1437
        %v1447 = vadd.f32 %v1402, %v1437
        %v1448 = vadd.f32 %v1407, %v1437
        %v1449 = vadd.f32 %v1412, %v1437
        %v1450 = vadd.f32 %v1417, %v1437
        %v1451 = vadd.f32 %v1422, %v1437
        %v1452 = vadd.f32 %v1427, %v1437
        %v1453 = vadd.f32 %v1432, %v1437
        %v1454 = vmul.f32 %v1438, 0.2
        %v1455 = vmul.f32 %v1439, 0.2
        %v1456 = vmul.f32 %v1440, 0.2
        %v1457 = vmul.f32 %v1441, 0.2
        %v1458 = vmul.f32 %v1442, 0.2
        %v1459 = vmul.f32 %v1443, 0.2
        %v1460 = vmul.f32 %v1444, 0.2
        %v1461 = vmul.f32 %v1445, 0.2
        %v1462 = vmul.f32 %v1446, 0.2
        %v1463 = vmul.f32 %v1447, 0.2
        %v1464 = vmul.f32 %v1448, 0.2
        %v1465 = vmul.f32 %v1449, 0.2
        %v1466 = vmul.f32 %v1450, 0.2
        %v1467 = vmul.f32 %v1451, 0.2
        %v1468 = vmul.f32 %v1452, 0.2
        %v1469 = vmul.f32 %v1453, 0.2
        %v1470 = vmax.f32 %v1438, %v1454
        %v1471 = vmax.f32 %v1439, %v1455
        %v1472 = vmax.f32 %v1440, %v1456
        %v1473 = vmax.f32 %v1441, %v1457
        %v1474 = vmax.f32 %v1442, %v1458
        %v1475 = vmax.f32 %v1443, %v1459
        %v1476 = vmax.f32 %v1444, %v1460
        %v1477 = vmax.f32 %v1445, %v1461
        %v1478 = vmax.f32 %v1446, %v1462
        %v1479 = vmax.f32 %v1447, %v1463
        %v1480 = vmax.f32 %v1448, %v1464
        %v1481 = vmax.f32 %v1449, %v1465
        %v1482 = vmax.f32 %v1450, %v1466
        %v1483 = vmax.f32 %v1451, %v1467
        %v1484 = vmax.f32 %v1452, %v1468
        %v1485 = vmax.f32 %v1453, %v1469
        %v1486 = vsel %vm638, %v1470, -1e+30
        %v1487 = vsel %vm639, %v1471, -1e+30
        %v1488 = vsel %vm640, %v1472, -1e+30
        %v1489 = vsel %vm641, %v1473, -1e+30
        %v1490 = vsel %vm642, %v1474, -1e+30
        %v1491 = vsel %vm643, %v1475, -1e+30
        %v1492 = vsel %vm644, %v1476, -1e+30
        %v1493 = vsel %vm645, %v1477, -1e+30
        %v1494 = vsel %vm646, %v1478, -1e+30
        %v1495 = vsel %vm647, %v1479, -1e+30
        %v1496 = vsel %vm648, %v1480, -1e+30
        %v1497 = vsel %vm649, %v1481, -1e+30
        %v1498 = vsel %vm650, %v1482, -1e+30
        %v1499 = vsel %vm651, %v1483, -1e+30
        %v1500 = vsel %vm652, %v1484, -1e+30
        %v1501 = vsel %vm653, %v1485, -1e+30
        %v1502 = vld [vmem:[#allocation2] sm:$0xff]
        %v1503 = vld [vmem:[#allocation2 + $0x8] sm:$0xff]
        %v1504 = vld [vmem:[#allocation2 + $0x10] sm:$0xff]
        %v1505 = vld [vmem:[#allocation2 + $0x18] sm:$0xff]
        %v1506 = vld [vmem:[#allocation2 + $0x20] sm:$0xff]
        %v1507 = vld [vmem:[#allocation2 + $0x28] sm:$0xff]
        %v1508 = vld [vmem:[#allocation2 + $0x30] sm:$0xff]
        %v1509 = vld [vmem:[#allocation2 + $0x38] sm:$0xff]
        %v1510 = vld [vmem:[#allocation2 + $0x40] sm:$0xff]
        %v1511 = vld [vmem:[#allocation2 + $0x48] sm:$0xff]
        %v1512 = vld [vmem:[#allocation2 + $0x50] sm:$0xff]
        %v1513 = vld [vmem:[#allocation2 + $0x58] sm:$0xff]
        %v1514 = vld [vmem:[#allocation2 + $0x60] sm:$0xff]
        %v1515 = vld [vmem:[#allocation2 + $0x68] sm:$0xff]
        %v1516 = vld [vmem:[#allocation2 + $0x70] sm:$0xff]
        %v1517 = vld [vmem:[#allocation2 + $0x78] sm:$0xff]
        %1518 = vmax.xlane.f32.xlu0 %v1486
        %v1519 = vpop.xlane.xlu0 %1518
        %1520 = vmax.xlane.f32.xlu0 %v1487
        %v1521 = vpop.xlane.xlu0 %1520
        %1522 = vmax.xlane.f32.xlu0 %v1488
        %v1523 = vpop.xlane.xlu0 %1522
        %1524 = vmax.xlane.f32.xlu0 %v1489
        %v1525 = vpop.xlane.xlu0 %1524
        %1526 = vmax.xlane.f32.xlu0 %v1490
        %v1527 = vpop.xlane.xlu0 %1526
        %1528 = vmax.xlane.f32.xlu0 %v1491
        %v1529 = vpop.xlane.xlu0 %1528
        %1530 = vmax.xlane.f32.xlu0 %v1492
        %v1531 = vpop.xlane.xlu0 %1530
        %1532 = vmax.xlane.f32.xlu0 %v1493
        %v1533 = vpop.xlane.xlu0 %1532
        %1534 = vmax.xlane.f32.xlu0 %v1494
        %v1535 = vpop.xlane.xlu0 %1534
        %1536 = vmax.xlane.f32.xlu0 %v1495
        %v1537 = vpop.xlane.xlu0 %1536
        %1538 = vmax.xlane.f32.xlu0 %v1496
        %v1539 = vpop.xlane.xlu0 %1538
        %1540 = vmax.xlane.f32.xlu0 %v1497
        %v1541 = vpop.xlane.xlu0 %1540
        %1542 = vmax.xlane.f32.xlu0 %v1498
        %v1543 = vpop.xlane.xlu0 %1542
        %1544 = vmax.xlane.f32.xlu0 %v1499
        %v1545 = vpop.xlane.xlu0 %1544
        %1546 = vmax.xlane.f32.xlu0 %v1500
        %v1547 = vpop.xlane.xlu0 %1546
        %1548 = vmax.xlane.f32.xlu0 %v1501
        %v1549 = vpop.xlane.xlu0 %1548
        %v1550 = vmax.f32 %v1502, %v1519
        %v1551 = vmax.f32 %v1503, %v1521
        %v1552 = vmax.f32 %v1504, %v1523
        %v1553 = vmax.f32 %v1505, %v1525
        %v1554 = vmax.f32 %v1506, %v1527
        %v1555 = vmax.f32 %v1507, %v1529
        %v1556 = vmax.f32 %v1508, %v1531
        %v1557 = vmax.f32 %v1509, %v1533
        %v1558 = vmax.f32 %v1510, %v1535
        %v1559 = vmax.f32 %v1511, %v1537
        %v1560 = vmax.f32 %v1512, %v1539
        %v1561 = vmax.f32 %v1513, %v1541
        %v1562 = vmax.f32 %v1514, %v1543
        %v1563 = vmax.f32 %v1515, %v1545
        %v1564 = vmax.f32 %v1516, %v1547
        %v1565 = vmax.f32 %v1517, %v1549
        %v1566 = vsub.f32 %v1502, %v1550
        %v1567 = vsub.f32 %v1503, %v1551
        %v1568 = vsub.f32 %v1504, %v1552
        %v1569 = vsub.f32 %v1505, %v1553
        %v1570 = vsub.f32 %v1506, %v1554
        %v1571 = vsub.f32 %v1507, %v1555
        %v1572 = vsub.f32 %v1508, %v1556
        %v1573 = vsub.f32 %v1509, %v1557
        %v1574 = vsub.f32 %v1510, %v1558
        %v1575 = vsub.f32 %v1511, %v1559
        %v1576 = vsub.f32 %v1512, %v1560
        %v1577 = vsub.f32 %v1513, %v1561
        %v1578 = vsub.f32 %v1514, %v1562
        %v1579 = vsub.f32 %v1515, %v1563
        %v1580 = vsub.f32 %v1516, %v1564
        %v1581 = vsub.f32 %v1517, %v1565
        %v1582 = vmul.f32 %v1566, 1.442695
        %v1583 = vpow.pop %v1582
        %v1584 = vmul.f32 %v1567, 1.442695
        %v1585 = vpow.pop %v1584
        %v1586 = vmul.f32 %v1568, 1.442695
        %v1587 = vpow.pop %v1586
        %v1588 = vmul.f32 %v1569, 1.442695
        %v1589 = vpow.pop %v1588
        %v1590 = vmul.f32 %v1570, 1.442695
        %v1591 = vpow.pop %v1590
        %v1592 = vmul.f32 %v1571, 1.442695
        %v1593 = vpow.pop %v1592
        %v1594 = vmul.f32 %v1572, 1.442695
        %v1595 = vpow.pop %v1594
        %v1596 = vmul.f32 %v1573, 1.442695
        %v1597 = vpow.pop %v1596
        %v1598 = vmul.f32 %v1574, 1.442695
        %v1599 = vpow.pop %v1598
        %v1600 = vmul.f32 %v1575, 1.442695
        %v1601 = vpow.pop %v1600
        %v1602 = vmul.f32 %v1576, 1.442695
        %v1603 = vpow.pop %v1602
        %v1604 = vmul.f32 %v1577, 1.442695
        %v1605 = vpow.pop %v1604
        %v1606 = vmul.f32 %v1578, 1.442695
        %v1607 = vpow.pop %v1606
        %v1608 = vmul.f32 %v1579, 1.442695
        %v1609 = vpow.pop %v1608
        %v1610 = vmul.f32 %v1580, 1.442695
        %v1611 = vpow.pop %v1610
        %v1612 = vmul.f32 %v1581, 1.442695
        %v1613 = vpow.pop %v1612
        %1615 = vset.pattern.permute.xlu0 1
        %1616 = vperm.xlu0 %1615, %v1550
        %v1617 = vpop.permute.xlu0 %1616
        %1620 = vset.pattern.permute.xlu0 1
        %1621 = vperm.xlu0 %1620, %v1551
        %v1622 = vpop.permute.xlu0 %1621
        %1625 = vset.pattern.permute.xlu0 1
        %1626 = vperm.xlu0 %1625, %v1552
        %v1627 = vpop.permute.xlu0 %1626
        %1630 = vset.pattern.permute.xlu0 1
        %1631 = vperm.xlu0 %1630, %v1553
        %v1632 = vpop.permute.xlu0 %1631
        %1635 = vset.pattern.permute.xlu0 1
        %1636 = vperm.xlu0 %1635, %v1554
        %v1637 = vpop.permute.xlu0 %1636
        %1640 = vset.pattern.permute.xlu0 1
        %1641 = vperm.xlu0 %1640, %v1555
        %v1642 = vpop.permute.xlu0 %1641
        %1645 = vset.pattern.permute.xlu0 1
        %1646 = vperm.xlu0 %1645, %v1556
        %v1647 = vpop.permute.xlu0 %1646
        %1650 = vset.pattern.permute.xlu0 1
        %1651 = vperm.xlu0 %1650, %v1557
        %v1652 = vpop.permute.xlu0 %1651
        %1655 = vset.pattern.permute.xlu0 1
        %1656 = vperm.xlu0 %1655, %v1558
        %v1657 = vpop.permute.xlu0 %1656
        %1660 = vset.pattern.permute.xlu0 1
        %1661 = vperm.xlu0 %1660, %v1559
        %v1662 = vpop.permute.xlu0 %1661
        %1665 = vset.pattern.permute.xlu0 1
        %1666 = vperm.xlu0 %1665, %v1560
        %v1667 = vpop.permute.xlu0 %1666
        %1670 = vset.pattern.permute.xlu0 1
        %1671 = vperm.xlu0 %1670, %v1561
        %v1672 = vpop.permute.xlu0 %1671
        %1675 = vset.pattern.permute.xlu0 1
        %1676 = vperm.xlu0 %1675, %v1562
        %v1677 = vpop.permute.xlu0 %1676
        %1680 = vset.pattern.permute.xlu0 1
        %1681 = vperm.xlu0 %1680, %v1563
        %v1682 = vpop.permute.xlu0 %1681
        %1685 = vset.pattern.permute.xlu0 1
        %1686 = vperm.xlu0 %1685, %v1564
        %v1687 = vpop.permute.xlu0 %1686
        %1690 = vset.pattern.permute.xlu0 1
        %1691 = vperm.xlu0 %1690, %v1565
        %v1692 = vpop.permute.xlu0 %1691
        %v1694 = vsub.f32 %v1486, %v1617
        %v1695 = vsub.f32 %v1487, %v1622
        %v1696 = vsub.f32 %v1488, %v1627
        %v1697 = vsub.f32 %v1489, %v1632
        %v1698 = vsub.f32 %v1490, %v1637
        %v1699 = vsub.f32 %v1491, %v1642
        %v1700 = vsub.f32 %v1492, %v1647
        %v1701 = vsub.f32 %v1493, %v1652
        %v1702 = vsub.f32 %v1494, %v1657
        %v1703 = vsub.f32 %v1495, %v1662
        %v1704 = vsub.f32 %v1496, %v1667
        %v1705 = vsub.f32 %v1497, %v1672
        %v1706 = vsub.f32 %v1498, %v1677
        %v1707 = vsub.f32 %v1499, %v1682
        %v1708 = vsub.f32 %v1500, %v1687
        %v1709 = vsub.f32 %v1501, %v1692
        %v1710 = vmul.f32 %v1694, 1.442695
        %v1711 = vpow.pop %v1710
        %v1712 = vmul.f32 %v1695, 1.442695
        %v1713 = vpow.pop %v1712
        %v1714 = vmul.f32 %v1696, 1.442695
        %v1715 = vpow.pop %v1714
        %v1716 = vmul.f32 %v1697, 1.442695
        %v1717 = vpow.pop %v1716
        %v1718 = vmul.f32 %v1698, 1.442695
        %v1719 = vpow.pop %v1718
        %v1720 = vmul.f32 %v1699, 1.442695
        %v1721 = vpow.pop %v1720
        %v1722 = vmul.f32 %v1700, 1.442695
        %v1723 = vpow.pop %v1722
        %v1724 = vmul.f32 %v1701, 1.442695
        %v1725 = vpow.pop %v1724
        %v1726 = vmul.f32 %v1702, 1.442695
        %v1727 = vpow.pop %v1726
        %v1728 = vmul.f32 %v1703, 1.442695
        %v1729 = vpow.pop %v1728
        %v1730 = vmul.f32 %v1704, 1.442695
        %v1731 = vpow.pop %v1730
        %v1732 = vmul.f32 %v1705, 1.442695
        %v1733 = vpow.pop %v1732
        %v1734 = vmul.f32 %v1706, 1.442695
        %v1735 = vpow.pop %v1734
        %v1736 = vmul.f32 %v1707, 1.442695
        %v1737 = vpow.pop %v1736
        %v1738 = vmul.f32 %v1708, 1.442695
        %v1739 = vpow.pop %v1738
        %v1740 = vmul.f32 %v1709, 1.442695
        %v1741 = vpow.pop %v1740
        %v1742 = vld [vmem:[#allocation3] sm:$0xff]
        %v1743 = vld [vmem:[#allocation3 + $0x8] sm:$0xff]
        %v1744 = vld [vmem:[#allocation3 + $0x10] sm:$0xff]
        %v1745 = vld [vmem:[#allocation3 + $0x18] sm:$0xff]
        %v1746 = vld [vmem:[#allocation3 + $0x20] sm:$0xff]
        %v1747 = vld [vmem:[#allocation3 + $0x28] sm:$0xff]
        %v1748 = vld [vmem:[#allocation3 + $0x30] sm:$0xff]
        %v1749 = vld [vmem:[#allocation3 + $0x38] sm:$0xff]
        %v1750 = vld [vmem:[#allocation3 + $0x40] sm:$0xff]
        %v1751 = vld [vmem:[#allocation3 + $0x48] sm:$0xff]
        %v1752 = vld [vmem:[#allocation3 + $0x50] sm:$0xff]
        %v1753 = vld [vmem:[#allocation3 + $0x58] sm:$0xff]
        %v1754 = vld [vmem:[#allocation3 + $0x60] sm:$0xff]
        %v1755 = vld [vmem:[#allocation3 + $0x68] sm:$0xff]
        %v1756 = vld [vmem:[#allocation3 + $0x70] sm:$0xff]
        %v1757 = vld [vmem:[#allocation3 + $0x78] sm:$0xff]
        %v1758 = vmul.f32 %v1583, %v1742
        %v1759 = vmul.f32 %v1585, %v1743
        %v1760 = vmul.f32 %v1587, %v1744
        %v1761 = vmul.f32 %v1589, %v1745
        %v1762 = vmul.f32 %v1591, %v1746
        %v1763 = vmul.f32 %v1593, %v1747
        %v1764 = vmul.f32 %v1595, %v1748
        %v1765 = vmul.f32 %v1597, %v1749
        %v1766 = vmul.f32 %v1599, %v1750
        %v1767 = vmul.f32 %v1601, %v1751
        %v1768 = vmul.f32 %v1603, %v1752
        %v1769 = vmul.f32 %v1605, %v1753
        %v1770 = vmul.f32 %v1607, %v1754
        %v1771 = vmul.f32 %v1609, %v1755
        %v1772 = vmul.f32 %v1611, %v1756
        %v1773 = vmul.f32 %v1613, %v1757
        %1774 = vadd.xlane.f32.xlu0 %v1711
        %v1775 = vpop.xlane.xlu0 %1774
        %1776 = vadd.xlane.f32.xlu0 %v1713
        %v1777 = vpop.xlane.xlu0 %1776
        %1778 = vadd.xlane.f32.xlu0 %v1715
        %v1779 = vpop.xlane.xlu0 %1778
        %1780 = vadd.xlane.f32.xlu0 %v1717
        %v1781 = vpop.xlane.xlu0 %1780
        %1782 = vadd.xlane.f32.xlu0 %v1719
        %v1783 = vpop.xlane.xlu0 %1782
        %1784 = vadd.xlane.f32.xlu0 %v1721
        %v1785 = vpop.xlane.xlu0 %1784
        %1786 = vadd.xlane.f32.xlu0 %v1723
        %v1787 = vpop.xlane.xlu0 %1786
        %1788 = vadd.xlane.f32.xlu0 %v1725
        %v1789 = vpop.xlane.xlu0 %1788
        %1790 = vadd.xlane.f32.xlu0 %v1727
        %v1791 = vpop.xlane.xlu0 %1790
        %1792 = vadd.xlane.f32.xlu0 %v1729
        %v1793 = vpop.xlane.xlu0 %1792
        %1794 = vadd.xlane.f32.xlu0 %v1731
        %v1795 = vpop.xlane.xlu0 %1794
        %1796 = vadd.xlane.f32.xlu0 %v1733
        %v1797 = vpop.xlane.xlu0 %1796
        %1798 = vadd.xlane.f32.xlu0 %v1735
        %v1799 = vpop.xlane.xlu0 %1798
        %1800 = vadd.xlane.f32.xlu0 %v1737
        %v1801 = vpop.xlane.xlu0 %1800
        %1802 = vadd.xlane.f32.xlu0 %v1739
        %v1803 = vpop.xlane.xlu0 %1802
        %1804 = vadd.xlane.f32.xlu0 %v1741
        %v1805 = vpop.xlane.xlu0 %1804
        %v1806 = vadd.f32 %v1758, %v1775
        %v1807 = vadd.f32 %v1759, %v1777
        %v1808 = vadd.f32 %v1760, %v1779
        %v1809 = vadd.f32 %v1761, %v1781
        %v1810 = vadd.f32 %v1762, %v1783
        %v1811 = vadd.f32 %v1763, %v1785
        %v1812 = vadd.f32 %v1764, %v1787
        %v1813 = vadd.f32 %v1765, %v1789
        %v1814 = vadd.f32 %v1766, %v1791
        %v1815 = vadd.f32 %v1767, %v1793
        %v1816 = vadd.f32 %v1768, %v1795
        %v1817 = vadd.f32 %v1769, %v1797
        %v1818 = vadd.f32 %v1770, %v1799
        %v1819 = vadd.f32 %v1771, %v1801
        %v1820 = vadd.f32 %v1772, %v1803
        %v1821 = vadd.f32 %v1773, %v1805
        %vm1822 = vcmask 15368
        %1823 = vst.msk [vmem:[#allocation3] sm:$0xff] %vm1822, %v1806
        %1824 = vst.msk [vmem:[#allocation3 + $0x8] sm:$0xff] %vm1822, %v1807
        %1825 = vst.msk [vmem:[#allocation3 + $0x10] sm:$0xff] %vm1822, %v1808
        %1826 = vst.msk [vmem:[#allocation3 + $0x18] sm:$0xff] %vm1822, %v1809
        %1827 = vst.msk [vmem:[#allocation3 + $0x20] sm:$0xff] %vm1822, %v1810
        %1828 = vst.msk [vmem:[#allocation3 + $0x28] sm:$0xff] %vm1822, %v1811
        %1829 = vst.msk [vmem:[#allocation3 + $0x30] sm:$0xff] %vm1822, %v1812
        %1830 = vst.msk [vmem:[#allocation3 + $0x38] sm:$0xff] %vm1822, %v1813
        %1831 = vst.msk [vmem:[#allocation3 + $0x40] sm:$0xff] %vm1822, %v1814
        %1832 = vst.msk [vmem:[#allocation3 + $0x48] sm:$0xff] %vm1822, %v1815
        %1833 = vst.msk [vmem:[#allocation3 + $0x50] sm:$0xff] %vm1822, %v1816
        %1834 = vst.msk [vmem:[#allocation3 + $0x58] sm:$0xff] %vm1822, %v1817
        %1835 = vst.msk [vmem:[#allocation3 + $0x60] sm:$0xff] %vm1822, %v1818
        %1836 = vst.msk [vmem:[#allocation3 + $0x68] sm:$0xff] %vm1822, %v1819
        %1837 = vst.msk [vmem:[#allocation3 + $0x70] sm:$0xff] %vm1822, %v1820
        %1838 = vst.msk [vmem:[#allocation3 + $0x78] sm:$0xff] %vm1822, %v1821
        %1839 = vst.msk [vmem:[#allocation2] sm:$0xff] %vm1822, %v1550
        %1840 = vst.msk [vmem:[#allocation2 + $0x8] sm:$0xff] %vm1822, %v1551
        %1841 = vst.msk [vmem:[#allocation2 + $0x10] sm:$0xff] %vm1822, %v1552
        %1842 = vst.msk [vmem:[#allocation2 + $0x18] sm:$0xff] %vm1822, %v1553
        %1843 = vst.msk [vmem:[#allocation2 + $0x20] sm:$0xff] %vm1822, %v1554
        %1844 = vst.msk [vmem:[#allocation2 + $0x28] sm:$0xff] %vm1822, %v1555
        %1845 = vst.msk [vmem:[#allocation2 + $0x30] sm:$0xff] %vm1822, %v1556
        %1846 = vst.msk [vmem:[#allocation2 + $0x38] sm:$0xff] %vm1822, %v1557
        %1847 = vst.msk [vmem:[#allocation2 + $0x40] sm:$0xff] %vm1822, %v1558
        %1848 = vst.msk [vmem:[#allocation2 + $0x48] sm:$0xff] %vm1822, %v1559
        %1849 = vst.msk [vmem:[#allocation2 + $0x50] sm:$0xff] %vm1822, %v1560
        %1850 = vst.msk [vmem:[#allocation2 + $0x58] sm:$0xff] %vm1822, %v1561
        %1851 = vst.msk [vmem:[#allocation2 + $0x60] sm:$0xff] %vm1822, %v1562
        %1852 = vst.msk [vmem:[#allocation2 + $0x68] sm:$0xff] %vm1822, %v1563
        %1853 = vst.msk [vmem:[#allocation2 + $0x70] sm:$0xff] %vm1822, %v1564
        %1854 = vst.msk [vmem:[#allocation2 + $0x78] sm:$0xff] %vm1822, %v1565
        %v1855 = vld [vmem:[%s315] sm:$0xf]
        %v1856 = vld [vmem:[%s315 + $0x4] sm:$0xf]
        %v1857 = vld [vmem:[%s315 + $0x8] sm:$0xf]
        %v1858 = vld [vmem:[%s315 + $0xc] sm:$0xf]
        %v1859 = vld [vmem:[%s315 + $0x10] sm:$0xf]
        %v1860 = vld [vmem:[%s315 + $0x14] sm:$0xf]
        %v1861 = vld [vmem:[%s315 + $0x18] sm:$0xf]
        %v1862 = vld [vmem:[%s315 + $0x1c] sm:$0xf]
        %v1863 = vld [vmem:[%s315 + $0x20] sm:$0xf]
        %v1864 = vld [vmem:[%s315 + $0x24] sm:$0xf]
        %v1865 = vld [vmem:[%s315 + $0x28] sm:$0xf]
        %v1866 = vld [vmem:[%s315 + $0x2c] sm:$0xf]
        %v1867 = vld [vmem:[%s315 + $0x30] sm:$0xf]
        %v1868 = vld [vmem:[%s315 + $0x34] sm:$0xf]
        %v1869 = vld [vmem:[%s315 + $0x38] sm:$0xf]
        %v1870 = vld [vmem:[%s315 + $0x3c] sm:$0xf]
        %v1871 = vpack.c.bf16 %v1713, %v1711
        %v1872 = vpack.c.bf16 %v1717, %v1715
        %v1873 = vpack.c.bf16 %v1721, %v1719
        %v1874 = vpack.c.bf16 %v1725, %v1723
        %v1875 = vpack.c.bf16 %v1729, %v1727
        %v1876 = vpack.c.bf16 %v1733, %v1731
        %v1877 = vpack.c.bf16 %v1737, %v1735
        %v1878 = vpack.c.bf16 %v1741, %v1739
        %v1895 = vunpack.c.l.b16 %v1855
        %v1896 = vunpack.c.l.b16 %v1856
        %v1897 = vunpack.c.l.b16 %v1857
        %v1898 = vunpack.c.l.b16 %v1858
        %v1899 = vunpack.c.l.b16 %v1859
        %v1900 = vunpack.c.l.b16 %v1860
        %v1901 = vunpack.c.l.b16 %v1861
        %v1902 = vunpack.c.l.b16 %v1862
        %v1903 = vunpack.c.l.b16 %v1863
        %v1904 = vunpack.c.l.b16 %v1864
        %v1905 = vunpack.c.l.b16 %v1865
        %v1906 = vunpack.c.l.b16 %v1866
        %v1907 = vunpack.c.l.b16 %v1867
        %v1908 = vunpack.c.l.b16 %v1868
        %v1909 = vunpack.c.l.b16 %v1869
        %v1910 = vunpack.c.l.b16 %v1870
        %v1911 = vpack.c.b16 %v1896, %v1895
        %v1912 = vpack.c.b16 %v1898, %v1897
        %v1913 = vpack.c.b16 %v1900, %v1899
        %v1914 = vpack.c.b16 %v1902, %v1901
        %v1915 = vpack.c.b16 %v1904, %v1903
        %v1916 = vpack.c.b16 %v1906, %v1905
        %v1917 = vpack.c.b16 %v1908, %v1907
        %v1918 = vpack.c.b16 %v1910, %v1909
        %1919 = vrot.lane.b32.xlu0 %v1911, 112
        %v1920 = vpop.permute.xlu0 %1919
        %1921 = vrot.lane.b32.xlu0 %v1912, 112
        %v1922 = vpop.permute.xlu0 %1921
        %1923 = vrot.lane.b32.xlu0 %v1913, 112
        %v1924 = vpop.permute.xlu0 %1923
        %1925 = vrot.lane.b32.xlu0 %v1914, 112
        %v1926 = vpop.permute.xlu0 %1925
        %1927 = vrot.lane.b32.xlu0 %v1915, 112
        %v1928 = vpop.permute.xlu0 %1927
        %1929 = vrot.lane.b32.xlu0 %v1916, 112
        %v1930 = vpop.permute.xlu0 %1929
        %1931 = vrot.lane.b32.xlu0 %v1917, 112
        %v1932 = vpop.permute.xlu0 %1931
        %1933 = vrot.lane.b32.xlu0 %v1918, 112
        %v1934 = vpop.permute.xlu0 %1933
        %1943 = vmatprep.subr.bf16.mxu0 0
        %1944 = vmatpush1.bf16.msra.mxu0 %v1920
        %1945 = vmatprep.subr.bf16.mxu0 0
        %1946 = vmatpush1.bf16.msra.mxu0 %v1922
        %1947 = vmatprep.subr.bf16.mxu0 0
        %1948 = vmatpush1.bf16.msra.mxu0 %v1924
        %1949 = vmatprep.subr.bf16.mxu0 0
        %1950 = vmatpush1.bf16.msra.mxu0 %v1926
        %1951 = vmatprep.subr.bf16.mxu0 0
        %1952 = vmatpush1.bf16.msra.mxu0 %v1928
        %1953 = vmatprep.subr.bf16.mxu0 0
        %1954 = vmatpush1.bf16.msra.mxu0 %v1930
        %1955 = vmatprep.subr.bf16.mxu0 0
        %1956 = vmatpush1.bf16.msra.mxu0 %v1932
        %1957 = vmatprep.subr.bf16.mxu0 0
        %1958 = vmatpush1.bf16.msra.mxu0 %v1934
        %1959 = vmatprep.subr.bf16.mxu0 0
        %1960 = vmatpush1.bf16.msra.mxu0 0
        %1961 = vmatprep.subr.bf16.mxu0 0
        %1962 = vmatpush1.bf16.msra.mxu0 0
        %1963 = vmatprep.subr.bf16.mxu0 0
        %1964 = vmatpush1.bf16.msra.mxu0 0
        %1965 = vmatprep.subr.bf16.mxu0 0
        %1966 = vmatpush1.bf16.msra.mxu0 0
        %1967 = vmatprep.subr.bf16.mxu0 0
        %1968 = vmatpush1.bf16.msra.mxu0 0
        %1969 = vmatprep.subr.bf16.mxu0 0
        %1970 = vmatpush1.bf16.msra.mxu0 0
        %1971 = vmatprep.subr.bf16.mxu0 0
        %1972 = vmatpush1.bf16.msra.mxu0 0
        %1973 = vmatprep.subr.bf16.mxu0 0
        %1974 = vmatpush1.bf16.msra.mxu0 0
        %1975 = vmatprep.mubr.bf16.mxu0 0
        %1976 = vmatmul.mubr.bf16.gmra.mrb[0].mxu0 %v1871
        %v1977 = vpop.f32.mrb[0].mxu0
        %v1978 = vadd.f32 0.0, %v1977
        %v1979 = vpop.f32.mrb[0].mxu0
        %v1980 = vpop.f32.mrb[0].mxu0
        %v1981 = vadd.f32 0.0, %v1980
        %v1982 = vpop.f32.mrb[0].mxu0
        %1983 = vmatprep.mubr.bf16.mxu0 0
        %1984 = vmatmul.mubr.bf16.gmra.mrb[0].mxu0 %v1872
        %v1985 = vpop.f32.mrb[0].mxu0
        %v1986 = vadd.f32 0.0, %v1985
        %v1987 = vpop.f32.mrb[0].mxu0
        %v1988 = vpop.f32.mrb[0].mxu0
        %v1989 = vadd.f32 0.0, %v1988
        %v1990 = vpop.f32.mrb[0].mxu0
        %1991 = vmatprep.mubr.bf16.mxu0 0
        %1992 = vmatmul.mubr.bf16.gmra.mrb[0].mxu0 %v1873
        %v1993 = vpop.f32.mrb[0].mxu0
        %v1994 = vadd.f32 0.0, %v1993
        %v1995 = vpop.f32.mrb[0].mxu0
        %v1996 = vpop.f32.mrb[0].mxu0
        %v1997 = vadd.f32 0.0, %v1996
        %v1998 = vpop.f32.mrb[0].mxu0
        %1999 = vmatprep.mubr.bf16.mxu0 0
        %2000 = vmatmul.mubr.bf16.gmra.mrb[0].mxu0 %v1874
        %v2001 = vpop.f32.mrb[0].mxu0
        %v2002 = vadd.f32 0.0, %v2001
        %v2003 = vpop.f32.mrb[0].mxu0
        %v2004 = vpop.f32.mrb[0].mxu0
        %v2005 = vadd.f32 0.0, %v2004
        %v2006 = vpop.f32.mrb[0].mxu0
        %2007 = vmatprep.mubr.bf16.mxu0 0
        %2008 = vmatmul.mubr.bf16.gmra.mrb[0].mxu0 %v1875
        %v2009 = vpop.f32.mrb[0].mxu0
        %v2010 = vadd.f32 0.0, %v2009
        %v2011 = vpop.f32.mrb[0].mxu0
        %v2012 = vpop.f32.mrb[0].mxu0
        %v2013 = vadd.f32 0.0, %v2012
        %v2014 = vpop.f32.mrb[0].mxu0
        %2015 = vmatprep.mubr.bf16.mxu0 0
        %2016 = vmatmul.mubr.bf16.gmra.mrb[0].mxu0 %v1876
        %v2017 = vpop.f32.mrb[0].mxu0
        %v2018 = vadd.f32 0.0, %v2017
        %v2019 = vpop.f32.mrb[0].mxu0
        %v2020 = vpop.f32.mrb[0].mxu0
        %v2021 = vadd.f32 0.0, %v2020
        %v2022 = vpop.f32.mrb[0].mxu0
        %2023 = vmatprep.mubr.bf16.mxu0 0
        %2024 = vmatmul.mubr.bf16.gmra.mrb[0].mxu0 %v1877
        %v2025 = vpop.f32.mrb[0].mxu0
        %v2026 = vadd.f32 0.0, %v2025
        %v2027 = vpop.f32.mrb[0].mxu0
        %v2028 = vpop.f32.mrb[0].mxu0
        %v2029 = vadd.f32 0.0, %v2028
        %v2030 = vpop.f32.mrb[0].mxu0
        %2031 = vmatprep.mubr.bf16.mxu0 0
        %2032 = vmatmul.mubr.bf16.gmra.mrb[0].mxu0 %v1878
        %v2033 = vpop.f32.mrb[0].mxu0
        %v2034 = vadd.f32 0.0, %v2033
        %v2035 = vpop.f32.mrb[0].mxu0
        %v2036 = vpop.f32.mrb[0].mxu0
        %v2037 = vadd.f32 0.0, %v2036
        %v2038 = vpop.f32.mrb[0].mxu0
        %2039 = vdwg.mxu0
        %v2040 = vld [vmem:[#allocation4] sm:$0xff]
        %v2041 = vld [vmem:[#allocation4 + $0x8] sm:$0xff]
        %v2042 = vld [vmem:[#allocation4 + $0x10] sm:$0xff]
        %v2043 = vld [vmem:[#allocation4 + $0x18] sm:$0xff]
        %v2044 = vld [vmem:[#allocation4 + $0x20] sm:$0xff]
        %v2045 = vld [vmem:[#allocation4 + $0x28] sm:$0xff]
        %v2046 = vld [vmem:[#allocation4 + $0x30] sm:$0xff]
        %v2047 = vld [vmem:[#allocation4 + $0x38] sm:$0xff]
        %v2048 = vld [vmem:[#allocation4 + $0x40] sm:$0xff]
        %v2049 = vld [vmem:[#allocation4 + $0x48] sm:$0xff]
        %v2050 = vld [vmem:[#allocation4 + $0x50] sm:$0xff]
        %v2051 = vld [vmem:[#allocation4 + $0x58] sm:$0xff]
        %v2052 = vld [vmem:[#allocation4 + $0x60] sm:$0xff]
        %v2053 = vld [vmem:[#allocation4 + $0x68] sm:$0xff]
        %v2054 = vld [vmem:[#allocation4 + $0x70] sm:$0xff]
        %v2055 = vld [vmem:[#allocation4 + $0x78] sm:$0xff]
        %2057 = vset.pattern.permute.xlu0 1
        %2058 = vperm.xlu0 %2057, %v1583
        %v2059 = vpop.permute.xlu0 %2058
        %2062 = vset.pattern.permute.xlu0 1
        %2063 = vperm.xlu0 %2062, %v1585
        %v2064 = vpop.permute.xlu0 %2063
        %2067 = vset.pattern.permute.xlu0 1
        %2068 = vperm.xlu0 %2067, %v1587
        %v2069 = vpop.permute.xlu0 %2068
        %2072 = vset.pattern.permute.xlu0 1
        %2073 = vperm.xlu0 %2072, %v1589
        %v2074 = vpop.permute.xlu0 %2073
        %2077 = vset.pattern.permute.xlu0 1
        %2078 = vperm.xlu0 %2077, %v1591
        %v2079 = vpop.permute.xlu0 %2078
        %2082 = vset.pattern.permute.xlu0 1
        %2083 = vperm.xlu0 %2082, %v1593
        %v2084 = vpop.permute.xlu0 %2083
        %2087 = vset.pattern.permute.xlu0 1
        %2088 = vperm.xlu0 %2087, %v1595
        %v2089 = vpop.permute.xlu0 %2088
        %2092 = vset.pattern.permute.xlu0 1
        %2093 = vperm.xlu0 %2092, %v1597
        %v2094 = vpop.permute.xlu0 %2093
        %2097 = vset.pattern.permute.xlu0 1
        %2098 = vperm.xlu0 %2097, %v1599
        %v2099 = vpop.permute.xlu0 %2098
        %2102 = vset.pattern.permute.xlu0 1
        %2103 = vperm.xlu0 %2102, %v1601
        %v2104 = vpop.permute.xlu0 %2103
        %2107 = vset.pattern.permute.xlu0 1
        %2108 = vperm.xlu0 %2107, %v1603
        %v2109 = vpop.permute.xlu0 %2108
        %2112 = vset.pattern.permute.xlu0 1
        %2113 = vperm.xlu0 %2112, %v1605
        %v2114 = vpop.permute.xlu0 %2113
        %2117 = vset.pattern.permute.xlu0 1
        %2118 = vperm.xlu0 %2117, %v1607
        %v2119 = vpop.permute.xlu0 %2118
        %2122 = vset.pattern.permute.xlu0 1
        %2123 = vperm.xlu0 %2122, %v1609
        %v2124 = vpop.permute.xlu0 %2123
        %2127 = vset.pattern.permute.xlu0 1
        %2128 = vperm.xlu0 %2127, %v1611
        %v2129 = vpop.permute.xlu0 %2128
        %2132 = vset.pattern.permute.xlu0 1
        %2133 = vperm.xlu0 %2132, %v1613
        %v2134 = vpop.permute.xlu0 %2133
        %v2136 = vmul.f32 %v2059, %v2040
        %v2137 = vmul.f32 %v2064, %v2041
        %v2138 = vmul.f32 %v2069, %v2042
        %v2139 = vmul.f32 %v2074, %v2043
        %v2140 = vmul.f32 %v2079, %v2044
        %v2141 = vmul.f32 %v2084, %v2045
        %v2142 = vmul.f32 %v2089, %v2046
        %v2143 = vmul.f32 %v2094, %v2047
        %v2144 = vmul.f32 %v2099, %v2048
        %v2145 = vmul.f32 %v2104, %v2049
        %v2146 = vmul.f32 %v2109, %v2050
        %v2147 = vmul.f32 %v2114, %v2051
        %v2148 = vmul.f32 %v2119, %v2052
        %v2149 = vmul.f32 %v2124, %v2053
        %v2150 = vmul.f32 %v2129, %v2054
        %v2151 = vmul.f32 %v2134, %v2055
        %2168 = vrot.lane.b32.xlu0 %v1978, 16
        %v2169 = vpop.permute.xlu0 %2168
        %2170 = vrot.lane.b32.xlu0 %v1981, 16
        %v2171 = vpop.permute.xlu0 %2170
        %2172 = vrot.lane.b32.xlu0 %v1986, 16
        %v2173 = vpop.permute.xlu0 %2172
        %2174 = vrot.lane.b32.xlu0 %v1989, 16
        %v2175 = vpop.permute.xlu0 %2174
        %2176 = vrot.lane.b32.xlu0 %v1994, 16
        %v2177 = vpop.permute.xlu0 %2176
        %2178 = vrot.lane.b32.xlu0 %v1997, 16
        %v2179 = vpop.permute.xlu0 %2178
        %2180 = vrot.lane.b32.xlu0 %v2002, 16
        %v2181 = vpop.permute.xlu0 %2180
        %2182 = vrot.lane.b32.xlu0 %v2005, 16
        %v2183 = vpop.permute.xlu0 %2182
        %2184 = vrot.lane.b32.xlu0 %v2010, 16
        %v2185 = vpop.permute.xlu0 %2184
        %2186 = vrot.lane.b32.xlu0 %v2013, 16
        %v2187 = vpop.permute.xlu0 %2186
        %2188 = vrot.lane.b32.xlu0 %v2018, 16
        %v2189 = vpop.permute.xlu0 %2188
        %2190 = vrot.lane.b32.xlu0 %v2021, 16
        %v2191 = vpop.permute.xlu0 %2190
        %2192 = vrot.lane.b32.xlu0 %v2026, 16
        %v2193 = vpop.permute.xlu0 %2192
        %2194 = vrot.lane.b32.xlu0 %v2029, 16
        %v2195 = vpop.permute.xlu0 %2194
        %2196 = vrot.lane.b32.xlu0 %v2034, 16
        %v2197 = vpop.permute.xlu0 %2196
        %2198 = vrot.lane.b32.xlu0 %v2037, 16
        %v2199 = vpop.permute.xlu0 %2198
        %v2216 = vadd.f32 %v2136, %v2169
        %v2217 = vadd.f32 %v2137, %v2171
        %v2218 = vadd.f32 %v2138, %v2173
        %v2219 = vadd.f32 %v2139, %v2175
        %v2220 = vadd.f32 %v2140, %v2177
        %v2221 = vadd.f32 %v2141, %v2179
        %v2222 = vadd.f32 %v2142, %v2181
        %v2223 = vadd.f32 %v2143, %v2183
        %v2224 = vadd.f32 %v2144, %v2185
        %v2225 = vadd.f32 %v2145, %v2187
        %v2226 = vadd.f32 %v2146, %v2189
        %v2227 = vadd.f32 %v2147, %v2191
        %v2228 = vadd.f32 %v2148, %v2193
        %v2229 = vadd.f32 %v2149, %v2195
        %v2230 = vadd.f32 %v2150, %v2197
        %v2231 = vadd.f32 %v2151, %v2199
        %vm2232 = vcmask 261248
        %2233 = vst.msk [vmem:[#allocation4] sm:$0xff] %vm2232, %v2216
        %2234 = vst.msk [vmem:[#allocation4 + $0x8] sm:$0xff] %vm2232, %v2217
        %2235 = vst.msk [vmem:[#allocation4 + $0x10] sm:$0xff] %vm2232, %v2218
        %2236 = vst.msk [vmem:[#allocation4 + $0x18] sm:$0xff] %vm2232, %v2219
        %2237 = vst.msk [vmem:[#allocation4 + $0x20] sm:$0xff] %vm2232, %v2220
        %2238 = vst.msk [vmem:[#allocation4 + $0x28] sm:$0xff] %vm2232, %v2221
        %2239 = vst.msk [vmem:[#allocation4 + $0x30] sm:$0xff] %vm2232, %v2222
        %2240 = vst.msk [vmem:[#allocation4 + $0x38] sm:$0xff] %vm2232, %v2223
        %2241 = vst.msk [vmem:[#allocation4 + $0x40] sm:$0xff] %vm2232, %v2224
        %2242 = vst.msk [vmem:[#allocation4 + $0x48] sm:$0xff] %vm2232, %v2225
        %2243 = vst.msk [vmem:[#allocation4 + $0x50] sm:$0xff] %vm2232, %v2226
        %2244 = vst.msk [vmem:[#allocation4 + $0x58] sm:$0xff] %vm2232, %v2227
        %2245 = vst.msk [vmem:[#allocation4 + $0x60] sm:$0xff] %vm2232, %v2228
        %2246 = vst.msk [vmem:[#allocation4 + $0x68] sm:$0xff] %vm2232, %v2229
        %2247 = vst.msk [vmem:[#allocation4 + $0x70] sm:$0xff] %vm2232, %v2230
        %2248 = vst.msk [vmem:[#allocation4 + $0x78] sm:$0xff] %vm2232, %v2231
        %v2249 = vld [vmem:[%s305] sm:$0xff]
        %v2250 = vld [vmem:[%s305 + $0x8] sm:$0xff]
        %v2251 = vld [vmem:[%s305 + $0x10] sm:$0xff]
        %v2252 = vld [vmem:[%s305 + $0x18] sm:$0xff]
        %v2253 = vld [vmem:[%s305 + $0x20] sm:$0xff]
        %v2254 = vld [vmem:[%s305 + $0x28] sm:$0xff]
        %v2255 = vld [vmem:[%s305 + $0x30] sm:$0xff]
        %v2256 = vld [vmem:[%s305 + $0x38] sm:$0xff]
        %v2257 = vld [vmem:[%s305 + $0x40] sm:$0xff]
        %v2258 = vld [vmem:[%s305 + $0x48] sm:$0xff]
        %v2259 = vld [vmem:[%s305 + $0x50] sm:$0xff]
        %v2260 = vld [vmem:[%s305 + $0x58] sm:$0xff]
        %v2261 = vld [vmem:[%s305 + $0x60] sm:$0xff]
        %v2262 = vld [vmem:[%s305 + $0x68] sm:$0xff]
        %v2263 = vld [vmem:[%s305 + $0x70] sm:$0xff]
        %v2264 = vld [vmem:[%s305 + $0x78] sm:$0xff]
        %v2265 = vld [vmem:[%s310 + $0x2] sm:$0x1]
        %2267 = vset.pattern.permute.xlu0 2
        %2268 = vperm.xlu0 %2267, %v2249
        %v2269 = vpop.permute.xlu0 %2268
        %2272 = vset.pattern.permute.xlu0 2
        %2273 = vperm.xlu0 %2272, %v2250
        %v2274 = vpop.permute.xlu0 %2273
        %2277 = vset.pattern.permute.xlu0 2
        %2278 = vperm.xlu0 %2277, %v2251
        %v2279 = vpop.permute.xlu0 %2278
        %2282 = vset.pattern.permute.xlu0 2
        %2283 = vperm.xlu0 %2282, %v2252
        %v2284 = vpop.permute.xlu0 %2283
        %2287 = vset.pattern.permute.xlu0 2
        %2288 = vperm.xlu0 %2287, %v2253
        %v2289 = vpop.permute.xlu0 %2288
        %2292 = vset.pattern.permute.xlu0 2
        %2293 = vperm.xlu0 %2292, %v2254
        %v2294 = vpop.permute.xlu0 %2293
        %2297 = vset.pattern.permute.xlu0 2
        %2298 = vperm.xlu0 %2297, %v2255
        %v2299 = vpop.permute.xlu0 %2298
        %2302 = vset.pattern.permute.xlu0 2
        %2303 = vperm.xlu0 %2302, %v2256
        %v2304 = vpop.permute.xlu0 %2303
        %2307 = vset.pattern.permute.xlu0 2
        %2308 = vperm.xlu0 %2307, %v2257
        %v2309 = vpop.permute.xlu0 %2308
        %2312 = vset.pattern.permute.xlu0 2
        %2313 = vperm.xlu0 %2312, %v2258
        %v2314 = vpop.permute.xlu0 %2313
        %2317 = vset.pattern.permute.xlu0 2
        %2318 = vperm.xlu0 %2317, %v2259
        %v2319 = vpop.permute.xlu0 %2318
        %2322 = vset.pattern.permute.xlu0 2
        %2323 = vperm.xlu0 %2322, %v2260
        %v2324 = vpop.permute.xlu0 %2323
        %2327 = vset.pattern.permute.xlu0 2
        %2328 = vperm.xlu0 %2327, %v2261
        %v2329 = vpop.permute.xlu0 %2328
        %2332 = vset.pattern.permute.xlu0 2
        %2333 = vperm.xlu0 %2332, %v2262
        %v2334 = vpop.permute.xlu0 %2333
        %2337 = vset.pattern.permute.xlu0 2
        %2338 = vperm.xlu0 %2337, %v2263
        %v2339 = vpop.permute.xlu0 %2338
        %2342 = vset.pattern.permute.xlu0 2
        %2343 = vperm.xlu0 %2342, %v2264
        %v2344 = vpop.permute.xlu0 %2343
        %v2346 = vlaneseq
        %v2347 = vshrl.u32 %v2346, 7
        %v2348 = vsub.s32 0, %v2347
        %v2349 = vrot.slane %v2265, %v2348
        %v2350 = vadd.f32 %v2269, %v2349
        %v2351 = vadd.f32 %v2274, %v2349
        %v2352 = vadd.f32 %v2279, %v2349
        %v2353 = vadd.f32 %v2284, %v2349
        %v2354 = vadd.f32 %v2289, %v2349
        %v2355 = vadd.f32 %v2294, %v2349
        %v2356 = vadd.f32 %v2299, %v2349
        %v2357 = vadd.f32 %v2304, %v2349
        %v2358 = vadd.f32 %v2309, %v2349
        %v2359 = vadd.f32 %v2314, %v2349
        %v2360 = vadd.f32 %v2319, %v2349
        %v2361 = vadd.f32 %v2324, %v2349
        %v2362 = vadd.f32 %v2329, %v2349
        %v2363 = vadd.f32 %v2334, %v2349
        %v2364 = vadd.f32 %v2339, %v2349
        %v2365 = vadd.f32 %v2344, %v2349
        %v2366 = vmul.f32 %v2350, 0.2
        %v2367 = vmul.f32 %v2351, 0.2
        %v2368 = vmul.f32 %v2352, 0.2
        %v2369 = vmul.f32 %v2353, 0.2
        %v2370 = vmul.f32 %v2354, 0.2
        %v2371 = vmul.f32 %v2355, 0.2
        %v2372 = vmul.f32 %v2356, 0.2
        %v2373 = vmul.f32 %v2357, 0.2
        %v2374 = vmul.f32 %v2358, 0.2
        %v2375 = vmul.f32 %v2359, 0.2
        %v2376 = vmul.f32 %v2360, 0.2
        %v2377 = vmul.f32 %v2361, 0.2
        %v2378 = vmul.f32 %v2362, 0.2
        %v2379 = vmul.f32 %v2363, 0.2
        %v2380 = vmul.f32 %v2364, 0.2
        %v2381 = vmul.f32 %v2365, 0.2
        %v2382 = vmax.f32 %v2350, %v2366
        %v2383 = vmax.f32 %v2351, %v2367
        %v2384 = vmax.f32 %v2352, %v2368
        %v2385 = vmax.f32 %v2353, %v2369
        %v2386 = vmax.f32 %v2354, %v2370
        %v2387 = vmax.f32 %v2355, %v2371
        %v2388 = vmax.f32 %v2356, %v2372
        %v2389 = vmax.f32 %v2357, %v2373
        %v2390 = vmax.f32 %v2358, %v2374
        %v2391 = vmax.f32 %v2359, %v2375
        %v2392 = vmax.f32 %v2360, %v2376
        %v2393 = vmax.f32 %v2361, %v2377
        %v2394 = vmax.f32 %v2362, %v2378
        %v2395 = vmax.f32 %v2363, %v2379
        %v2396 = vmax.f32 %v2364, %v2380
        %v2397 = vmax.f32 %v2365, %v2381
        %v2398 = vsel %vm638, %v2382, -1e+30
        %v2399 = vsel %vm639, %v2383, -1e+30
        %v2400 = vsel %vm640, %v2384, -1e+30
        %v2401 = vsel %vm641, %v2385, -1e+30
        %v2402 = vsel %vm642, %v2386, -1e+30
        %v2403 = vsel %vm643, %v2387, -1e+30
        %v2404 = vsel %vm644, %v2388, -1e+30
        %v2405 = vsel %vm645, %v2389, -1e+30
        %v2406 = vsel %vm646, %v2390, -1e+30
        %v2407 = vsel %vm647, %v2391, -1e+30
        %v2408 = vsel %vm648, %v2392, -1e+30
        %v2409 = vsel %vm649, %v2393, -1e+30
        %v2410 = vsel %vm650, %v2394, -1e+30
        %v2411 = vsel %vm651, %v2395, -1e+30
        %v2412 = vsel %vm652, %v2396, -1e+30
        %v2413 = vsel %vm653, %v2397, -1e+30
        %v2414 = vld [vmem:[#allocation2] sm:$0xff]
        %v2415 = vld [vmem:[#allocation2 + $0x8] sm:$0xff]
        %v2416 = vld [vmem:[#allocation2 + $0x10] sm:$0xff]
        %v2417 = vld [vmem:[#allocation2 + $0x18] sm:$0xff]
        %v2418 = vld [vmem:[#allocation2 + $0x20] sm:$0xff]
        %v2419 = vld [vmem:[#allocation2 + $0x28] sm:$0xff]
        %v2420 = vld [vmem:[#allocation2 + $0x30] sm:$0xff]
        %v2421 = vld [vmem:[#allocation2 + $0x38] sm:$0xff]
        %v2422 = vld [vmem:[#allocation2 + $0x40] sm:$0xff]
        %v2423 = vld [vmem:[#allocation2 + $0x48] sm:$0xff]
        %v2424 = vld [vmem:[#allocation2 + $0x50] sm:$0xff]
        %v2425 = vld [vmem:[#allocation2 + $0x58] sm:$0xff]
        %v2426 = vld [vmem:[#allocation2 + $0x60] sm:$0xff]
        %v2427 = vld [vmem:[#allocation2 + $0x68] sm:$0xff]
        %v2428 = vld [vmem:[#allocation2 + $0x70] sm:$0xff]
        %v2429 = vld [vmem:[#allocation2 + $0x78] sm:$0xff]
        %2430 = vmax.xlane.f32.xlu0 %v2398
        %v2431 = vpop.xlane.xlu0 %2430
        %2432 = vmax.xlane.f32.xlu0 %v2399
        %v2433 = vpop.xlane.xlu0 %2432
        %2434 = vmax.xlane.f32.xlu0 %v2400
        %v2435 = vpop.xlane.xlu0 %2434
        %2436 = vmax.xlane.f32.xlu0 %v2401
        %v2437 = vpop.xlane.xlu0 %2436
        %2438 = vmax.xlane.f32.xlu0 %v2402
        %v2439 = vpop.xlane.xlu0 %2438
        %2440 = vmax.xlane.f32.xlu0 %v2403
        %v2441 = vpop.xlane.xlu0 %2440
        %2442 = vmax.xlane.f32.xlu0 %v2404
        %v2443 = vpop.xlane.xlu0 %2442
        %2444 = vmax.xlane.f32.xlu0 %v2405
        %v2445 = vpop.xlane.xlu0 %2444
        %2446 = vmax.xlane.f32.xlu0 %v2406
        %v2447 = vpop.xlane.xlu0 %2446
        %2448 = vmax.xlane.f32.xlu0 %v2407
        %v2449 = vpop.xlane.xlu0 %2448
        %2450 = vmax.xlane.f32.xlu0 %v2408
        %v2451 = vpop.xlane.xlu0 %2450
        %2452 = vmax.xlane.f32.xlu0 %v2409
        %v2453 = vpop.xlane.xlu0 %2452
        %2454 = vmax.xlane.f32.xlu0 %v2410
        %v2455 = vpop.xlane.xlu0 %2454
        %2456 = vmax.xlane.f32.xlu0 %v2411
        %v2457 = vpop.xlane.xlu0 %2456
        %2458 = vmax.xlane.f32.xlu0 %v2412
        %v2459 = vpop.xlane.xlu0 %2458
        %2460 = vmax.xlane.f32.xlu0 %v2413
        %v2461 = vpop.xlane.xlu0 %2460
        %v2462 = vmax.f32 %v2414, %v2431
        %v2463 = vmax.f32 %v2415, %v2433
        %v2464 = vmax.f32 %v2416, %v2435
        %v2465 = vmax.f32 %v2417, %v2437
        %v2466 = vmax.f32 %v2418, %v2439
        %v2467 = vmax.f32 %v2419, %v2441
        %v2468 = vmax.f32 %v2420, %v2443
        %v2469 = vmax.f32 %v2421, %v2445
        %v2470 = vmax.f32 %v2422, %v2447
        %v2471 = vmax.f32 %v2423, %v2449
        %v2472 = vmax.f32 %v2424, %v2451
        %v2473 = vmax.f32 %v2425, %v2453
        %v2474 = vmax.f32 %v2426, %v2455
        %v2475 = vmax.f32 %v2427, %v2457
        %v2476 = vmax.f32 %v2428, %v2459
        %v2477 = vmax.f32 %v2429, %v2461
        %v2478 = vsub.f32 %v2414, %v2462
        %v2479 = vsub.f32 %v2415, %v2463
        %v2480 = vsub.f32 %v2416, %v2464
        %v2481 = vsub.f32 %v2417, %v2465
        %v2482 = vsub.f32 %v2418, %v2466
        %v2483 = vsub.f32 %v2419, %v2467
        %v2484 = vsub.f32 %v2420, %v2468
        %v2485 = vsub.f32 %v2421, %v2469
        %v2486 = vsub.f32 %v2422, %v2470
        %v2487 = vsub.f32 %v2423, %v2471
        %v2488 = vsub.f32 %v2424, %v2472
        %v2489 = vsub.f32 %v2425, %v2473
        %v2490 = vsub.f32 %v2426, %v2474
        %v2491 = vsub.f32 %v2427, %v2475
        %v2492 = vsub.f32 %v2428, %v2476
        %v2493 = vsub.f32 %v2429, %v2477
        %v2494 = vmul.f32 %v2478, 1.442695
        %v2495 = vpow.pop %v2494
        %v2496 = vmul.f32 %v2479, 1.442695
        %v2497 = vpow.pop %v2496
        %v2498 = vmul.f32 %v2480, 1.442695
        %v2499 = vpow.pop %v2498
        %v2500 = vmul.f32 %v2481, 1.442695
        %v2501 = vpow.pop %v2500
        %v2502 = vmul.f32 %v2482, 1.442695
        %v2503 = vpow.pop %v2502
        %v2504 = vmul.f32 %v2483, 1.442695
        %v2505 = vpow.pop %v2504
        %v2506 = vmul.f32 %v2484, 1.442695
        %v2507 = vpow.pop %v2506
        %v2508 = vmul.f32 %v2485, 1.442695
        %v2509 = vpow.pop %v2508
        %v2510 = vmul.f32 %v2486, 1.442695
        %v2511 = vpow.pop %v2510
        %v2512 = vmul.f32 %v2487, 1.442695
        %v2513 = vpow.pop %v2512
        %v2514 = vmul.f32 %v2488, 1.442695
        %v2515 = vpow.pop %v2514
        %v2516 = vmul.f32 %v2489, 1.442695
        %v2517 = vpow.pop %v2516
        %v2518 = vmul.f32 %v2490, 1.442695
        %v2519 = vpow.pop %v2518
        %v2520 = vmul.f32 %v2491, 1.442695
        %v2521 = vpow.pop %v2520
        %v2522 = vmul.f32 %v2492, 1.442695
        %v2523 = vpow.pop %v2522
        %v2524 = vmul.f32 %v2493, 1.442695
        %v2525 = vpow.pop %v2524
        %2527 = vset.pattern.permute.xlu0 2
        %2528 = vperm.xlu0 %2527, %v2462
        %v2529 = vpop.permute.xlu0 %2528
        %2532 = vset.pattern.permute.xlu0 2
        %2533 = vperm.xlu0 %2532, %v2463
        %v2534 = vpop.permute.xlu0 %2533
        %2537 = vset.pattern.permute.xlu0 2
        %2538 = vperm.xlu0 %2537, %v2464
        %v2539 = vpop.permute.xlu0 %2538
        %2542 = vset.pattern.permute.xlu0 2
        %2543 = vperm.xlu0 %2542, %v2465
        %v2544 = vpop.permute.xlu0 %2543
        %2547 = vset.pattern.permute.xlu0 2
        %2548 = vperm.xlu0 %2547, %v2466
        %v2549 = vpop.permute.xlu0 %2548
        %2552 = vset.pattern.permute.xlu0 2
        %2553 = vperm.xlu0 %2552, %v2467
        %v2554 = vpop.permute.xlu0 %2553
        %2557 = vset.pattern.permute.xlu0 2
        %2558 = vperm.xlu0 %2557, %v2468
        %v2559 = vpop.permute.xlu0 %2558
        %2562 = vset.pattern.permute.xlu0 2
        %2563 = vperm.xlu0 %2562, %v2469
        %v2564 = vpop.permute.xlu0 %2563
        %2567 = vset.pattern.permute.xlu0 2
        %2568 = vperm.xlu0 %2567, %v2470
        %v2569 = vpop.permute.xlu0 %2568
        %2572 = vset.pattern.permute.xlu0 2
        %2573 = vperm.xlu0 %2572, %v2471
        %v2574 = vpop.permute.xlu0 %2573
        %2577 = vset.pattern.permute.xlu0 2
        %2578 = vperm.xlu0 %2577, %v2472
        %v2579 = vpop.permute.xlu0 %2578
        %2582 = vset.pattern.permute.xlu0 2
        %2583 = vperm.xlu0 %2582, %v2473
        %v2584 = vpop.permute.xlu0 %2583
        %2587 = vset.pattern.permute.xlu0 2
        %2588 = vperm.xlu0 %2587, %v2474
        %v2589 = vpop.permute.xlu0 %2588
        %2592 = vset.pattern.permute.xlu0 2
        %2593 = vperm.xlu0 %2592, %v2475
        %v2594 = vpop.permute.xlu0 %2593
        %2597 = vset.pattern.permute.xlu0 2
        %2598 = vperm.xlu0 %2597, %v2476
        %v2599 = vpop.permute.xlu0 %2598
        %2602 = vset.pattern.permute.xlu0 2
        %2603 = vperm.xlu0 %2602, %v2477
        %v2604 = vpop.permute.xlu0 %2603
        %v2606 = vsub.f32 %v2398, %v2529
        %v2607 = vsub.f32 %v2399, %v2534
        %v2608 = vsub.f32 %v2400, %v2539
        %v2609 = vsub.f32 %v2401, %v2544
        %v2610 = vsub.f32 %v2402, %v2549
        %v2611 = vsub.f32 %v2403, %v2554
        %v2612 = vsub.f32 %v2404, %v2559
        %v2613 = vsub.f32 %v2405, %v2564
        %v2614 = vsub.f32 %v2406, %v2569
        %v2615 = vsub.f32 %v2407, %v2574
        %v2616 = vsub.f32 %v2408, %v2579
        %v2617 = vsub.f32 %v2409, %v2584
        %v2618 = vsub.f32 %v2410, %v2589
        %v2619 = vsub.f32 %v2411, %v2594
        %v2620 = vsub.f32 %v2412, %v2599
        %v2621 = vsub.f32 %v2413, %v2604
        %v2622 = vmul.f32 %v2606, 1.442695
        %v2623 = vpow.pop %v2622
        %v2624 = vmul.f32 %v2607, 1.442695
        %v2625 = vpow.pop %v2624
        %v2626 = vmul.f32 %v2608, 1.442695
        %v2627 = vpow.pop %v2626
        %v2628 = vmul.f32 %v2609, 1.442695
        %v2629 = vpow.pop %v2628
        %v2630 = vmul.f32 %v2610, 1.442695
        %v2631 = vpow.pop %v2630
        %v2632 = vmul.f32 %v2611, 1.442695
        %v2633 = vpow.pop %v2632
        %v2634 = vmul.f32 %v2612, 1.442695
        %v2635 = vpow.pop %v2634
        %v2636 = vmul.f32 %v2613, 1.442695
        %v2637 = vpow.pop %v2636
        %v2638 = vmul.f32 %v2614, 1.442695
        %v2639 = vpow.pop %v2638
        %v2640 = vmul.f32 %v2615, 1.442695
        %v2641 = vpow.pop %v2640
        %v2642 = vmul.f32 %v2616, 1.442695
        %v2643 = vpow.pop %v2642
        %v2644 = vmul.f32 %v2617, 1.442695
        %v2645 = vpow.pop %v2644
        %v2646 = vmul.f32 %v2618, 1.442695
        %v2647 = vpow.pop %v2646
        %v2648 = vmul.f32 %v2619, 1.442695
        %v2649 = vpow.pop %v2648
        %v2650 = vmul.f32 %v2620, 1.442695
        %v2651 = vpow.pop %v2650
        %v2652 = vmul.f32 %v2621, 1.442695
        %v2653 = vpow.pop %v2652
        %v2654 = vld [vmem:[#allocation3] sm:$0xff]
        %v2655 = vld [vmem:[#allocation3 + $0x8] sm:$0xff]
        %v2656 = vld [vmem:[#allocation3 + $0x10] sm:$0xff]
        %v2657 = vld [vmem:[#allocation3 + $0x18] sm:$0xff]
        %v2658 = vld [vmem:[#allocation3 + $0x20] sm:$0xff]
        %v2659 = vld [vmem:[#allocation3 + $0x28] sm:$0xff]
        %v2660 = vld [vmem:[#allocation3 + $0x30] sm:$0xff]
        %v2661 = vld [vmem:[#allocation3 + $0x38] sm:$0xff]
        %v2662 = vld [vmem:[#allocation3 + $0x40] sm:$0xff]
        %v2663 = vld [vmem:[#allocation3 + $0x48] sm:$0xff]
        %v2664 = vld [vmem:[#allocation3 + $0x50] sm:$0xff]
        %v2665 = vld [vmem:[#allocation3 + $0x58] sm:$0xff]
        %v2666 = vld [vmem:[#allocation3 + $0x60] sm:$0xff]
        %v2667 = vld [vmem:[#allocation3 + $0x68] sm:$0xff]
        %v2668 = vld [vmem:[#allocation3 + $0x70] sm:$0xff]
        %v2669 = vld [vmem:[#allocation3 + $0x78] sm:$0xff]
        %v2670 = vmul.f32 %v2495, %v2654
        %v2671 = vmul.f32 %v2497, %v2655
        %v2672 = vmul.f32 %v2499, %v2656
        %v2673 = vmul.f32 %v2501, %v2657
        %v2674 = vmul.f32 %v2503, %v2658
        %v2675 = vmul.f32 %v2505, %v2659
        %v2676 = vmul.f32 %v2507, %v2660
        %v2677 = vmul.f32 %v2509, %v2661
        %v2678 = vmul.f32 %v2511, %v2662
        %v2679 = vmul.f32 %v2513, %v2663
        %v2680 = vmul.f32 %v2515, %v2664
        %v2681 = vmul.f32 %v2517, %v2665
        %v2682 = vmul.f32 %v2519, %v2666
        %v2683 = vmul.f32 %v2521, %v2667
        %v2684 = vmul.f32 %v2523, %v2668
        %v2685 = vmul.f32 %v2525, %v2669
        %2686 = vadd.xlane.f32.xlu0 %v2623
        %v2687 = vpop.xlane.xlu0 %2686
        %2688 = vadd.xlane.f32.xlu0 %v2625
        %v2689 = vpop.xlane.xlu0 %2688
        %2690 = vadd.xlane.f32.xlu0 %v2627
        %v2691 = vpop.xlane.xlu0 %2690
        %2692 = vadd.xlane.f32.xlu0 %v2629
        %v2693 = vpop.xlane.xlu0 %2692
        %2694 = vadd.xlane.f32.xlu0 %v2631
        %v2695 = vpop.xlane.xlu0 %2694
        %2696 = vadd.xlane.f32.xlu0 %v2633
        %v2697 = vpop.xlane.xlu0 %2696
        %2698 = vadd.xlane.f32.xlu0 %v2635
        %v2699 = vpop.xlane.xlu0 %2698
        %2700 = vadd.xlane.f32.xlu0 %v2637
        %v2701 = vpop.xlane.xlu0 %2700
        %2702 = vadd.xlane.f32.xlu0 %v2639
        %v2703 = vpop.xlane.xlu0 %2702
        %2704 = vadd.xlane.f32.xlu0 %v2641
        %v2705 = vpop.xlane.xlu0 %2704
        %2706 = vadd.xlane.f32.xlu0 %v2643
        %v2707 = vpop.xlane.xlu0 %2706
        %2708 = vadd.xlane.f32.xlu0 %v2645
        %v2709 = vpop.xlane.xlu0 %2708
        %2710 = vadd.xlane.f32.xlu0 %v2647
        %v2711 = vpop.xlane.xlu0 %2710
        %2712 = vadd.xlane.f32.xlu0 %v2649
        %v2713 = vpop.xlane.xlu0 %2712
        %2714 = vadd.xlane.f32.xlu0 %v2651
        %v2715 = vpop.xlane.xlu0 %2714
        %2716 = vadd.xlane.f32.xlu0 %v2653
        %v2717 = vpop.xlane.xlu0 %2716
        %v2718 = vadd.f32 %v2670, %v2687
        %v2719 = vadd.f32 %v2671, %v2689
        %v2720 = vadd.f32 %v2672, %v2691
        %v2721 = vadd.f32 %v2673, %v2693
        %v2722 = vadd.f32 %v2674, %v2695
        %v2723 = vadd.f32 %v2675, %v2697
        %v2724 = vadd.f32 %v2676, %v2699
        %v2725 = vadd.f32 %v2677, %v2701
        %v2726 = vadd.f32 %v2678, %v2703
        %v2727 = vadd.f32 %v2679, %v2705
        %v2728 = vadd.f32 %v2680, %v2707
        %v2729 = vadd.f32 %v2681, %v2709
        %v2730 = vadd.f32 %v2682, %v2711
        %v2731 = vadd.f32 %v2683, %v2713
        %v2732 = vadd.f32 %v2684, %v2715
        %v2733 = vadd.f32 %v2685, %v2717
        %vm2734 = vcmask 23568
        %2735 = vst.msk [vmem:[#allocation3] sm:$0xff] %vm2734, %v2718
        %2736 = vst.msk [vmem:[#allocation3 + $0x8] sm:$0xff] %vm2734, %v2719
        %2737 = vst.msk [vmem:[#allocation3 + $0x10] sm:$0xff] %vm2734, %v2720
        %2738 = vst.msk [vmem:[#allocation3 + $0x18] sm:$0xff] %vm2734, %v2721
        %2739 = vst.msk [vmem:[#allocation3 + $0x20] sm:$0xff] %vm2734, %v2722
        %2740 = vst.msk [vmem:[#allocation3 + $0x28] sm:$0xff] %vm2734, %v2723
        %2741 = vst.msk [vmem:[#allocation3 + $0x30] sm:$0xff] %vm2734, %v2724
        %2742 = vst.msk [vmem:[#allocation3 + $0x38] sm:$0xff] %vm2734, %v2725
        %2743 = vst.msk [vmem:[#allocation3 + $0x40] sm:$0xff] %vm2734, %v2726
        %2744 = vst.msk [vmem:[#allocation3 + $0x48] sm:$0xff] %vm2734, %v2727
        %2745 = vst.msk [vmem:[#allocation3 + $0x50] sm:$0xff] %vm2734, %v2728
        %2746 = vst.msk [vmem:[#allocation3 + $0x58] sm:$0xff] %vm2734, %v2729
        %2747 = vst.msk [vmem:[#allocation3 + $0x60] sm:$0xff] %vm2734, %v2730
        %2748 = vst.msk [vmem:[#allocation3 + $0x68] sm:$0xff] %vm2734, %v2731
        %2749 = vst.msk [vmem:[#allocation3 + $0x70] sm:$0xff] %vm2734, %v2732
        %2750 = vst.msk [vmem:[#allocation3 + $0x78] sm:$0xff] %vm2734, %v2733
        %2751 = vst.msk [vmem:[#allocation2] sm:$0xff] %vm2734, %v2462
        %2752 = vst.msk [vmem:[#allocation2 + $0x8] sm:$0xff] %vm2734, %v2463
        %2753 = vst.msk [vmem:[#allocation2 + $0x10] sm:$0xff] %vm2734, %v2464
        %2754 = vst.msk [vmem:[#allocation2 + $0x18] sm:$0xff] %vm2734, %v2465
        %2755 = vst.msk [vmem:[#allocation2 + $0x20] sm:$0xff] %vm2734, %v2466
        %2756 = vst.msk [vmem:[#allocation2 + $0x28] sm:$0xff] %vm2734, %v2467
        %2757 = vst.msk [vmem:[#allocation2 + $0x30] sm:$0xff] %vm2734, %v2468
        %2758 = vst.msk [vmem:[#allocation2 + $0x38] sm:$0xff] %vm2734, %v2469
        %2759 = vst.msk [vmem:[#allocation2 + $0x40] sm:$0xff] %vm2734, %v2470
        %2760 = vst.msk [vmem:[#allocation2 + $0x48] sm:$0xff] %vm2734, %v2471
        %2761 = vst.msk [vmem:[#allocation2 + $0x50] sm:$0xff] %vm2734, %v2472
        %2762 = vst.msk [vmem:[#allocation2 + $0x58] sm:$0xff] %vm2734, %v2473
        %2763 = vst.msk [vmem:[#allocation2 + $0x60] sm:$0xff] %vm2734, %v2474
        %2764 = vst.msk [vmem:[#allocation2 + $0x68] sm:$0xff] %vm2734, %v2475
        %2765 = vst.msk [vmem:[#allocation2 + $0x70] sm:$0xff] %vm2734, %v2476
        %2766 = vst.msk [vmem:[#allocation2 + $0x78] sm:$0xff] %vm2734, %v2477
        %v2767 = vld [vmem:[%s315] sm:$0xf]
        %v2768 = vld [vmem:[%s315 + $0x4] sm:$0xf]
        %v2769 = vld [vmem:[%s315 + $0x8] sm:$0xf]
        %v2770 = vld [vmem:[%s315 + $0xc] sm:$0xf]
        %v2771 = vld [vmem:[%s315 + $0x10] sm:$0xf]
        %v2772 = vld [vmem:[%s315 + $0x14] sm:$0xf]
        %v2773 = vld [vmem:[%s315 + $0x18] sm:$0xf]
        %v2774 = vld [vmem:[%s315 + $0x1c] sm:$0xf]
        %v2775 = vld [vmem:[%s315 + $0x20] sm:$0xf]
        %v2776 = vld [vmem:[%s315 + $0x24] sm:$0xf]
        %v2777 = vld [vmem:[%s315 + $0x28] sm:$0xf]
        %v2778 = vld [vmem:[%s315 + $0x2c] sm:$0xf]
        %v2779 = vld [vmem:[%s315 + $0x30] sm:$0xf]
        %v2780 = vld [vmem:[%s315 + $0x34] sm:$0xf]
        %v2781 = vld [vmem:[%s315 + $0x38] sm:$0xf]
        %v2782 = vld [vmem:[%s315 + $0x3c] sm:$0xf]
        %v2783 = vpack.c.bf16 %v2625, %v2623
        %v2784 = vpack.c.bf16 %v2629, %v2627
        %v2785 = vpack.c.bf16 %v2633, %v2631
        %v2786 = vpack.c.bf16 %v2637, %v2635
        %v2787 = vpack.c.bf16 %v2641, %v2639
        %v2788 = vpack.c.bf16 %v2645, %v2643
        %v2789 = vpack.c.bf16 %v2649, %v2647
        %v2790 = vpack.c.bf16 %v2653, %v2651
        %v2807 = vunpack.c.l.b16 %v2767
        %v2808 = vunpack.c.l.b16 %v2768
        %v2809 = vunpack.c.l.b16 %v2769
        %v2810 = vunpack.c.l.b16 %v2770
        %v2811 = vunpack.c.l.b16 %v2771
        %v2812 = vunpack.c.l.b16 %v2772
        %v2813 = vunpack.c.l.b16 %v2773
        %v2814 = vunpack.c.l.b16 %v2774
        %v2815 = vunpack.c.l.b16 %v2775
        %v2816 = vunpack.c.l.b16 %v2776
        %v2817 = vunpack.c.l.b16 %v2777
        %v2818 = vunpack.c.l.b16 %v2778
        %v2819 = vunpack.c.l.b16 %v2779
        %v2820 = vunpack.c.l.b16 %v2780
        %v2821 = vunpack.c.l.b16 %v2781
        %v2822 = vunpack.c.l.b16 %v2782
        %v2823 = vpack.c.b16 %v2808, %v2807
        %v2824 = vpack.c.b16 %v2810, %v2809
        %v2825 = vpack.c.b16 %v2812, %v2811
        %v2826 = vpack.c.b16 %v2814, %v2813
        %v2827 = vpack.c.b16 %v2816, %v2815
        %v2828 = vpack.c.b16 %v2818, %v2817
        %v2829 = vpack.c.b16 %v2820, %v2819
        %v2830 = vpack.c.b16 %v2822, %v2821
        %2831 = vrot.lane.b32.xlu0 %v2823, 96
        %v2832 = vpop.permute.xlu0 %2831
        %2833 = vrot.lane.b32.xlu0 %v2824, 96
        %v2834 = vpop.permute.xlu0 %2833
        %2835 = vrot.lane.b32.xlu0 %v2825, 96
        %v2836 = vpop.permute.xlu0 %2835
        %2837 = vrot.lane.b32.xlu0 %v2826, 96
        %v2838 = vpop.permute.xlu0 %2837
        %2839 = vrot.lane.b32.xlu0 %v2827, 96
        %v2840 = vpop.permute.xlu0 %2839
        %2841 = vrot.lane.b32.xlu0 %v2828, 96
        %v2842 = vpop.permute.xlu0 %2841
        %2843 = vrot.lane.b32.xlu0 %v2829, 96
        %v2844 = vpop.permute.xlu0 %2843
        %2845 = vrot.lane.b32.xlu0 %v2830, 96
        %v2846 = vpop.permute.xlu0 %2845
        %2855 = vmatprep.subr.bf16.mxu0 0
        %2856 = vmatpush1.bf16.msra.mxu0 %v2832
        %2857 = vmatprep.subr.bf16.mxu0 0
        %2858 = vmatpush1.bf16.msra.mxu0 %v2834
        %2859 = vmatprep.subr.bf16.mxu0 0
        %2860 = vmatpush1.bf16.msra.mxu0 %v2836
        %2861 = vmatprep.subr.bf16.mxu0 0
        %2862 = vmatpush1.bf16.msra.mxu0 %v2838
        %2863 = vmatprep.subr.bf16.mxu0 0
        %2864 = vmatpush1.bf16.msra.mxu0 %v2840
        %2865 = vmatprep.subr.bf16.mxu0 0
        %2866 = vmatpush1.bf16.msra.mxu0 %v2842
        %2867 = vmatprep.subr.bf16.mxu0 0
        %2868 = vmatpush1.bf16.msra.mxu0 %v2844
        %2869 = vmatprep.subr.bf16.mxu0 0
        %2870 = vmatpush1.bf16.msra.mxu0 %v2846
        %2871 = vmatprep.subr.bf16.mxu0 0
        %2872 = vmatpush1.bf16.msra.mxu0 0
        %2873 = vmatprep.subr.bf16.mxu0 0
        %2874 = vmatpush1.bf16.msra.mxu0 0
        %2875 = vmatprep.subr.bf16.mxu0 0
        %2876 = vmatpush1.bf16.msra.mxu0 0
        %2877 = vmatprep.subr.bf16.mxu0 0
        %2878 = vmatpush1.bf16.msra.mxu0 0
        %2879 = vmatprep.subr.bf16.mxu0 0
        %2880 = vmatpush1.bf16.msra.mxu0 0
        %2881 = vmatprep.subr.bf16.mxu0 0
        %2882 = vmatpush1.bf16.msra.mxu0 0
        %2883 = vmatprep.subr.bf16.mxu0 0
        %2884 = vmatpush1.bf16.msra.mxu0 0
        %2885 = vmatprep.subr.bf16.mxu0 0
        %2886 = vmatpush1.bf16.msra.mxu0 0
        %2887 = vmatprep.mubr.bf16.mxu0 0
        %2888 = vmatmul.mubr.bf16.gmra.mrb[0].mxu0 %v2783
        %v2889 = vpop.f32.mrb[0].mxu0
        %v2890 = vadd.f32 0.0, %v2889
        %v2891 = vpop.f32.mrb[0].mxu0
        %v2892 = vpop.f32.mrb[0].mxu0
        %v2893 = vadd.f32 0.0, %v2892
        %v2894 = vpop.f32.mrb[0].mxu0
        %2895 = vmatprep.mubr.bf16.mxu0 0
        %2896 = vmatmul.mubr.bf16.gmra.mrb[0].mxu0 %v2784
        %v2897 = vpop.f32.mrb[0].mxu0
        %v2898 = vadd.f32 0.0, %v2897
        %v2899 = vpop.f32.mrb[0].mxu0
        %v2900 = vpop.f32.mrb[0].mxu0
        %v2901 = vadd.f32 0.0, %v2900
        %v2902 = vpop.f32.mrb[0].mxu0
        %2903 = vmatprep.mubr.bf16.mxu0 0
        %2904 = vmatmul.mubr.bf16.gmra.mrb[0].mxu0 %v2785
        %v2905 = vpop.f32.mrb[0].mxu0
        %v2906 = vadd.f32 0.0, %v2905
        %v2907 = vpop.f32.mrb[0].mxu0
        %v2908 = vpop.f32.mrb[0].mxu0
        %v2909 = vadd.f32 0.0, %v2908
        %v2910 = vpop.f32.mrb[0].mxu0
        %2911 = vmatprep.mubr.bf16.mxu0 0
        %2912 = vmatmul.mubr.bf16.gmra.mrb[0].mxu0 %v2786
        %v2913 = vpop.f32.mrb[0].mxu0
        %v2914 = vadd.f32 0.0, %v2913
        %v2915 = vpop.f32.mrb[0].mxu0
        %v2916 = vpop.f32.mrb[0].mxu0
        %v2917 = vadd.f32 0.0, %v2916
        %v2918 = vpop.f32.mrb[0].mxu0
        %2919 = vmatprep.mubr.bf16.mxu0 0
        %2920 = vmatmul.mubr.bf16.gmra.mrb[0].mxu0 %v2787
        %v2921 = vpop.f32.mrb[0].mxu0
        %v2922 = vadd.f32 0.0, %v2921
        %v2923 = vpop.f32.mrb[0].mxu0
        %v2924 = vpop.f32.mrb[0].mxu0
        %v2925 = vadd.f32 0.0, %v2924
        %v2926 = vpop.f32.mrb[0].mxu0
        %2927 = vmatprep.mubr.bf16.mxu0 0
        %2928 = vmatmul.mubr.bf16.gmra.mrb[0].mxu0 %v2788
        %v2929 = vpop.f32.mrb[0].mxu0
        %v2930 = vadd.f32 0.0, %v2929
        %v2931 = vpop.f32.mrb[0].mxu0
        %v2932 = vpop.f32.mrb[0].mxu0
        %v2933 = vadd.f32 0.0, %v2932
        %v2934 = vpop.f32.mrb[0].mxu0
        %2935 = vmatprep.mubr.bf16.mxu0 0
        %2936 = vmatmul.mubr.bf16.gmra.mrb[0].mxu0 %v2789
        %v2937 = vpop.f32.mrb[0].mxu0
        %v2938 = vadd.f32 0.0, %v2937
        %v2939 = vpop.f32.mrb[0].mxu0
        %v2940 = vpop.f32.mrb[0].mxu0
        %v2941 = vadd.f32 0.0, %v2940
        %v2942 = vpop.f32.mrb[0].mxu0
        %2943 = vmatprep.mubr.bf16.mxu0 0
        %2944 = vmatmul.mubr.bf16.gmra.mrb[0].mxu0 %v2790
        %v2945 = vpop.f32.mrb[0].mxu0
        %v2946 = vadd.f32 0.0, %v2945
        %v2947 = vpop.f32.mrb[0].mxu0
        %v2948 = vpop.f32.mrb[0].mxu0
        %v2949 = vadd.f32 0.0, %v2948
        %v2950 = vpop.f32.mrb[0].mxu0
        %2951 = vdwg.mxu0
        %v2952 = vld [vmem:[#allocation4] sm:$0xff]
        %v2953 = vld [vmem:[#allocation4 + $0x8] sm:$0xff]
        %v2954 = vld [vmem:[#allocation4 + $0x10] sm:$0xff]
        %v2955 = vld [vmem:[#allocation4 + $0x18] sm:$0xff]
        %v2956 = vld [vmem:[#allocation4 + $0x20] sm:$0xff]
        %v2957 = vld [vmem:[#allocation4 + $0x28] sm:$0xff]
        %v2958 = vld [vmem:[#allocation4 + $0x30] sm:$0xff]
        %v2959 = vld [vmem:[#allocation4 + $0x38] sm:$0xff]
        %v2960 = vld [vmem:[#allocation4 + $0x40] sm:$0xff]
        %v2961 = vld [vmem:[#allocation4 + $0x48] sm:$0xff]
        %v2962 = vld [vmem:[#allocation4 + $0x50] sm:$0xff]
        %v2963 = vld [vmem:[#allocation4 + $0x58] sm:$0xff]
        %v2964 = vld [vmem:[#allocation4 + $0x60] sm:$0xff]
        %v2965 = vld [vmem:[#allocation4 + $0x68] sm:$0xff]
        %v2966 = vld [vmem:[#allocation4 + $0x70] sm:$0xff]
        %v2967 = vld [vmem:[#allocation4 + $0x78] sm:$0xff]
        %2969 = vset.pattern.permute.xlu0 2
        %2970 = vperm.xlu0 %2969, %v2495
        %v2971 = vpop.permute.xlu0 %2970
        %2974 = vset.pattern.permute.xlu0 2
        %2975 = vperm.xlu0 %2974, %v2497
        %v2976 = vpop.permute.xlu0 %2975
        %2979 = vset.pattern.permute.xlu0 2
        %2980 = vperm.xlu0 %2979, %v2499
        %v2981 = vpop.permute.xlu0 %2980
        %2984 = vset.pattern.permute.xlu0 2
        %2985 = vperm.xlu0 %2984, %v2501
        %v2986 = vpop.permute.xlu0 %2985
        %2989 = vset.pattern.permute.xlu0 2
        %2990 = vperm.xlu0 %2989, %v2503
        %v2991 = vpop.permute.xlu0 %2990
        %2994 = vset.pattern.permute.xlu0 2
        %2995 = vperm.xlu0 %2994, %v2505
        %v2996 = vpop.permute.xlu0 %2995
        %2999 = vset.pattern.permute.xlu0 2
        %3000 = vperm.xlu0 %2999, %v2507
        %v3001 = vpop.permute.xlu0 %3000
        %3004 = vset.pattern.permute.xlu0 2
        %3005 = vperm.xlu0 %3004, %v2509
        %v3006 = vpop.permute.xlu0 %3005
        %3009 = vset.pattern.permute.xlu0 2
        %3010 = vperm.xlu0 %3009, %v2511
        %v3011 = vpop.permute.xlu0 %3010
        %3014 = vset.pattern.permute.xlu0 2
        %3015 = vperm.xlu0 %3014, %v2513
        %v3016 = vpop.permute.xlu0 %3015
        %3019 = vset.pattern.permute.xlu0 2
        %3020 = vperm.xlu0 %3019, %v2515
        %v3021 = vpop.permute.xlu0 %3020
        %3024 = vset.pattern.permute.xlu0 2
        %3025 = vperm.xlu0 %3024, %v2517
        %v3026 = vpop.permute.xlu0 %3025
        %3029 = vset.pattern.permute.xlu0 2
        %3030 = vperm.xlu0 %3029, %v2519
        %v3031 = vpop.permute.xlu0 %3030
        %3034 = vset.pattern.permute.xlu0 2
        %3035 = vperm.xlu0 %3034, %v2521
        %v3036 = vpop.permute.xlu0 %3035
        %3039 = vset.pattern.permute.xlu0 2
        %3040 = vperm.xlu0 %3039, %v2523
        %v3041 = vpop.permute.xlu0 %3040
        %3044 = vset.pattern.permute.xlu0 2
        %3045 = vperm.xlu0 %3044, %v2525
        %v3046 = vpop.permute.xlu0 %3045
        %v3048 = vmul.f32 %v2971, %v2952
        %v3049 = vmul.f32 %v2976, %v2953
        %v3050 = vmul.f32 %v2981, %v2954
        %v3051 = vmul.f32 %v2986, %v2955
        %v3052 = vmul.f32 %v2991, %v2956
        %v3053 = vmul.f32 %v2996, %v2957
        %v3054 = vmul.f32 %v3001, %v2958
        %v3055 = vmul.f32 %v3006, %v2959
        %v3056 = vmul.f32 %v3011, %v2960
        %v3057 = vmul.f32 %v3016, %v2961
        %v3058 = vmul.f32 %v3021, %v2962
        %v3059 = vmul.f32 %v3026, %v2963
        %v3060 = vmul.f32 %v3031, %v2964
        %v3061 = vmul.f32 %v3036, %v2965
        %v3062 = vmul.f32 %v3041, %v2966
        %v3063 = vmul.f32 %v3046, %v2967
        %3080 = vrot.lane.b32.xlu0 %v2890, 32
        %v3081 = vpop.permute.xlu0 %3080
        %3082 = vrot.lane.b32.xlu0 %v2893, 32
        %v3083 = vpop.permute.xlu0 %3082
        %3084 = vrot.lane.b32.xlu0 %v2898, 32
        %v3085 = vpop.permute.xlu0 %3084
        %3086 = vrot.lane.b32.xlu0 %v2901, 32
        %v3087 = vpop.permute.xlu0 %3086
        %3088 = vrot.lane.b32.xlu0 %v2906, 32
        %v3089 = vpop.permute.xlu0 %3088
        %3090 = vrot.lane.b32.xlu0 %v2909, 32
        %v3091 = vpop.permute.xlu0 %3090
        %3092 = vrot.lane.b32.xlu0 %v2914, 32
        %v3093 = vpop.permute.xlu0 %3092
        %3094 = vrot.lane.b32.xlu0 %v2917, 32
        %v3095 = vpop.permute.xlu0 %3094
        %3096 = vrot.lane.b32.xlu0 %v2922, 32
        %v3097 = vpop.permute.xlu0 %3096
        %3098 = vrot.lane.b32.xlu0 %v2925, 32
        %v3099 = vpop.permute.xlu0 %3098
        %3100 = vrot.lane.b32.xlu0 %v2930, 32
        %v3101 = vpop.permute.xlu0 %3100
        %3102 = vrot.lane.b32.xlu0 %v2933, 32
        %v3103 = vpop.permute.xlu0 %3102
        %3104 = vrot.lane.b32.xlu0 %v2938, 32
        %v3105 = vpop.permute.xlu0 %3104
        %3106 = vrot.lane.b32.xlu0 %v2941, 32
        %v3107 = vpop.permute.xlu0 %3106
        %3108 = vrot.lane.b32.xlu0 %v2946, 32
        %v3109 = vpop.permute.xlu0 %3108
        %3110 = vrot.lane.b32.xlu0 %v2949, 32
        %v3111 = vpop.permute.xlu0 %3110
        %v3128 = vadd.f32 %v3048, %v3081
        %v3129 = vadd.f32 %v3049, %v3083
        %v3130 = vadd.f32 %v3050, %v3085
        %v3131 = vadd.f32 %v3051, %v3087
        %v3132 = vadd.f32 %v3052, %v3089
        %v3133 = vadd.f32 %v3053, %v3091
        %v3134 = vadd.f32 %v3054, %v3093
        %v3135 = vadd.f32 %v3055, %v3095
        %v3136 = vadd.f32 %v3056, %v3097
        %v3137 = vadd.f32 %v3057, %v3099
        %v3138 = vadd.f32 %v3058, %v3101
        %v3139 = vadd.f32 %v3059, %v3103
        %v3140 = vadd.f32 %v3060, %v3105
        %v3141 = vadd.f32 %v3061, %v3107
        %v3142 = vadd.f32 %v3062, %v3109
        %v3143 = vadd.f32 %v3063, %v3111
        %vm3144 = vcmask 392448
        %3145 = vst.msk [vmem:[#allocation4] sm:$0xff] %vm3144, %v3128
        %3146 = vst.msk [vmem:[#allocation4 + $0x8] sm:$0xff] %vm3144, %v3129
        %3147 = vst.msk [vmem:[#allocation4 + $0x10] sm:$0xff] %vm3144, %v3130
        %3148 = vst.msk [vmem:[#allocation4 + $0x18] sm:$0xff] %vm3144, %v3131
        %3149 = vst.msk [vmem:[#allocation4 + $0x20] sm:$0xff] %vm3144, %v3132
        %3150 = vst.msk [vmem:[#allocation4 + $0x28] sm:$0xff] %vm3144, %v3133
        %3151 = vst.msk [vmem:[#allocation4 + $0x30] sm:$0xff] %vm3144, %v3134
        %3152 = vst.msk [vmem:[#allocation4 + $0x38] sm:$0xff] %vm3144, %v3135
        %3153 = vst.msk [vmem:[#allocation4 + $0x40] sm:$0xff] %vm3144, %v3136
        %3154 = vst.msk [vmem:[#allocation4 + $0x48] sm:$0xff] %vm3144, %v3137
        %3155 = vst.msk [vmem:[#allocation4 + $0x50] sm:$0xff] %vm3144, %v3138
        %3156 = vst.msk [vmem:[#allocation4 + $0x58] sm:$0xff] %vm3144, %v3139
        %3157 = vst.msk [vmem:[#allocation4 + $0x60] sm:$0xff] %vm3144, %v3140
        %3158 = vst.msk [vmem:[#allocation4 + $0x68] sm:$0xff] %vm3144, %v3141
        %3159 = vst.msk [vmem:[#allocation4 + $0x70] sm:$0xff] %vm3144, %v3142
        %3160 = vst.msk [vmem:[#allocation4 + $0x78] sm:$0xff] %vm3144, %v3143
        %v3161 = vld [vmem:[%s305] sm:$0xff]
        %v3162 = vld [vmem:[%s305 + $0x8] sm:$0xff]
        %v3163 = vld [vmem:[%s305 + $0x10] sm:$0xff]
        %v3164 = vld [vmem:[%s305 + $0x18] sm:$0xff]
        %v3165 = vld [vmem:[%s305 + $0x20] sm:$0xff]
        %v3166 = vld [vmem:[%s305 + $0x28] sm:$0xff]
        %v3167 = vld [vmem:[%s305 + $0x30] sm:$0xff]
        %v3168 = vld [vmem:[%s305 + $0x38] sm:$0xff]
        %v3169 = vld [vmem:[%s305 + $0x40] sm:$0xff]
        %v3170 = vld [vmem:[%s305 + $0x48] sm:$0xff]
        %v3171 = vld [vmem:[%s305 + $0x50] sm:$0xff]
        %v3172 = vld [vmem:[%s305 + $0x58] sm:$0xff]
        %v3173 = vld [vmem:[%s305 + $0x60] sm:$0xff]
        %v3174 = vld [vmem:[%s305 + $0x68] sm:$0xff]
        %v3175 = vld [vmem:[%s305 + $0x70] sm:$0xff]
        %v3176 = vld [vmem:[%s305 + $0x78] sm:$0xff]
        %v3177 = vld [vmem:[%s310 + $0x3] sm:$0x1]
        %3179 = vset.pattern.permute.xlu0 3
        %3180 = vperm.xlu0 %3179, %v3161
        %v3181 = vpop.permute.xlu0 %3180
        %3184 = vset.pattern.permute.xlu0 3
        %3185 = vperm.xlu0 %3184, %v3162
        %v3186 = vpop.permute.xlu0 %3185
        %3189 = vset.pattern.permute.xlu0 3
        %3190 = vperm.xlu0 %3189, %v3163
        %v3191 = vpop.permute.xlu0 %3190
        %3194 = vset.pattern.permute.xlu0 3
        %3195 = vperm.xlu0 %3194, %v3164
        %v3196 = vpop.permute.xlu0 %3195
        %3199 = vset.pattern.permute.xlu0 3
        %3200 = vperm.xlu0 %3199, %v3165
        %v3201 = vpop.permute.xlu0 %3200
        %3204 = vset.pattern.permute.xlu0 3
        %3205 = vperm.xlu0 %3204, %v3166
        %v3206 = vpop.permute.xlu0 %3205
        %3209 = vset.pattern.permute.xlu0 3
        %3210 = vperm.xlu0 %3209, %v3167
        %v3211 = vpop.permute.xlu0 %3210
        %3214 = vset.pattern.permute.xlu0 3
        %3215 = vperm.xlu0 %3214, %v3168
        %v3216 = vpop.permute.xlu0 %3215
        %3219 = vset.pattern.permute.xlu0 3
        %3220 = vperm.xlu0 %3219, %v3169
        %v3221 = vpop.permute.xlu0 %3220
        %3224 = vset.pattern.permute.xlu0 3
        %3225 = vperm.xlu0 %3224, %v3170
        %v3226 = vpop.permute.xlu0 %3225
        %3229 = vset.pattern.permute.xlu0 3
        %3230 = vperm.xlu0 %3229, %v3171
        %v3231 = vpop.permute.xlu0 %3230
        %3234 = vset.pattern.permute.xlu0 3
        %3235 = vperm.xlu0 %3234, %v3172
        %v3236 = vpop.permute.xlu0 %3235
        %3239 = vset.pattern.permute.xlu0 3
        %3240 = vperm.xlu0 %3239, %v3173
        %v3241 = vpop.permute.xlu0 %3240
        %3244 = vset.pattern.permute.xlu0 3
        %3245 = vperm.xlu0 %3244, %v3174
        %v3246 = vpop.permute.xlu0 %3245
        %3249 = vset.pattern.permute.xlu0 3
        %3250 = vperm.xlu0 %3249, %v3175
        %v3251 = vpop.permute.xlu0 %3250
        %3254 = vset.pattern.permute.xlu0 3
        %3255 = vperm.xlu0 %3254, %v3176
        %v3256 = vpop.permute.xlu0 %3255
        %v3258 = vlaneseq
        %v3259 = vshrl.u32 %v3258, 7
        %v3260 = vsub.s32 0, %v3259
        %v3261 = vrot.slane %v3177, %v3260
        %v3262 = vadd.f32 %v3181, %v3261
        %v3263 = vadd.f32 %v3186, %v3261
        %v3264 = vadd.f32 %v3191, %v3261
        %v3265 = vadd.f32 %v3196, %v3261
        %v3266 = vadd.f32 %v3201, %v3261
        %v3267 = vadd.f32 %v3206, %v3261
        %v3268 = vadd.f32 %v3211, %v3261
        %v3269 = vadd.f32 %v3216, %v3261
        %v3270 = vadd.f32 %v3221, %v3261
        %v3271 = vadd.f32 %v3226, %v3261
        %v3272 = vadd.f32 %v3231, %v3261
        %v3273 = vadd.f32 %v3236, %v3261
        %v3274 = vadd.f32 %v3241, %v3261
        %v3275 = vadd.f32 %v3246, %v3261
        %v3276 = vadd.f32 %v3251, %v3261
        %v3277 = vadd.f32 %v3256, %v3261
        %v3278 = vmul.f32 %v3262, 0.2
        %v3279 = vmul.f32 %v3263, 0.2
        %v3280 = vmul.f32 %v3264, 0.2
        %v3281 = vmul.f32 %v3265, 0.2
        %v3282 = vmul.f32 %v3266, 0.2
        %v3283 = vmul.f32 %v3267, 0.2
        %v3284 = vmul.f32 %v3268, 0.2
        %v3285 = vmul.f32 %v3269, 0.2
        %v3286 = vmul.f32 %v3270, 0.2
        %v3287 = vmul.f32 %v3271, 0.2
        %v3288 = vmul.f32 %v3272, 0.2
        %v3289 = vmul.f32 %v3273, 0.2
        %v3290 = vmul.f32 %v3274, 0.2
        %v3291 = vmul.f32 %v3275, 0.2
        %v3292 = vmul.f32 %v3276, 0.2
        %v3293 = vmul.f32 %v3277, 0.2
        %v3294 = vmax.f32 %v3262, %v3278
        %v3295 = vmax.f32 %v3263, %v3279
        %v3296 = vmax.f32 %v3264, %v3280
        %v3297 = vmax.f32 %v3265, %v3281
        %v3298 = vmax.f32 %v3266, %v3282
        %v3299 = vmax.f32 %v3267, %v3283
        %v3300 = vmax.f32 %v3268, %v3284
        %v3301 = vmax.f32 %v3269, %v3285
        %v3302 = vmax.f32 %v3270, %v3286
        %v3303 = vmax.f32 %v3271, %v3287
        %v3304 = vmax.f32 %v3272, %v3288
        %v3305 = vmax.f32 %v3273, %v3289
        %v3306 = vmax.f32 %v3274, %v3290
        %v3307 = vmax.f32 %v3275, %v3291
        %v3308 = vmax.f32 %v3276, %v3292
        %v3309 = vmax.f32 %v3277, %v3293
        %v3310 = vsel %vm638, %v3294, -1e+30
        %v3311 = vsel %vm639, %v3295, -1e+30
        %v3312 = vsel %vm640, %v3296, -1e+30
        %v3313 = vsel %vm641, %v3297, -1e+30
        %v3314 = vsel %vm642, %v3298, -1e+30
        %v3315 = vsel %vm643, %v3299, -1e+30
        %v3316 = vsel %vm644, %v3300, -1e+30
        %v3317 = vsel %vm645, %v3301, -1e+30
        %v3318 = vsel %vm646, %v3302, -1e+30
        %v3319 = vsel %vm647, %v3303, -1e+30
        %v3320 = vsel %vm648, %v3304, -1e+30
        %v3321 = vsel %vm649, %v3305, -1e+30
        %v3322 = vsel %vm650, %v3306, -1e+30
        %v3323 = vsel %vm651, %v3307, -1e+30
        %v3324 = vsel %vm652, %v3308, -1e+30
        %v3325 = vsel %vm653, %v3309, -1e+30
        %v3326 = vld [vmem:[#allocation2] sm:$0xff]
        %v3327 = vld [vmem:[#allocation2 + $0x8] sm:$0xff]
        %v3328 = vld [vmem:[#allocation2 + $0x10] sm:$0xff]
        %v3329 = vld [vmem:[#allocation2 + $0x18] sm:$0xff]
        %v3330 = vld [vmem:[#allocation2 + $0x20] sm:$0xff]
        %v3331 = vld [vmem:[#allocation2 + $0x28] sm:$0xff]
        %v3332 = vld [vmem:[#allocation2 + $0x30] sm:$0xff]
        %v3333 = vld [vmem:[#allocation2 + $0x38] sm:$0xff]
        %v3334 = vld [vmem:[#allocation2 + $0x40] sm:$0xff]
        %v3335 = vld [vmem:[#allocation2 + $0x48] sm:$0xff]
        %v3336 = vld [vmem:[#allocation2 + $0x50] sm:$0xff]
        %v3337 = vld [vmem:[#allocation2 + $0x58] sm:$0xff]
        %v3338 = vld [vmem:[#allocation2 + $0x60] sm:$0xff]
        %v3339 = vld [vmem:[#allocation2 + $0x68] sm:$0xff]
        %v3340 = vld [vmem:[#allocation2 + $0x70] sm:$0xff]
        %v3341 = vld [vmem:[#allocation2 + $0x78] sm:$0xff]
        %3342 = vmax.xlane.f32.xlu0 %v3310
        %v3343 = vpop.xlane.xlu0 %3342
        %3344 = vmax.xlane.f32.xlu0 %v3311
        %v3345 = vpop.xlane.xlu0 %3344
        %3346 = vmax.xlane.f32.xlu0 %v3312
        %v3347 = vpop.xlane.xlu0 %3346
        %3348 = vmax.xlane.f32.xlu0 %v3313
        %v3349 = vpop.xlane.xlu0 %3348
        %3350 = vmax.xlane.f32.xlu0 %v3314
        %v3351 = vpop.xlane.xlu0 %3350
        %3352 = vmax.xlane.f32.xlu0 %v3315
        %v3353 = vpop.xlane.xlu0 %3352
        %3354 = vmax.xlane.f32.xlu0 %v3316
        %v3355 = vpop.xlane.xlu0 %3354
        %3356 = vmax.xlane.f32.xlu0 %v3317
        %v3357 = vpop.xlane.xlu0 %3356
        %3358 = vmax.xlane.f32.xlu0 %v3318
        %v3359 = vpop.xlane.xlu0 %3358
        %3360 = vmax.xlane.f32.xlu0 %v3319
        %v3361 = vpop.xlane.xlu0 %3360
        %3362 = vmax.xlane.f32.xlu0 %v3320
        %v3363 = vpop.xlane.xlu0 %3362
        %3364 = vmax.xlane.f32.xlu0 %v3321
        %v3365 = vpop.xlane.xlu0 %3364
        %3366 = vmax.xlane.f32.xlu0 %v3322
        %v3367 = vpop.xlane.xlu0 %3366
        %3368 = vmax.xlane.f32.xlu0 %v3323
        %v3369 = vpop.xlane.xlu0 %3368
        %3370 = vmax.xlane.f32.xlu0 %v3324
        %v3371 = vpop.xlane.xlu0 %3370
        %3372 = vmax.xlane.f32.xlu0 %v3325
        %v3373 = vpop.xlane.xlu0 %3372
        %v3374 = vmax.f32 %v3326, %v3343
        %v3375 = vmax.f32 %v3327, %v3345
        %v3376 = vmax.f32 %v3328, %v3347
        %v3377 = vmax.f32 %v3329, %v3349
        %v3378 = vmax.f32 %v3330, %v3351
        %v3379 = vmax.f32 %v3331, %v3353
        %v3380 = vmax.f32 %v3332, %v3355
        %v3381 = vmax.f32 %v3333, %v3357
        %v3382 = vmax.f32 %v3334, %v3359
        %v3383 = vmax.f32 %v3335, %v3361
        %v3384 = vmax.f32 %v3336, %v3363
        %v3385 = vmax.f32 %v3337, %v3365
        %v3386 = vmax.f32 %v3338, %v3367
        %v3387 = vmax.f32 %v3339, %v3369
        %v3388 = vmax.f32 %v3340, %v3371
        %v3389 = vmax.f32 %v3341, %v3373
        %v3390 = vsub.f32 %v3326, %v3374
        %v3391 = vsub.f32 %v3327, %v3375
        %v3392 = vsub.f32 %v3328, %v3376
        %v3393 = vsub.f32 %v3329, %v3377
        %v3394 = vsub.f32 %v3330, %v3378
        %v3395 = vsub.f32 %v3331, %v3379
        %v3396 = vsub.f32 %v3332, %v3380
        %v3397 = vsub.f32 %v3333, %v3381
        %v3398 = vsub.f32 %v3334, %v3382
        %v3399 = vsub.f32 %v3335, %v3383
        %v3400 = vsub.f32 %v3336, %v3384
        %v3401 = vsub.f32 %v3337, %v3385
        %v3402 = vsub.f32 %v3338, %v3386
        %v3403 = vsub.f32 %v3339, %v3387
        %v3404 = vsub.f32 %v3340, %v3388
        %v3405 = vsub.f32 %v3341, %v3389
        %v3406 = vmul.f32 %v3390, 1.442695
        %v3407 = vpow.pop %v3406
        %v3408 = vmul.f32 %v3391, 1.442695
        %v3409 = vpow.pop %v3408
        %v3410 = vmul.f32 %v3392, 1.442695
        %v3411 = vpow.pop %v3410
        %v3412 = vmul.f32 %v3393, 1.442695
        %v3413 = vpow.pop %v3412
        %v3414 = vmul.f32 %v3394, 1.442695
        %v3415 = vpow.pop %v3414
        %v3416 = vmul.f32 %v3395, 1.442695
        %v3417 = vpow.pop %v3416
        %v3418 = vmul.f32 %v3396, 1.442695
        %v3419 = vpow.pop %v3418
        %v3420 = vmul.f32 %v3397, 1.442695
        %v3421 = vpow.pop %v3420
        %v3422 = vmul.f32 %v3398, 1.442695
        %v3423 = vpow.pop %v3422
        %v3424 = vmul.f32 %v3399, 1.442695
        %v3425 = vpow.pop %v3424
        %v3426 = vmul.f32 %v3400, 1.442695
        %v3427 = vpow.pop %v3426
        %v3428 = vmul.f32 %v3401, 1.442695
        %v3429 = vpow.pop %v3428
        %v3430 = vmul.f32 %v3402, 1.442695
        %v3431 = vpow.pop %v3430
        %v3432 = vmul.f32 %v3403, 1.442695
        %v3433 = vpow.pop %v3432
        %v3434 = vmul.f32 %v3404, 1.442695
        %v3435 = vpow.pop %v3434
        %v3436 = vmul.f32 %v3405, 1.442695
        %v3437 = vpow.pop %v3436
        %3439 = vset.pattern.permute.xlu0 3
        %3440 = vperm.xlu0 %3439, %v3374
        %v3441 = vpop.permute.xlu0 %3440
        %3444 = vset.pattern.permute.xlu0 3
        %3445 = vperm.xlu0 %3444, %v3375
        %v3446 = vpop.permute.xlu0 %3445
        %3449 = vset.pattern.permute.xlu0 3
        %3450 = vperm.xlu0 %3449, %v3376
        %v3451 = vpop.permute.xlu0 %3450
        %3454 = vset.pattern.permute.xlu0 3
        %3455 = vperm.xlu0 %3454, %v3377
        %v3456 = vpop.permute.xlu0 %3455
        %3459 = vset.pattern.permute.xlu0 3
        %3460 = vperm.xlu0 %3459, %v3378
        %v3461 = vpop.permute.xlu0 %3460
        %3464 = vset.pattern.permute.xlu0 3
        %3465 = vperm.xlu0 %3464, %v3379
        %v3466 = vpop.permute.xlu0 %3465
        %3469 = vset.pattern.permute.xlu0 3
        %3470 = vperm.xlu0 %3469, %v3380
        %v3471 = vpop.permute.xlu0 %3470
        %3474 = vset.pattern.permute.xlu0 3
        %3475 = vperm.xlu0 %3474, %v3381
        %v3476 = vpop.permute.xlu0 %3475
        %3479 = vset.pattern.permute.xlu0 3
        %3480 = vperm.xlu0 %3479, %v3382
        %v3481 = vpop.permute.xlu0 %3480
        %3484 = vset.pattern.permute.xlu0 3
        %3485 = vperm.xlu0 %3484, %v3383
        %v3486 = vpop.permute.xlu0 %3485
        %3489 = vset.pattern.permute.xlu0 3
        %3490 = vperm.xlu0 %3489, %v3384
        %v3491 = vpop.permute.xlu0 %3490
        %3494 = vset.pattern.permute.xlu0 3
        %3495 = vperm.xlu0 %3494, %v3385
        %v3496 = vpop.permute.xlu0 %3495
        %3499 = vset.pattern.permute.xlu0 3
        %3500 = vperm.xlu0 %3499, %v3386
        %v3501 = vpop.permute.xlu0 %3500
        %3504 = vset.pattern.permute.xlu0 3
        %3505 = vperm.xlu0 %3504, %v3387
        %v3506 = vpop.permute.xlu0 %3505
        %3509 = vset.pattern.permute.xlu0 3
        %3510 = vperm.xlu0 %3509, %v3388
        %v3511 = vpop.permute.xlu0 %3510
        %3514 = vset.pattern.permute.xlu0 3
        %3515 = vperm.xlu0 %3514, %v3389
        %v3516 = vpop.permute.xlu0 %3515
        %v3518 = vsub.f32 %v3310, %v3441
        %v3519 = vsub.f32 %v3311, %v3446
        %v3520 = vsub.f32 %v3312, %v3451
        %v3521 = vsub.f32 %v3313, %v3456
        %v3522 = vsub.f32 %v3314, %v3461
        %v3523 = vsub.f32 %v3315, %v3466
        %v3524 = vsub.f32 %v3316, %v3471
        %v3525 = vsub.f32 %v3317, %v3476
        %v3526 = vsub.f32 %v3318, %v3481
        %v3527 = vsub.f32 %v3319, %v3486
        %v3528 = vsub.f32 %v3320, %v3491
        %v3529 = vsub.f32 %v3321, %v3496
        %v3530 = vsub.f32 %v3322, %v3501
        %v3531 = vsub.f32 %v3323, %v3506
        %v3532 = vsub.f32 %v3324, %v3511
        %v3533 = vsub.f32 %v3325, %v3516
        %v3534 = vmul.f32 %v3518, 1.442695
        %v3535 = vpow.pop %v3534
        %v3536 = vmul.f32 %v3519, 1.442695
        %v3537 = vpow.pop %v3536
        %v3538 = vmul.f32 %v3520, 1.442695
        %v3539 = vpow.pop %v3538
        %v3540 = vmul.f32 %v3521, 1.442695
        %v3541 = vpow.pop %v3540
        %v3542 = vmul.f32 %v3522, 1.442695
        %v3543 = vpow.pop %v3542
        %v3544 = vmul.f32 %v3523, 1.442695
        %v3545 = vpow.pop %v3544
        %v3546 = vmul.f32 %v3524, 1.442695
        %v3547 = vpow.pop %v3546
        %v3548 = vmul.f32 %v3525, 1.442695
        %v3549 = vpow.pop %v3548
        %v3550 = vmul.f32 %v3526, 1.442695
        %v3551 = vpow.pop %v3550
        %v3552 = vmul.f32 %v3527, 1.442695
        %v3553 = vpow.pop %v3552
        %v3554 = vmul.f32 %v3528, 1.442695
        %v3555 = vpow.pop %v3554
        %v3556 = vmul.f32 %v3529, 1.442695
        %v3557 = vpow.pop %v3556
        %v3558 = vmul.f32 %v3530, 1.442695
        %v3559 = vpow.pop %v3558
        %v3560 = vmul.f32 %v3531, 1.442695
        %v3561 = vpow.pop %v3560
        %v3562 = vmul.f32 %v3532, 1.442695
        %v3563 = vpow.pop %v3562
        %v3564 = vmul.f32 %v3533, 1.442695
        %v3565 = vpow.pop %v3564
        %v3566 = vld [vmem:[#allocation3] sm:$0xff]
        %v3567 = vld [vmem:[#allocation3 + $0x8] sm:$0xff]
        %v3568 = vld [vmem:[#allocation3 + $0x10] sm:$0xff]
        %v3569 = vld [vmem:[#allocation3 + $0x18] sm:$0xff]
        %v3570 = vld [vmem:[#allocation3 + $0x20] sm:$0xff]
        %v3571 = vld [vmem:[#allocation3 + $0x28] sm:$0xff]
        %v3572 = vld [vmem:[#allocation3 + $0x30] sm:$0xff]
        %v3573 = vld [vmem:[#allocation3 + $0x38] sm:$0xff]
        %v3574 = vld [vmem:[#allocation3 + $0x40] sm:$0xff]
        %v3575 = vld [vmem:[#allocation3 + $0x48] sm:$0xff]
        %v3576 = vld [vmem:[#allocation3 + $0x50] sm:$0xff]
        %v3577 = vld [vmem:[#allocation3 + $0x58] sm:$0xff]
        %v3578 = vld [vmem:[#allocation3 + $0x60] sm:$0xff]
        %v3579 = vld [vmem:[#allocation3 + $0x68] sm:$0xff]
        %v3580 = vld [vmem:[#allocation3 + $0x70] sm:$0xff]
        %v3581 = vld [vmem:[#allocation3 + $0x78] sm:$0xff]
        %v3582 = vmul.f32 %v3407, %v3566
        %v3583 = vmul.f32 %v3409, %v3567
        %v3584 = vmul.f32 %v3411, %v3568
        %v3585 = vmul.f32 %v3413, %v3569
        %v3586 = vmul.f32 %v3415, %v3570
        %v3587 = vmul.f32 %v3417, %v3571
        %v3588 = vmul.f32 %v3419, %v3572
        %v3589 = vmul.f32 %v3421, %v3573
        %v3590 = vmul.f32 %v3423, %v3574
        %v3591 = vmul.f32 %v3425, %v3575
        %v3592 = vmul.f32 %v3427, %v3576
        %v3593 = vmul.f32 %v3429, %v3577
        %v3594 = vmul.f32 %v3431, %v3578
        %v3595 = vmul.f32 %v3433, %v3579
        %v3596 = vmul.f32 %v3435, %v3580
        %v3597 = vmul.f32 %v3437, %v3581
        %3598 = vadd.xlane.f32.xlu0 %v3535
        %v3599 = vpop.xlane.xlu0 %3598
        %3600 = vadd.xlane.f32.xlu0 %v3537
        %v3601 = vpop.xlane.xlu0 %3600
        %3602 = vadd.xlane.f32.xlu0 %v3539
        %v3603 = vpop.xlane.xlu0 %3602
        %3604 = vadd.xlane.f32.xlu0 %v3541
        %v3605 = vpop.xlane.xlu0 %3604
        %3606 = vadd.xlane.f32.xlu0 %v3543
        %v3607 = vpop.xlane.xlu0 %3606
        %3608 = vadd.xlane.f32.xlu0 %v3545
        %v3609 = vpop.xlane.xlu0 %3608
        %3610 = vadd.xlane.f32.xlu0 %v3547
        %v3611 = vpop.xlane.xlu0 %3610
        %3612 = vadd.xlane.f32.xlu0 %v3549
        %v3613 = vpop.xlane.xlu0 %3612
        %3614 = vadd.xlane.f32.xlu0 %v3551
        %v3615 = vpop.xlane.xlu0 %3614
        %3616 = vadd.xlane.f32.xlu0 %v3553
        %v3617 = vpop.xlane.xlu0 %3616
        %3618 = vadd.xlane.f32.xlu0 %v3555
        %v3619 = vpop.xlane.xlu0 %3618
        %3620 = vadd.xlane.f32.xlu0 %v3557
        %v3621 = vpop.xlane.xlu0 %3620
        %3622 = vadd.xlane.f32.xlu0 %v3559
        %v3623 = vpop.xlane.xlu0 %3622
        %3624 = vadd.xlane.f32.xlu0 %v3561
        %v3625 = vpop.xlane.xlu0 %3624
        %3626 = vadd.xlane.f32.xlu0 %v3563
        %v3627 = vpop.xlane.xlu0 %3626
        %3628 = vadd.xlane.f32.xlu0 %v3565
        %v3629 = vpop.xlane.xlu0 %3628
        %v3630 = vadd.f32 %v3582, %v3599
        %v3631 = vadd.f32 %v3583, %v3601
        %v3632 = vadd.f32 %v3584, %v3603
        %v3633 = vadd.f32 %v3585, %v3605
        %v3634 = vadd.f32 %v3586, %v3607
        %v3635 = vadd.f32 %v3587, %v3609
        %v3636 = vadd.f32 %v3588, %v3611
        %v3637 = vadd.f32 %v3589, %v3613
        %v3638 = vadd.f32 %v3590, %v3615
        %v3639 = vadd.f32 %v3591, %v3617
        %v3640 = vadd.f32 %v3592, %v3619
        %v3641 = vadd.f32 %v3593, %v3621
        %v3642 = vadd.f32 %v3594, %v3623
        %v3643 = vadd.f32 %v3595, %v3625
        %v3644 = vadd.f32 %v3596, %v3627
        %v3645 = vadd.f32 %v3597, %v3629
        %vm3646 = vcmask 31768
        %3647 = vst.msk [vmem:[#allocation3] sm:$0xff] %vm3646, %v3630
        %3648 = vst.msk [vmem:[#allocation3 + $0x8] sm:$0xff] %vm3646, %v3631
        %3649 = vst.msk [vmem:[#allocation3 + $0x10] sm:$0xff] %vm3646, %v3632
        %3650 = vst.msk [vmem:[#allocation3 + $0x18] sm:$0xff] %vm3646, %v3633
        %3651 = vst.msk [vmem:[#allocation3 + $0x20] sm:$0xff] %vm3646, %v3634
        %3652 = vst.msk [vmem:[#allocation3 + $0x28] sm:$0xff] %vm3646, %v3635
        %3653 = vst.msk [vmem:[#allocation3 + $0x30] sm:$0xff] %vm3646, %v3636
        %3654 = vst.msk [vmem:[#allocation3 + $0x38] sm:$0xff] %vm3646, %v3637
        %3655 = vst.msk [vmem:[#allocation3 + $0x40] sm:$0xff] %vm3646, %v3638
        %3656 = vst.msk [vmem:[#allocation3 + $0x48] sm:$0xff] %vm3646, %v3639
        %3657 = vst.msk [vmem:[#allocation3 + $0x50] sm:$0xff] %vm3646, %v3640
        %3658 = vst.msk [vmem:[#allocation3 + $0x58] sm:$0xff] %vm3646, %v3641
        %3659 = vst.msk [vmem:[#allocation3 + $0x60] sm:$0xff] %vm3646, %v3642
        %3660 = vst.msk [vmem:[#allocation3 + $0x68] sm:$0xff] %vm3646, %v3643
        %3661 = vst.msk [vmem:[#allocation3 + $0x70] sm:$0xff] %vm3646, %v3644
        %3662 = vst.msk [vmem:[#allocation3 + $0x78] sm:$0xff] %vm3646, %v3645
        %3663 = vst.msk [vmem:[#allocation2] sm:$0xff] %vm3646, %v3374
        %3664 = vst.msk [vmem:[#allocation2 + $0x8] sm:$0xff] %vm3646, %v3375
        %3665 = vst.msk [vmem:[#allocation2 + $0x10] sm:$0xff] %vm3646, %v3376
        %3666 = vst.msk [vmem:[#allocation2 + $0x18] sm:$0xff] %vm3646, %v3377
        %3667 = vst.msk [vmem:[#allocation2 + $0x20] sm:$0xff] %vm3646, %v3378
        %3668 = vst.msk [vmem:[#allocation2 + $0x28] sm:$0xff] %vm3646, %v3379
        %3669 = vst.msk [vmem:[#allocation2 + $0x30] sm:$0xff] %vm3646, %v3380
        %3670 = vst.msk [vmem:[#allocation2 + $0x38] sm:$0xff] %vm3646, %v3381
        %3671 = vst.msk [vmem:[#allocation2 + $0x40] sm:$0xff] %vm3646, %v3382
        %3672 = vst.msk [vmem:[#allocation2 + $0x48] sm:$0xff] %vm3646, %v3383
        %3673 = vst.msk [vmem:[#allocation2 + $0x50] sm:$0xff] %vm3646, %v3384
        %3674 = vst.msk [vmem:[#allocation2 + $0x58] sm:$0xff] %vm3646, %v3385
        %3675 = vst.msk [vmem:[#allocation2 + $0x60] sm:$0xff] %vm3646, %v3386
        %3676 = vst.msk [vmem:[#allocation2 + $0x68] sm:$0xff] %vm3646, %v3387
        %3677 = vst.msk [vmem:[#allocation2 + $0x70] sm:$0xff] %vm3646, %v3388
        %3678 = vst.msk [vmem:[#allocation2 + $0x78] sm:$0xff] %vm3646, %v3389
        %v3679 = vld [vmem:[%s315] sm:$0xf]
        %v3680 = vld [vmem:[%s315 + $0x4] sm:$0xf]
        %v3681 = vld [vmem:[%s315 + $0x8] sm:$0xf]
        %v3682 = vld [vmem:[%s315 + $0xc] sm:$0xf]
        %v3683 = vld [vmem:[%s315 + $0x10] sm:$0xf]
        %v3684 = vld [vmem:[%s315 + $0x14] sm:$0xf]
        %v3685 = vld [vmem:[%s315 + $0x18] sm:$0xf]
        %v3686 = vld [vmem:[%s315 + $0x1c] sm:$0xf]
        %v3687 = vld [vmem:[%s315 + $0x20] sm:$0xf]
        %v3688 = vld [vmem:[%s315 + $0x24] sm:$0xf]
        %v3689 = vld [vmem:[%s315 + $0x28] sm:$0xf]
        %v3690 = vld [vmem:[%s315 + $0x2c] sm:$0xf]
        %v3691 = vld [vmem:[%s315 + $0x30] sm:$0xf]
        %v3692 = vld [vmem:[%s315 + $0x34] sm:$0xf]
        %v3693 = vld [vmem:[%s315 + $0x38] sm:$0xf]
        %v3694 = vld [vmem:[%s315 + $0x3c] sm:$0xf]
        %v3695 = vpack.c.bf16 %v3537, %v3535
        %v3696 = vpack.c.bf16 %v3541, %v3539
        %v3697 = vpack.c.bf16 %v3545, %v3543
        %v3698 = vpack.c.bf16 %v3549, %v3547
        %v3699 = vpack.c.bf16 %v3553, %v3551
        %v3700 = vpack.c.bf16 %v3557, %v3555
        %v3701 = vpack.c.bf16 %v3561, %v3559
        %v3702 = vpack.c.bf16 %v3565, %v3563
        %v3719 = vunpack.c.l.b16 %v3679
        %v3720 = vunpack.c.l.b16 %v3680
        %v3721 = vunpack.c.l.b16 %v3681
        %v3722 = vunpack.c.l.b16 %v3682
        %v3723 = vunpack.c.l.b16 %v3683
        %v3724 = vunpack.c.l.b16 %v3684
        %v3725 = vunpack.c.l.b16 %v3685
        %v3726 = vunpack.c.l.b16 %v3686
        %v3727 = vunpack.c.l.b16 %v3687
        %v3728 = vunpack.c.l.b16 %v3688
        %v3729 = vunpack.c.l.b16 %v3689
        %v3730 = vunpack.c.l.b16 %v3690
        %v3731 = vunpack.c.l.b16 %v3691
        %v3732 = vunpack.c.l.b16 %v3692
        %v3733 = vunpack.c.l.b16 %v3693
        %v3734 = vunpack.c.l.b16 %v3694
        %v3735 = vpack.c.b16 %v3720, %v3719
        %v3736 = vpack.c.b16 %v3722, %v3721
        %v3737 = vpack.c.b16 %v3724, %v3723
        %v3738 = vpack.c.b16 %v3726, %v3725
        %v3739 = vpack.c.b16 %v3728, %v3727
        %v3740 = vpack.c.b16 %v3730, %v3729
        %v3741 = vpack.c.b16 %v3732, %v3731
        %v3742 = vpack.c.b16 %v3734, %v3733
        %3743 = vrot.lane.b32.xlu0 %v3735, 80
        %v3744 = vpop.permute.xlu0 %3743
        %3745 = vrot.lane.b32.xlu0 %v3736, 80
        %v3746 = vpop.permute.xlu0 %3745
        %3747 = vrot.lane.b32.xlu0 %v3737, 80
        %v3748 = vpop.permute.xlu0 %3747
        %3749 = vrot.lane.b32.xlu0 %v3738, 80
        %v3750 = vpop.permute.xlu0 %3749
        %3751 = vrot.lane.b32.xlu0 %v3739, 80
        %v3752 = vpop.permute.xlu0 %3751
        %3753 = vrot.lane.b32.xlu0 %v3740, 80
        %v3754 = vpop.permute.xlu0 %3753
        %3755 = vrot.lane.b32.xlu0 %v3741, 80
        %v3756 = vpop.permute.xlu0 %3755
        %3757 = vrot.lane.b32.xlu0 %v3742, 80
        %v3758 = vpop.permute.xlu0 %3757
        %3767 = vmatprep.subr.bf16.mxu0 0
        %3768 = vmatpush1.bf16.msra.mxu0 %v3744
        %3769 = vmatprep.subr.bf16.mxu0 0
        %3770 = vmatpush1.bf16.msra.mxu0 %v3746
        %3771 = vmatprep.subr.bf16.mxu0 0
        %3772 = vmatpush1.bf16.msra.mxu0 %v3748
        %3773 = vmatprep.subr.bf16.mxu0 0
        %3774 = vmatpush1.bf16.msra.mxu0 %v3750
        %3775 = vmatprep.subr.bf16.mxu0 0
        %3776 = vmatpush1.bf16.msra.mxu0 %v3752
        %3777 = vmatprep.subr.bf16.mxu0 0
        %3778 = vmatpush1.bf16.msra.mxu0 %v3754
        %3779 = vmatprep.subr.bf16.mxu0 0
        %3780 = vmatpush1.bf16.msra.mxu0 %v3756
        %3781 = vmatprep.subr.bf16.mxu0 0
        %3782 = vmatpush1.bf16.msra.mxu0 %v3758
        %3783 = vmatprep.subr.bf16.mxu0 0
        %3784 = vmatpush1.bf16.msra.mxu0 0
        %3785 = vmatprep.subr.bf16.mxu0 0
        %3786 = vmatpush1.bf16.msra.mxu0 0
        %3787 = vmatprep.subr.bf16.mxu0 0
        %3788 = vmatpush1.bf16.msra.mxu0 0
        %3789 = vmatprep.subr.bf16.mxu0 0
        %3790 = vmatpush1.bf16.msra.mxu0 0
        %3791 = vmatprep.subr.bf16.mxu0 0
        %3792 = vmatpush1.bf16.msra.mxu0 0
        %3793 = vmatprep.subr.bf16.mxu0 0
        %3794 = vmatpush1.bf16.msra.mxu0 0
        %3795 = vmatprep.subr.bf16.mxu0 0
        %3796 = vmatpush1.bf16.msra.mxu0 0
        %3797 = vmatprep.subr.bf16.mxu0 0
        %3798 = vmatpush1.bf16.msra.mxu0 0
        %3799 = vmatprep.mubr.bf16.mxu0 0
        %3800 = vmatmul.mubr.bf16.gmra.mrb[0].mxu0 %v3695
        %v3801 = vpop.f32.mrb[0].mxu0
        %v3802 = vadd.f32 0.0, %v3801
        %v3803 = vpop.f32.mrb[0].mxu0
        %v3804 = vpop.f32.mrb[0].mxu0
        %v3805 = vadd.f32 0.0, %v3804
        %v3806 = vpop.f32.mrb[0].mxu0
        %3807 = vmatprep.mubr.bf16.mxu0 0
        %3808 = vmatmul.mubr.bf16.gmra.mrb[0].mxu0 %v3696
        %v3809 = vpop.f32.mrb[0].mxu0
        %v3810 = vadd.f32 0.0, %v3809
        %v3811 = vpop.f32.mrb[0].mxu0
        %v3812 = vpop.f32.mrb[0].mxu0
        %v3813 = vadd.f32 0.0, %v3812
        %v3814 = vpop.f32.mrb[0].mxu0
        %3815 = vmatprep.mubr.bf16.mxu0 0
        %3816 = vmatmul.mubr.bf16.gmra.mrb[0].mxu0 %v3697
        %v3817 = vpop.f32.mrb[0].mxu0
        %v3818 = vadd.f32 0.0, %v3817
        %v3819 = vpop.f32.mrb[0].mxu0
        %v3820 = vpop.f32.mrb[0].mxu0
        %v3821 = vadd.f32 0.0, %v3820
        %v3822 = vpop.f32.mrb[0].mxu0
        %3823 = vmatprep.mubr.bf16.mxu0 0
        %3824 = vmatmul.mubr.bf16.gmra.mrb[0].mxu0 %v3698
        %v3825 = vpop.f32.mrb[0].mxu0
        %v3826 = vadd.f32 0.0, %v3825
        %v3827 = vpop.f32.mrb[0].mxu0
        %v3828 = vpop.f32.mrb[0].mxu0
        %v3829 = vadd.f32 0.0, %v3828
        %v3830 = vpop.f32.mrb[0].mxu0
        %3831 = vmatprep.mubr.bf16.mxu0 0
        %3832 = vmatmul.mubr.bf16.gmra.mrb[0].mxu0 %v3699
        %v3833 = vpop.f32.mrb[0].mxu0
        %v3834 = vadd.f32 0.0, %v3833
        %v3835 = vpop.f32.mrb[0].mxu0
        %v3836 = vpop.f32.mrb[0].mxu0
        %v3837 = vadd.f32 0.0, %v3836
        %v3838 = vpop.f32.mrb[0].mxu0
        %3839 = vmatprep.mubr.bf16.mxu0 0
        %3840 = vmatmul.mubr.bf16.gmra.mrb[0].mxu0 %v3700
        %v3841 = vpop.f32.mrb[0].mxu0
        %v3842 = vadd.f32 0.0, %v3841
        %v3843 = vpop.f32.mrb[0].mxu0
        %v3844 = vpop.f32.mrb[0].mxu0
        %v3845 = vadd.f32 0.0, %v3844
        %v3846 = vpop.f32.mrb[0].mxu0
        %3847 = vmatprep.mubr.bf16.mxu0 0
        %3848 = vmatmul.mubr.bf16.gmra.mrb[0].mxu0 %v3701
        %v3849 = vpop.f32.mrb[0].mxu0
        %v3850 = vadd.f32 0.0, %v3849
        %v3851 = vpop.f32.mrb[0].mxu0
        %v3852 = vpop.f32.mrb[0].mxu0
        %v3853 = vadd.f32 0.0, %v3852
        %v3854 = vpop.f32.mrb[0].mxu0
        %3855 = vmatprep.mubr.bf16.mxu0 0
        %3856 = vmatmul.mubr.bf16.gmra.mrb[0].mxu0 %v3702
        %v3857 = vpop.f32.mrb[0].mxu0
        %v3858 = vadd.f32 0.0, %v3857
        %v3859 = vpop.f32.mrb[0].mxu0
        %v3860 = vpop.f32.mrb[0].mxu0
        %v3861 = vadd.f32 0.0, %v3860
        %v3862 = vpop.f32.mrb[0].mxu0
        %3863 = vdwg.mxu0
        %v3864 = vld [vmem:[#allocation4] sm:$0xff]
        %v3865 = vld [vmem:[#allocation4 + $0x8] sm:$0xff]
        %v3866 = vld [vmem:[#allocation4 + $0x10] sm:$0xff]
        %v3867 = vld [vmem:[#allocation4 + $0x18] sm:$0xff]
        %v3868 = vld [vmem:[#allocation4 + $0x20] sm:$0xff]
        %v3869 = vld [vmem:[#allocation4 + $0x28] sm:$0xff]
        %v3870 = vld [vmem:[#allocation4 + $0x30] sm:$0xff]
        %v3871 = vld [vmem:[#allocation4 + $0x38] sm:$0xff]
        %v3872 = vld [vmem:[#allocation4 + $0x40] sm:$0xff]
        %v3873 = vld [vmem:[#allocation4 + $0x48] sm:$0xff]
        %v3874 = vld [vmem:[#allocation4 + $0x50] sm:$0xff]
        %v3875 = vld [vmem:[#allocation4 + $0x58] sm:$0xff]
        %v3876 = vld [vmem:[#allocation4 + $0x60] sm:$0xff]
        %v3877 = vld [vmem:[#allocation4 + $0x68] sm:$0xff]
        %v3878 = vld [vmem:[#allocation4 + $0x70] sm:$0xff]
        %v3879 = vld [vmem:[#allocation4 + $0x78] sm:$0xff]
        %3881 = vset.pattern.permute.xlu0 3
        %3882 = vperm.xlu0 %3881, %v3407
        %v3883 = vpop.permute.xlu0 %3882
        %3886 = vset.pattern.permute.xlu0 3
        %3887 = vperm.xlu0 %3886, %v3409
        %v3888 = vpop.permute.xlu0 %3887
        %3891 = vset.pattern.permute.xlu0 3
        %3892 = vperm.xlu0 %3891, %v3411
        %v3893 = vpop.permute.xlu0 %3892
        %3896 = vset.pattern.permute.xlu0 3
        %3897 = vperm.xlu0 %3896, %v3413
        %v3898 = vpop.permute.xlu0 %3897
        %3901 = vset.pattern.permute.xlu0 3
        %3902 = vperm.xlu0 %3901, %v3415
        %v3903 = vpop.permute.xlu0 %3902
        %3906 = vset.pattern.permute.xlu0 3
        %3907 = vperm.xlu0 %3906, %v3417
        %v3908 = vpop.permute.xlu0 %3907
        %3911 = vset.pattern.permute.xlu0 3
        %3912 = vperm.xlu0 %3911, %v3419
        %v3913 = vpop.permute.xlu0 %3912
        %3916 = vset.pattern.permute.xlu0 3
        %3917 = vperm.xlu0 %3916, %v3421
        %v3918 = vpop.permute.xlu0 %3917
        %3921 = vset.pattern.permute.xlu0 3
        %3922 = vperm.xlu0 %3921, %v3423
        %v3923 = vpop.permute.xlu0 %3922
        %3926 = vset.pattern.permute.xlu0 3
        %3927 = vperm.xlu0 %3926, %v3425
        %v3928 = vpop.permute.xlu0 %3927
        %3931 = vset.pattern.permute.xlu0 3
        %3932 = vperm.xlu0 %3931, %v3427
        %v3933 = vpop.permute.xlu0 %3932
        %3936 = vset.pattern.permute.xlu0 3
        %3937 = vperm.xlu0 %3936, %v3429
        %v3938 = vpop.permute.xlu0 %3937
        %3941 = vset.pattern.permute.xlu0 3
        %3942 = vperm.xlu0 %3941, %v3431
        %v3943 = vpop.permute.xlu0 %3942
        %3946 = vset.pattern.permute.xlu0 3
        %3947 = vperm.xlu0 %3946, %v3433
        %v3948 = vpop.permute.xlu0 %3947
        %3951 = vset.pattern.permute.xlu0 3
        %3952 = vperm.xlu0 %3951, %v3435
        %v3953 = vpop.permute.xlu0 %3952
        %3956 = vset.pattern.permute.xlu0 3
        %3957 = vperm.xlu0 %3956, %v3437
        %v3958 = vpop.permute.xlu0 %3957
        %v3960 = vmul.f32 %v3883, %v3864
        %v3961 = vmul.f32 %v3888, %v3865
        %v3962 = vmul.f32 %v3893, %v3866
        %v3963 = vmul.f32 %v3898, %v3867
        %v3964 = vmul.f32 %v3903, %v3868
        %v3965 = vmul.f32 %v3908, %v3869
        %v3966 = vmul.f32 %v3913, %v3870
        %v3967 = vmul.f32 %v3918, %v3871
        %v3968 = vmul.f32 %v3923, %v3872
        %v3969 = vmul.f32 %v3928, %v3873
        %v3970 = vmul.f32 %v3933, %v3874
        %v3971 = vmul.f32 %v3938, %v3875
        %v3972 = vmul.f32 %v3943, %v3876
        %v3973 = vmul.f32 %v3948, %v3877
        %v3974 = vmul.f32 %v3953, %v3878
        %v3975 = vmul.f32 %v3958, %v3879
        %3992 = vrot.lane.b32.xlu0 %v3802, 48
        %v3993 = vpop.permute.xlu0 %3992
        %3994 = vrot.lane.b32.xlu0 %v3805, 48
        %v3995 = vpop.permute.xlu0 %3994
        %3996 = vrot.lane.b32.xlu0 %v3810, 48
        %v3997 = vpop.permute.xlu0 %3996
        %3998 = vrot.lane.b32.xlu0 %v3813, 48
        %v3999 = vpop.permute.xlu0 %3998
        %4000 = vrot.lane.b32.xlu0 %v3818, 48
        %v4001 = vpop.permute.xlu0 %4000
        %4002 = vrot.lane.b32.xlu0 %v3821, 48
        %v4003 = vpop.permute.xlu0 %4002
        %4004 = vrot.lane.b32.xlu0 %v3826, 48
        %v4005 = vpop.permute.xlu0 %4004
        %4006 = vrot.lane.b32.xlu0 %v3829, 48
        %v4007 = vpop.permute.xlu0 %4006
        %4008 = vrot.lane.b32.xlu0 %v3834, 48
        %v4009 = vpop.permute.xlu0 %4008
        %4010 = vrot.lane.b32.xlu0 %v3837, 48
        %v4011 = vpop.permute.xlu0 %4010
        %4012 = vrot.lane.b32.xlu0 %v3842, 48
        %v4013 = vpop.permute.xlu0 %4012
        %4014 = vrot.lane.b32.xlu0 %v3845, 48
        %v4015 = vpop.permute.xlu0 %4014
        %4016 = vrot.lane.b32.xlu0 %v3850, 48
        %v4017 = vpop.permute.xlu0 %4016
        %4018 = vrot.lane.b32.xlu0 %v3853, 48
        %v4019 = vpop.permute.xlu0 %4018
        %4020 = vrot.lane.b32.xlu0 %v3858, 48
        %v4021 = vpop.permute.xlu0 %4020
        %4022 = vrot.lane.b32.xlu0 %v3861, 48
        %v4023 = vpop.permute.xlu0 %4022
        %v4040 = vadd.f32 %v3960, %v3993
        %v4041 = vadd.f32 %v3961, %v3995
        %v4042 = vadd.f32 %v3962, %v3997
        %v4043 = vadd.f32 %v3963, %v3999
        %v4044 = vadd.f32 %v3964, %v4001
        %v4045 = vadd.f32 %v3965, %v4003
        %v4046 = vadd.f32 %v3966, %v4005
        %v4047 = vadd.f32 %v3967, %v4007
        %v4048 = vadd.f32 %v3968, %v4009
        %v4049 = vadd.f32 %v3969, %v4011
        %v4050 = vadd.f32 %v3970, %v4013
        %v4051 = vadd.f32 %v3971, %v4015
        %v4052 = vadd.f32 %v3972, %v4017
        %v4053 = vadd.f32 %v3973, %v4019
        %v4054 = vadd.f32 %v3974, %v4021
        %v4055 = vadd.f32 %v3975, %v4023
        %vm4056 = vcmask 523648
        %4057 = vst.msk [vmem:[#allocation4] sm:$0xff] %vm4056, %v4040
        %4058 = vst.msk [vmem:[#allocation4 + $0x8] sm:$0xff] %vm4056, %v4041
        %4059 = vst.msk [vmem:[#allocation4 + $0x10] sm:$0xff] %vm4056, %v4042
        %4060 = vst.msk [vmem:[#allocation4 + $0x18] sm:$0xff] %vm4056, %v4043
        %4061 = vst.msk [vmem:[#allocation4 + $0x20] sm:$0xff] %vm4056, %v4044
        %4062 = vst.msk [vmem:[#allocation4 + $0x28] sm:$0xff] %vm4056, %v4045
        %4063 = vst.msk [vmem:[#allocation4 + $0x30] sm:$0xff] %vm4056, %v4046
        %4064 = vst.msk [vmem:[#allocation4 + $0x38] sm:$0xff] %vm4056, %v4047
        %4065 = vst.msk [vmem:[#allocation4 + $0x40] sm:$0xff] %vm4056, %v4048
        %4066 = vst.msk [vmem:[#allocation4 + $0x48] sm:$0xff] %vm4056, %v4049
        %4067 = vst.msk [vmem:[#allocation4 + $0x50] sm:$0xff] %vm4056, %v4050
        %4068 = vst.msk [vmem:[#allocation4 + $0x58] sm:$0xff] %vm4056, %v4051
        %4069 = vst.msk [vmem:[#allocation4 + $0x60] sm:$0xff] %vm4056, %v4052
        %4070 = vst.msk [vmem:[#allocation4 + $0x68] sm:$0xff] %vm4056, %v4053
        %4071 = vst.msk [vmem:[#allocation4 + $0x70] sm:$0xff] %vm4056, %v4054
        %4072 = vst.msk [vmem:[#allocation4 + $0x78] sm:$0xff] %vm4056, %v4055
        %p4073 = scmp.eq.s32.totalorder %s20, 1
        // Predicated region
        $region79: #{tpu_custom_call.1} parent=69 // pred_check
          %p4074 = pneg %p4073
        $region80: #{tpu_custom_call.1} parent=69 // pred_check_branch
          %4076 = sbr.rel (%p4074) target = $region82
        $region81: #{tpu_custom_call.1} parent=69 // pred_region
          %v4077 = vld [vmem:[#allocation3] sm:$0xff]
          %v4078 = vld [vmem:[#allocation3 + $0x8] sm:$0xff]
          %v4079 = vld [vmem:[#allocation3 + $0x10] sm:$0xff]
          %v4080 = vld [vmem:[#allocation3 + $0x18] sm:$0xff]
          %v4081 = vld [vmem:[#allocation3 + $0x20] sm:$0xff]
          %v4082 = vld [vmem:[#allocation3 + $0x28] sm:$0xff]
          %v4083 = vld [vmem:[#allocation3 + $0x30] sm:$0xff]
          %v4084 = vld [vmem:[#allocation3 + $0x38] sm:$0xff]
          %v4085 = vld [vmem:[#allocation3 + $0x40] sm:$0xff]
          %v4086 = vld [vmem:[#allocation3 + $0x48] sm:$0xff]
          %v4087 = vld [vmem:[#allocation3 + $0x50] sm:$0xff]
          %v4088 = vld [vmem:[#allocation3 + $0x58] sm:$0xff]
          %v4089 = vld [vmem:[#allocation3 + $0x60] sm:$0xff]
          %v4090 = vld [vmem:[#allocation3 + $0x68] sm:$0xff]
          %v4091 = vld [vmem:[#allocation3 + $0x70] sm:$0xff]
          %v4092 = vld [vmem:[#allocation3 + $0x78] sm:$0xff]
          %v4093 = vrcp.pop %v4077
          %v4094 = vrcp.pop %v4078
          %v4095 = vrcp.pop %v4079
          %v4096 = vrcp.pop %v4080
          %v4097 = vrcp.pop %v4081
          %v4098 = vrcp.pop %v4082
          %v4099 = vrcp.pop %v4083
          %v4100 = vrcp.pop %v4084
          %v4101 = vrcp.pop %v4085
          %v4102 = vrcp.pop %v4086
          %v4103 = vrcp.pop %v4087
          %v4104 = vrcp.pop %v4088
          %v4105 = vrcp.pop %v4089
          %v4106 = vrcp.pop %v4090
          %v4107 = vrcp.pop %v4091
          %v4108 = vrcp.pop %v4092
          %v4109 = vld [vmem:[#allocation4] sm:$0xff]
          %v4110 = vld [vmem:[#allocation4 + $0x8] sm:$0xff]
          %v4111 = vld [vmem:[#allocation4 + $0x10] sm:$0xff]
          %v4112 = vld [vmem:[#allocation4 + $0x18] sm:$0xff]
          %v4113 = vld [vmem:[#allocation4 + $0x20] sm:$0xff]
          %v4114 = vld [vmem:[#allocation4 + $0x28] sm:$0xff]
          %v4115 = vld [vmem:[#allocation4 + $0x30] sm:$0xff]
          %v4116 = vld [vmem:[#allocation4 + $0x38] sm:$0xff]
          %v4117 = vld [vmem:[#allocation4 + $0x40] sm:$0xff]
          %v4118 = vld [vmem:[#allocation4 + $0x48] sm:$0xff]
          %v4119 = vld [vmem:[#allocation4 + $0x50] sm:$0xff]
          %v4120 = vld [vmem:[#allocation4 + $0x58] sm:$0xff]
          %v4121 = vld [vmem:[#allocation4 + $0x60] sm:$0xff]
          %v4122 = vld [vmem:[#allocation4 + $0x68] sm:$0xff]
          %v4123 = vld [vmem:[#allocation4 + $0x70] sm:$0xff]
          %v4124 = vld [vmem:[#allocation4 + $0x78] sm:$0xff]
          %4126 = vset.pattern.permute.xlu0 0
          %4127 = vperm.xlu0 %4126, %v4093
          %v4128 = vpop.permute.xlu0 %4127
          %4131 = vset.pattern.permute.xlu0 0
          %4132 = vperm.xlu0 %4131, %v4094
          %v4133 = vpop.permute.xlu0 %4132
          %4136 = vset.pattern.permute.xlu0 0
          %4137 = vperm.xlu0 %4136, %v4095
          %v4138 = vpop.permute.xlu0 %4137
          %4141 = vset.pattern.permute.xlu0 0
          %4142 = vperm.xlu0 %4141, %v4096
          %v4143 = vpop.permute.xlu0 %4142
          %4146 = vset.pattern.permute.xlu0 0
          %4147 = vperm.xlu0 %4146, %v4097
          %v4148 = vpop.permute.xlu0 %4147
          %4151 = vset.pattern.permute.xlu0 0
          %4152 = vperm.xlu0 %4151, %v4098
          %v4153 = vpop.permute.xlu0 %4152
          %4156 = vset.pattern.permute.xlu0 0
          %4157 = vperm.xlu0 %4156, %v4099
          %v4158 = vpop.permute.xlu0 %4157
          %4161 = vset.pattern.permute.xlu0 0
          %4162 = vperm.xlu0 %4161, %v4100
          %v4163 = vpop.permute.xlu0 %4162
          %4166 = vset.pattern.permute.xlu0 0
          %4167 = vperm.xlu0 %4166, %v4101
          %v4168 = vpop.permute.xlu0 %4167
          %4171 = vset.pattern.permute.xlu0 0
          %4172 = vperm.xlu0 %4171, %v4102
          %v4173 = vpop.permute.xlu0 %4172
          %4176 = vset.pattern.permute.xlu0 0
          %4177 = vperm.xlu0 %4176, %v4103
          %v4178 = vpop.permute.xlu0 %4177
          %4181 = vset.pattern.permute.xlu0 0
          %4182 = vperm.xlu0 %4181, %v4104
          %v4183 = vpop.permute.xlu0 %4182
          %4186 = vset.pattern.permute.xlu0 0
          %4187 = vperm.xlu0 %4186, %v4105
          %v4188 = vpop.permute.xlu0 %4187
          %4191 = vset.pattern.permute.xlu0 0
          %4192 = vperm.xlu0 %4191, %v4106
          %v4193 = vpop.permute.xlu0 %4192
          %4196 = vset.pattern.permute.xlu0 0
          %4197 = vperm.xlu0 %4196, %v4107
          %v4198 = vpop.permute.xlu0 %4197
          %4201 = vset.pattern.permute.xlu0 0
          %4202 = vperm.xlu0 %4201, %v4108
          %v4203 = vpop.permute.xlu0 %4202
          %v4205 = vmul.f32 %v4109, %v4128
          %v4206 = vmul.f32 %v4110, %v4133
          %v4207 = vmul.f32 %v4111, %v4138
          %v4208 = vmul.f32 %v4112, %v4143
          %v4209 = vmul.f32 %v4113, %v4148
          %v4210 = vmul.f32 %v4114, %v4153
          %v4211 = vmul.f32 %v4115, %v4158
          %v4212 = vmul.f32 %v4116, %v4163
          %v4213 = vmul.f32 %v4117, %v4168
          %v4214 = vmul.f32 %v4118, %v4173
          %v4215 = vmul.f32 %v4119, %v4178
          %v4216 = vmul.f32 %v4120, %v4183
          %v4217 = vmul.f32 %v4121, %v4188
          %v4218 = vmul.f32 %v4122, %v4193
          %v4219 = vmul.f32 %v4123, %v4198
          %v4220 = vmul.f32 %v4124, %v4203
          %4221 = vst.msk [vmem:[%s322] sm:$0xff] %vm1320, %v4205
          %4222 = vst.msk [vmem:[%s322 + $0x8] sm:$0xff] %vm1320, %v4206
          %4223 = vst.msk [vmem:[%s322 + $0x10] sm:$0xff] %vm1320, %v4207
          %4224 = vst.msk [vmem:[%s322 + $0x18] sm:$0xff] %vm1320, %v4208
          %4225 = vst.msk [vmem:[%s322 + $0x20] sm:$0xff] %vm1320, %v4209
          %4226 = vst.msk [vmem:[%s322 + $0x28] sm:$0xff] %vm1320, %v4210
          %4227 = vst.msk [vmem:[%s322 + $0x30] sm:$0xff] %vm1320, %v4211
          %4228 = vst.msk [vmem:[%s322 + $0x38] sm:$0xff] %vm1320, %v4212
          %4229 = vst.msk [vmem:[%s322 + $0x40] sm:$0xff] %vm1320, %v4213
          %4230 = vst.msk [vmem:[%s322 + $0x48] sm:$0xff] %vm1320, %v4214
          %4231 = vst.msk [vmem:[%s322 + $0x50] sm:$0xff] %vm1320, %v4215
          %4232 = vst.msk [vmem:[%s322 + $0x58] sm:$0xff] %vm1320, %v4216
          %4233 = vst.msk [vmem:[%s322 + $0x60] sm:$0xff] %vm1320, %v4217
          %4234 = vst.msk [vmem:[%s322 + $0x68] sm:$0xff] %vm1320, %v4218
          %4235 = vst.msk [vmem:[%s322 + $0x70] sm:$0xff] %vm1320, %v4219
          %4236 = vst.msk [vmem:[%s322 + $0x78] sm:$0xff] %vm1320, %v4220
          %v4237 = vld [vmem:[#allocation3] sm:$0xff]
          %v4238 = vld [vmem:[#allocation3 + $0x8] sm:$0xff]
          %v4239 = vld [vmem:[#allocation3 + $0x10] sm:$0xff]
          %v4240 = vld [vmem:[#allocation3 + $0x18] sm:$0xff]
          %v4241 = vld [vmem:[#allocation3 + $0x20] sm:$0xff]
          %v4242 = vld [vmem:[#allocation3 + $0x28] sm:$0xff]
          %v4243 = vld [vmem:[#allocation3 + $0x30] sm:$0xff]
          %v4244 = vld [vmem:[#allocation3 + $0x38] sm:$0xff]
          %v4245 = vld [vmem:[#allocation3 + $0x40] sm:$0xff]
          %v4246 = vld [vmem:[#allocation3 + $0x48] sm:$0xff]
          %v4247 = vld [vmem:[#allocation3 + $0x50] sm:$0xff]
          %v4248 = vld [vmem:[#allocation3 + $0x58] sm:$0xff]
          %v4249 = vld [vmem:[#allocation3 + $0x60] sm:$0xff]
          %v4250 = vld [vmem:[#allocation3 + $0x68] sm:$0xff]
          %v4251 = vld [vmem:[#allocation3 + $0x70] sm:$0xff]
          %v4252 = vld [vmem:[#allocation3 + $0x78] sm:$0xff]
          %v4253 = vrcp.pop %v4237
          %v4254 = vrcp.pop %v4238
          %v4255 = vrcp.pop %v4239
          %v4256 = vrcp.pop %v4240
          %v4257 = vrcp.pop %v4241
          %v4258 = vrcp.pop %v4242
          %v4259 = vrcp.pop %v4243
          %v4260 = vrcp.pop %v4244
          %v4261 = vrcp.pop %v4245
          %v4262 = vrcp.pop %v4246
          %v4263 = vrcp.pop %v4247
          %v4264 = vrcp.pop %v4248
          %v4265 = vrcp.pop %v4249
          %v4266 = vrcp.pop %v4250
          %v4267 = vrcp.pop %v4251
          %v4268 = vrcp.pop %v4252
          %v4269 = vld [vmem:[#allocation4] sm:$0xff]
          %v4270 = vld [vmem:[#allocation4 + $0x8] sm:$0xff]
          %v4271 = vld [vmem:[#allocation4 + $0x10] sm:$0xff]
          %v4272 = vld [vmem:[#allocation4 + $0x18] sm:$0xff]
          %v4273 = vld [vmem:[#allocation4 + $0x20] sm:$0xff]
          %v4274 = vld [vmem:[#allocation4 + $0x28] sm:$0xff]
          %v4275 = vld [vmem:[#allocation4 + $0x30] sm:$0xff]
          %v4276 = vld [vmem:[#allocation4 + $0x38] sm:$0xff]
          %v4277 = vld [vmem:[#allocation4 + $0x40] sm:$0xff]
          %v4278 = vld [vmem:[#allocation4 + $0x48] sm:$0xff]
          %v4279 = vld [vmem:[#allocation4 + $0x50] sm:$0xff]
          %v4280 = vld [vmem:[#allocation4 + $0x58] sm:$0xff]
          %v4281 = vld [vmem:[#allocation4 + $0x60] sm:$0xff]
          %v4282 = vld [vmem:[#allocation4 + $0x68] sm:$0xff]
          %v4283 = vld [vmem:[#allocation4 + $0x70] sm:$0xff]
          %v4284 = vld [vmem:[#allocation4 + $0x78] sm:$0xff]
          %4286 = vset.pattern.permute.xlu0 1
          %4287 = vperm.xlu0 %4286, %v4253
          %v4288 = vpop.permute.xlu0 %4287
          %4291 = vset.pattern.permute.xlu0 1
          %4292 = vperm.xlu0 %4291, %v4254
          %v4293 = vpop.permute.xlu0 %4292
          %4296 = vset.pattern.permute.xlu0 1
          %4297 = vperm.xlu0 %4296, %v4255
          %v4298 = vpop.permute.xlu0 %4297
          %4301 = vset.pattern.permute.xlu0 1
          %4302 = vperm.xlu0 %4301, %v4256
          %v4303 = vpop.permute.xlu0 %4302
          %4306 = vset.pattern.permute.xlu0 1
          %4307 = vperm.xlu0 %4306, %v4257
          %v4308 = vpop.permute.xlu0 %4307
          %4311 = vset.pattern.permute.xlu0 1
          %4312 = vperm.xlu0 %4311, %v4258
          %v4313 = vpop.permute.xlu0 %4312
          %4316 = vset.pattern.permute.xlu0 1
          %4317 = vperm.xlu0 %4316, %v4259
          %v4318 = vpop.permute.xlu0 %4317
          %4321 = vset.pattern.permute.xlu0 1
          %4322 = vperm.xlu0 %4321, %v4260
          %v4323 = vpop.permute.xlu0 %4322
          %4326 = vset.pattern.permute.xlu0 1
          %4327 = vperm.xlu0 %4326, %v4261
          %v4328 = vpop.permute.xlu0 %4327
          %4331 = vset.pattern.permute.xlu0 1
          %4332 = vperm.xlu0 %4331, %v4262
          %v4333 = vpop.permute.xlu0 %4332
          %4336 = vset.pattern.permute.xlu0 1
          %4337 = vperm.xlu0 %4336, %v4263
          %v4338 = vpop.permute.xlu0 %4337
          %4341 = vset.pattern.permute.xlu0 1
          %4342 = vperm.xlu0 %4341, %v4264
          %v4343 = vpop.permute.xlu0 %4342
          %4346 = vset.pattern.permute.xlu0 1
          %4347 = vperm.xlu0 %4346, %v4265
          %v4348 = vpop.permute.xlu0 %4347
          %4351 = vset.pattern.permute.xlu0 1
          %4352 = vperm.xlu0 %4351, %v4266
          %v4353 = vpop.permute.xlu0 %4352
          %4356 = vset.pattern.permute.xlu0 1
          %4357 = vperm.xlu0 %4356, %v4267
          %v4358 = vpop.permute.xlu0 %4357
          %4361 = vset.pattern.permute.xlu0 1
          %4362 = vperm.xlu0 %4361, %v4268
          %v4363 = vpop.permute.xlu0 %4362
          %v4365 = vmul.f32 %v4269, %v4288
          %v4366 = vmul.f32 %v4270, %v4293
          %v4367 = vmul.f32 %v4271, %v4298
          %v4368 = vmul.f32 %v4272, %v4303
          %v4369 = vmul.f32 %v4273, %v4308
          %v4370 = vmul.f32 %v4274, %v4313
          %v4371 = vmul.f32 %v4275, %v4318
          %v4372 = vmul.f32 %v4276, %v4323
          %v4373 = vmul.f32 %v4277, %v4328
          %v4374 = vmul.f32 %v4278, %v4333
          %v4375 = vmul.f32 %v4279, %v4338
          %v4376 = vmul.f32 %v4280, %v4343
          %v4377 = vmul.f32 %v4281, %v4348
          %v4378 = vmul.f32 %v4282, %v4353
          %v4379 = vmul.f32 %v4283, %v4358
          %v4380 = vmul.f32 %v4284, %v4363
          %4381 = vst.msk [vmem:[%s322] sm:$0xff] %vm2232, %v4365
          %4382 = vst.msk [vmem:[%s322 + $0x8] sm:$0xff] %vm2232, %v4366
          %4383 = vst.msk [vmem:[%s322 + $0x10] sm:$0xff] %vm2232, %v4367
          %4384 = vst.msk [vmem:[%s322 + $0x18] sm:$0xff] %vm2232, %v4368
          %4385 = vst.msk [vmem:[%s322 + $0x20] sm:$0xff] %vm2232, %v4369
          %4386 = vst.msk [vmem:[%s322 + $0x28] sm:$0xff] %vm2232, %v4370
          %4387 = vst.msk [vmem:[%s322 + $0x30] sm:$0xff] %vm2232, %v4371
          %4388 = vst.msk [vmem:[%s322 + $0x38] sm:$0xff] %vm2232, %v4372
          %4389 = vst.msk [vmem:[%s322 + $0x40] sm:$0xff] %vm2232, %v4373
          %4390 = vst.msk [vmem:[%s322 + $0x48] sm:$0xff] %vm2232, %v4374
          %4391 = vst.msk [vmem:[%s322 + $0x50] sm:$0xff] %vm2232, %v4375
          %4392 = vst.msk [vmem:[%s322 + $0x58] sm:$0xff] %vm2232, %v4376
          %4393 = vst.msk [vmem:[%s322 + $0x60] sm:$0xff] %vm2232, %v4377
          %4394 = vst.msk [vmem:[%s322 + $0x68] sm:$0xff] %vm2232, %v4378
          %4395 = vst.msk [vmem:[%s322 + $0x70] sm:$0xff] %vm2232, %v4379
          %4396 = vst.msk [vmem:[%s322 + $0x78] sm:$0xff] %vm2232, %v4380
          %v4397 = vld [vmem:[#allocation3] sm:$0xff]
          %v4398 = vld [vmem:[#allocation3 + $0x8] sm:$0xff]
          %v4399 = vld [vmem:[#allocation3 + $0x10] sm:$0xff]
          %v4400 = vld [vmem:[#allocation3 + $0x18] sm:$0xff]
          %v4401 = vld [vmem:[#allocation3 + $0x20] sm:$0xff]
          %v4402 = vld [vmem:[#allocation3 + $0x28] sm:$0xff]
          %v4403 = vld [vmem:[#allocation3 + $0x30] sm:$0xff]
          %v4404 = vld [vmem:[#allocation3 + $0x38] sm:$0xff]
          %v4405 = vld [vmem:[#allocation3 + $0x40] sm:$0xff]
          %v4406 = vld [vmem:[#allocation3 + $0x48] sm:$0xff]
          %v4407 = vld [vmem:[#allocation3 + $0x50] sm:$0xff]
          %v4408 = vld [vmem:[#allocation3 + $0x58] sm:$0xff]
          %v4409 = vld [vmem:[#allocation3 + $0x60] sm:$0xff]
          %v4410 = vld [vmem:[#allocation3 + $0x68] sm:$0xff]
          %v4411 = vld [vmem:[#allocation3 + $0x70] sm:$0xff]
          %v4412 = vld [vmem:[#allocation3 + $0x78] sm:$0xff]
          %v4413 = vrcp.pop %v4397
          %v4414 = vrcp.pop %v4398
          %v4415 = vrcp.pop %v4399
          %v4416 = vrcp.pop %v4400
          %v4417 = vrcp.pop %v4401
          %v4418 = vrcp.pop %v4402
          %v4419 = vrcp.pop %v4403
          %v4420 = vrcp.pop %v4404
          %v4421 = vrcp.pop %v4405
          %v4422 = vrcp.pop %v4406
          %v4423 = vrcp.pop %v4407
          %v4424 = vrcp.pop %v4408
          %v4425 = vrcp.pop %v4409
          %v4426 = vrcp.pop %v4410
          %v4427 = vrcp.pop %v4411
          %v4428 = vrcp.pop %v4412
          %v4429 = vld [vmem:[#allocation4] sm:$0xff]
          %v4430 = vld [vmem:[#allocation4 + $0x8] sm:$0xff]
          %v4431 = vld [vmem:[#allocation4 + $0x10] sm:$0xff]
          %v4432 = vld [vmem:[#allocation4 + $0x18] sm:$0xff]
          %v4433 = vld [vmem:[#allocation4 + $0x20] sm:$0xff]
          %v4434 = vld [vmem:[#allocation4 + $0x28] sm:$0xff]
          %v4435 = vld [vmem:[#allocation4 + $0x30] sm:$0xff]
          %v4436 = vld [vmem:[#allocation4 + $0x38] sm:$0xff]
          %v4437 = vld [vmem:[#allocation4 + $0x40] sm:$0xff]
          %v4438 = vld [vmem:[#allocation4 + $0x48] sm:$0xff]
          %v4439 = vld [vmem:[#allocation4 + $0x50] sm:$0xff]
          %v4440 = vld [vmem:[#allocation4 + $0x58] sm:$0xff]
          %v4441 = vld [vmem:[#allocation4 + $0x60] sm:$0xff]
          %v4442 = vld [vmem:[#allocation4 + $0x68] sm:$0xff]
          %v4443 = vld [vmem:[#allocation4 + $0x70] sm:$0xff]
          %v4444 = vld [vmem:[#allocation4 + $0x78] sm:$0xff]
          %4446 = vset.pattern.permute.xlu0 2
          %4447 = vperm.xlu0 %4446, %v4413
          %v4448 = vpop.permute.xlu0 %4447
          %4451 = vset.pattern.permute.xlu0 2
          %4452 = vperm.xlu0 %4451, %v4414
          %v4453 = vpop.permute.xlu0 %4452
          %4456 = vset.pattern.permute.xlu0 2
          %4457 = vperm.xlu0 %4456, %v4415
          %v4458 = vpop.permute.xlu0 %4457
          %4461 = vset.pattern.permute.xlu0 2
          %4462 = vperm.xlu0 %4461, %v4416
          %v4463 = vpop.permute.xlu0 %4462
          %4466 = vset.pattern.permute.xlu0 2
          %4467 = vperm.xlu0 %4466, %v4417
          %v4468 = vpop.permute.xlu0 %4467
          %4471 = vset.pattern.permute.xlu0 2
          %4472 = vperm.xlu0 %4471, %v4418
          %v4473 = vpop.permute.xlu0 %4472
          %4476 = vset.pattern.permute.xlu0 2
          %4477 = vperm.xlu0 %4476, %v4419
          %v4478 = vpop.permute.xlu0 %4477
          %4481 = vset.pattern.permute.xlu0 2
          %4482 = vperm.xlu0 %4481, %v4420
          %v4483 = vpop.permute.xlu0 %4482
          %4486 = vset.pattern.permute.xlu0 2
          %4487 = vperm.xlu0 %4486, %v4421
          %v4488 = vpop.permute.xlu0 %4487
          %4491 = vset.pattern.permute.xlu0 2
          %4492 = vperm.xlu0 %4491, %v4422
          %v4493 = vpop.permute.xlu0 %4492
          %4496 = vset.pattern.permute.xlu0 2
          %4497 = vperm.xlu0 %4496, %v4423
          %v4498 = vpop.permute.xlu0 %4497
          %4501 = vset.pattern.permute.xlu0 2
          %4502 = vperm.xlu0 %4501, %v4424
          %v4503 = vpop.permute.xlu0 %4502
          %4506 = vset.pattern.permute.xlu0 2
          %4507 = vperm.xlu0 %4506, %v4425
          %v4508 = vpop.permute.xlu0 %4507
          %4511 = vset.pattern.permute.xlu0 2
          %4512 = vperm.xlu0 %4511, %v4426
          %v4513 = vpop.permute.xlu0 %4512
          %4516 = vset.pattern.permute.xlu0 2
          %4517 = vperm.xlu0 %4516, %v4427
          %v4518 = vpop.permute.xlu0 %4517
          %4521 = vset.pattern.permute.xlu0 2
          %4522 = vperm.xlu0 %4521, %v4428
          %v4523 = vpop.permute.xlu0 %4522
          %v4525 = vmul.f32 %v4429, %v4448
          %v4526 = vmul.f32 %v4430, %v4453
          %v4527 = vmul.f32 %v4431, %v4458
          %v4528 = vmul.f32 %v4432, %v4463
          %v4529 = vmul.f32 %v4433, %v4468
          %v4530 = vmul.f32 %v4434, %v4473
          %v4531 = vmul.f32 %v4435, %v4478
          %v4532 = vmul.f32 %v4436, %v4483
          %v4533 = vmul.f32 %v4437, %v4488
          %v4534 = vmul.f32 %v4438, %v4493
          %v4535 = vmul.f32 %v4439, %v4498
          %v4536 = vmul.f32 %v4440, %v4503
          %v4537 = vmul.f32 %v4441, %v4508
          %v4538 = vmul.f32 %v4442, %v4513
          %v4539 = vmul.f32 %v4443, %v4518
          %v4540 = vmul.f32 %v4444, %v4523
          %4541 = vst.msk [vmem:[%s322] sm:$0xff] %vm3144, %v4525
          %4542 = vst.msk [vmem:[%s322 + $0x8] sm:$0xff] %vm3144, %v4526
          %4543 = vst.msk [vmem:[%s322 + $0x10] sm:$0xff] %vm3144, %v4527
          %4544 = vst.msk [vmem:[%s322 + $0x18] sm:$0xff] %vm3144, %v4528
          %4545 = vst.msk [vmem:[%s322 + $0x20] sm:$0xff] %vm3144, %v4529
          %4546 = vst.msk [vmem:[%s322 + $0x28] sm:$0xff] %vm3144, %v4530
          %4547 = vst.msk [vmem:[%s322 + $0x30] sm:$0xff] %vm3144, %v4531
          %4548 = vst.msk [vmem:[%s322 + $0x38] sm:$0xff] %vm3144, %v4532
          %4549 = vst.msk [vmem:[%s322 + $0x40] sm:$0xff] %vm3144, %v4533
          %4550 = vst.msk [vmem:[%s322 + $0x48] sm:$0xff] %vm3144, %v4534
          %4551 = vst.msk [vmem:[%s322 + $0x50] sm:$0xff] %vm3144, %v4535
          %4552 = vst.msk [vmem:[%s322 + $0x58] sm:$0xff] %vm3144, %v4536
          %4553 = vst.msk [vmem:[%s322 + $0x60] sm:$0xff] %vm3144, %v4537
          %4554 = vst.msk [vmem:[%s322 + $0x68] sm:$0xff] %vm3144, %v4538
          %4555 = vst.msk [vmem:[%s322 + $0x70] sm:$0xff] %vm3144, %v4539
          %4556 = vst.msk [vmem:[%s322 + $0x78] sm:$0xff] %vm3144, %v4540
          %v4557 = vld [vmem:[#allocation3] sm:$0xff]
          %v4558 = vld [vmem:[#allocation3 + $0x8] sm:$0xff]
          %v4559 = vld [vmem:[#allocation3 + $0x10] sm:$0xff]
          %v4560 = vld [vmem:[#allocation3 + $0x18] sm:$0xff]
          %v4561 = vld [vmem:[#allocation3 + $0x20] sm:$0xff]
          %v4562 = vld [vmem:[#allocation3 + $0x28] sm:$0xff]
          %v4563 = vld [vmem:[#allocation3 + $0x30] sm:$0xff]
          %v4564 = vld [vmem:[#allocation3 + $0x38] sm:$0xff]
          %v4565 = vld [vmem:[#allocation3 + $0x40] sm:$0xff]
          %v4566 = vld [vmem:[#allocation3 + $0x48] sm:$0xff]
          %v4567 = vld [vmem:[#allocation3 + $0x50] sm:$0xff]
          %v4568 = vld [vmem:[#allocation3 + $0x58] sm:$0xff]
          %v4569 = vld [vmem:[#allocation3 + $0x60] sm:$0xff]
          %v4570 = vld [vmem:[#allocation3 + $0x68] sm:$0xff]
          %v4571 = vld [vmem:[#allocation3 + $0x70] sm:$0xff]
          %v4572 = vld [vmem:[#allocation3 + $0x78] sm:$0xff]
          %v4573 = vrcp.pop %v4557
          %v4574 = vrcp.pop %v4558
          %v4575 = vrcp.pop %v4559
          %v4576 = vrcp.pop %v4560
          %v4577 = vrcp.pop %v4561
          %v4578 = vrcp.pop %v4562
          %v4579 = vrcp.pop %v4563
          %v4580 = vrcp.pop %v4564
          %v4581 = vrcp.pop %v4565
          %v4582 = vrcp.pop %v4566
          %v4583 = vrcp.pop %v4567
          %v4584 = vrcp.pop %v4568
          %v4585 = vrcp.pop %v4569
          %v4586 = vrcp.pop %v4570
          %v4587 = vrcp.pop %v4571
          %v4588 = vrcp.pop %v4572
          %v4589 = vld [vmem:[#allocation4] sm:$0xff]
          %v4590 = vld [vmem:[#allocation4 + $0x8] sm:$0xff]
          %v4591 = vld [vmem:[#allocation4 + $0x10] sm:$0xff]
          %v4592 = vld [vmem:[#allocation4 + $0x18] sm:$0xff]
          %v4593 = vld [vmem:[#allocation4 + $0x20] sm:$0xff]
          %v4594 = vld [vmem:[#allocation4 + $0x28] sm:$0xff]
          %v4595 = vld [vmem:[#allocation4 + $0x30] sm:$0xff]
          %v4596 = vld [vmem:[#allocation4 + $0x38] sm:$0xff]
          %v4597 = vld [vmem:[#allocation4 + $0x40] sm:$0xff]
          %v4598 = vld [vmem:[#allocation4 + $0x48] sm:$0xff]
          %v4599 = vld [vmem:[#allocation4 + $0x50] sm:$0xff]
          %v4600 = vld [vmem:[#allocation4 + $0x58] sm:$0xff]
          %v4601 = vld [vmem:[#allocation4 + $0x60] sm:$0xff]
          %v4602 = vld [vmem:[#allocation4 + $0x68] sm:$0xff]
          %v4603 = vld [vmem:[#allocation4 + $0x70] sm:$0xff]
          %v4604 = vld [vmem:[#allocation4 + $0x78] sm:$0xff]
          %4606 = vset.pattern.permute.xlu0 3
          %4607 = vperm.xlu0 %4606, %v4573
          %v4608 = vpop.permute.xlu0 %4607
          %4611 = vset.pattern.permute.xlu0 3
          %4612 = vperm.xlu0 %4611, %v4574
          %v4613 = vpop.permute.xlu0 %4612
          %4616 = vset.pattern.permute.xlu0 3
          %4617 = vperm.xlu0 %4616, %v4575
          %v4618 = vpop.permute.xlu0 %4617
          %4621 = vset.pattern.permute.xlu0 3
          %4622 = vperm.xlu0 %4621, %v4576
          %v4623 = vpop.permute.xlu0 %4622
          %4626 = vset.pattern.permute.xlu0 3
          %4627 = vperm.xlu0 %4626, %v4577
          %v4628 = vpop.permute.xlu0 %4627
          %4631 = vset.pattern.permute.xlu0 3
          %4632 = vperm.xlu0 %4631, %v4578
          %v4633 = vpop.permute.xlu0 %4632
          %4636 = vset.pattern.permute.xlu0 3
          %4637 = vperm.xlu0 %4636, %v4579
          %v4638 = vpop.permute.xlu0 %4637
          %4641 = vset.pattern.permute.xlu0 3
          %4642 = vperm.xlu0 %4641, %v4580
          %v4643 = vpop.permute.xlu0 %4642
          %4646 = vset.pattern.permute.xlu0 3
          %4647 = vperm.xlu0 %4646, %v4581
          %v4648 = vpop.permute.xlu0 %4647
          %4651 = vset.pattern.permute.xlu0 3
          %4652 = vperm.xlu0 %4651, %v4582
          %v4653 = vpop.permute.xlu0 %4652
          %4656 = vset.pattern.permute.xlu0 3
          %4657 = vperm.xlu0 %4656, %v4583
          %v4658 = vpop.permute.xlu0 %4657
          %4661 = vset.pattern.permute.xlu0 3
          %4662 = vperm.xlu0 %4661, %v4584
          %v4663 = vpop.permute.xlu0 %4662
          %4666 = vset.pattern.permute.xlu0 3
          %4667 = vperm.xlu0 %4666, %v4585
          %v4668 = vpop.permute.xlu0 %4667
          %4671 = vset.pattern.permute.xlu0 3
          %4672 = vperm.xlu0 %4671, %v4586
          %v4673 = vpop.permute.xlu0 %4672
          %4676 = vset.pattern.permute.xlu0 3
          %4677 = vperm.xlu0 %4676, %v4587
          %v4678 = vpop.permute.xlu0 %4677
          %4681 = vset.pattern.permute.xlu0 3
          %4682 = vperm.xlu0 %4681, %v4588
          %v4683 = vpop.permute.xlu0 %4682
          %v4685 = vmul.f32 %v4589, %v4608
          %v4686 = vmul.f32 %v4590, %v4613
          %v4687 = vmul.f32 %v4591, %v4618
          %v4688 = vmul.f32 %v4592, %v4623
          %v4689 = vmul.f32 %v4593, %v4628
          %v4690 = vmul.f32 %v4594, %v4633
          %v4691 = vmul.f32 %v4595, %v4638
          %v4692 = vmul.f32 %v4596, %v4643
          %v4693 = vmul.f32 %v4597, %v4648
          %v4694 = vmul.f32 %v4598, %v4653
          %v4695 = vmul.f32 %v4599, %v4658
          %v4696 = vmul.f32 %v4600, %v4663
          %v4697 = vmul.f32 %v4601, %v4668
          %v4698 = vmul.f32 %v4602, %v4673
          %v4699 = vmul.f32 %v4603, %v4678
          %v4700 = vmul.f32 %v4604, %v4683
          %4701 = vst.msk [vmem:[%s322] sm:$0xff] %vm4056, %v4685
          %4702 = vst.msk [vmem:[%s322 + $0x8] sm:$0xff] %vm4056, %v4686
          %4703 = vst.msk [vmem:[%s322 + $0x10] sm:$0xff] %vm4056, %v4687
          %4704 = vst.msk [vmem:[%s322 + $0x18] sm:$0xff] %vm4056, %v4688
          %4705 = vst.msk [vmem:[%s322 + $0x20] sm:$0xff] %vm4056, %v4689
          %4706 = vst.msk [vmem:[%s322 + $0x28] sm:$0xff] %vm4056, %v4690
          %4707 = vst.msk [vmem:[%s322 + $0x30] sm:$0xff] %vm4056, %v4691
          %4708 = vst.msk [vmem:[%s322 + $0x38] sm:$0xff] %vm4056, %v4692
          %4709 = vst.msk [vmem:[%s322 + $0x40] sm:$0xff] %vm4056, %v4693
          %4710 = vst.msk [vmem:[%s322 + $0x48] sm:$0xff] %vm4056, %v4694
          %4711 = vst.msk [vmem:[%s322 + $0x50] sm:$0xff] %vm4056, %v4695
          %4712 = vst.msk [vmem:[%s322 + $0x58] sm:$0xff] %vm4056, %v4696
          %4713 = vst.msk [vmem:[%s322 + $0x60] sm:$0xff] %vm4056, %v4697
          %4714 = vst.msk [vmem:[%s322 + $0x68] sm:$0xff] %vm4056, %v4698
          %4715 = vst.msk [vmem:[%s322 + $0x70] sm:$0xff] %vm4056, %v4699
          %4716 = vst.msk [vmem:[%s322 + $0x78] sm:$0xff] %vm4056, %v4700
        $region82: #{tpu_custom_call.1} parent=69 // pred_fallthru
          _
        %s4717 = smul.u32 16, %s19
        %p4718 = scmp.lt.s32.totalorder %s4717, 31
        %s4719 = scalar_select %p4718, %s4717, 31
        %s4720 = smul.addr %s4719, 8
        %s4721 = scalar_lea.vmem %s4, %s4720
        // Predicated region
        $region83: #{tpu_custom_call.1} parent=69 // pred_check
          %p4722 = pneg %p151
        $region84: #{tpu_custom_call.1} parent=69 // pred_check_branch
          %4724 = sbr.rel (%p4722) target = $region86
        $region85: #{tpu_custom_call.1} parent=69 // pred_region
          %s4725 = smul.u32 16, %s19
        $region86: #{tpu_custom_call.1} parent=69 // pred_fallthru
          _
      $region70: #{tpu_custom_call.1} parent=5 // pred_fallthru
        _
      %p4726 = scmp.le.s32.totalorder 2, %s10
      // Predicated region
      $region87: #{tpu_custom_call.1} parent=5 // pred_check
        %p4727 = pneg %p4726
      $region88: #{tpu_custom_call.1} parent=5 // pred_check_branch
        %4729 = sbr.rel (%p4727) target = $region90
      $region89: #{tpu_custom_call.1} parent=5 // pred_region
        %s4730 = ssub.s32 %s10, 2
        // Predicated region
        $region91: #{tpu_custom_call.1} parent=89 // pred_check
          %p4731 = pneg %p157
        $region92: #{tpu_custom_call.1} parent=89 // pred_check_branch
          %4733 = sbr.rel (%p4731) target = $region94
        $region93: #{tpu_custom_call.1} parent=89 // pred_region
          %s4734 = smul.u32 16, %s21
          %p4735 = scmp.lt.s32.totalorder %s4734, 31
          %s4736 = scalar_select %p4735, %s4734, 31
          %s4737 = smul.addr %s4736, 8
          %s4738 = scalar_lea.vmem %s4, %s4737
        $region94: #{tpu_custom_call.1} parent=89 // pred_fallthru
          _
      $region90: #{tpu_custom_call.1} parent=5 // pred_fallthru
        _
    $region6: #{tpu_custom_call.1} parent=1 // loop_footer
      %s14 = sadd.s32 1, %s10
    $region7: #{tpu_custom_call.1} parent=1 // loop_footer_branch
      %9 = sbr.rel target = $region3
    $region8: #{tpu_custom_call.1} parent=1 // loop_exit
      _

</llo_original>
